<compile_context>
chip_gen: v5e
topology: v5e:2x2
jax: 0.10.0
libtpu: 0.0.40
codegen_flags: <defaults>
</compile_context>

<pallas_src>
import numpy as np
import jax
import jax.numpy as jnp
from jax import lax
from jax.experimental import pallas as pl
from jax.experimental.pallas import tpu as pltpu


# ----------------------------------------------------------------------------
# Channel split (mirrors MixConv2d.__init__, default method='equal_params')
# ----------------------------------------------------------------------------
def mixconv_channel_split(out_ch, k, method="equal_params"):
    groups = len(k)
    if method == "equal_ch":
        i = np.floor(np.linspace(0, groups - 1e-6, out_ch))
        return [int((i == g).sum()) for g in range(groups)]
    b = np.array([out_ch] + [0] * groups, dtype=np.float64)
    a = np.eye(groups + 1, groups, k=-1)
    a -= np.roll(a, 1, axis=1)
    a *= np.array(k, dtype=np.float64) ** 2
    a[0] = 1
    ch = np.linalg.lstsq(a, b, rcond=None)[0].round().astype(int)
    return [int(c) for c in ch]


# ----------------------------------------------------------------------------
# One-time parameter preparation (hoisted out of the forward path)
# ----------------------------------------------------------------------------
def prepare_mixconv_params(weights, biases, ks):
    """weights[g]: (ch_g, C_in, k_g, k_g);  biases[g]: (ch_g,).

    Returns:
      w_taps: (KMAX*KMAX, out_ch, C_in) f32 -- per-tap channel-mixing matrices
              with each group's weights zero-embedded in the centre taps.
      b_col:  (out_ch, 1) f32 bias column.
    """
    kmax = max(ks)
    out_ch = sum(int(w.shape[0]) for w in weights)
    c_in = int(weights[0].shape[1])
    w_comb = np.zeros((kmax, kmax, out_ch, c_in), np.float32)
    c0 = 0
    for w, k in zip(weights, ks):
        w = np.asarray(w, np.float32)
        chg = w.shape[0]
        off = (kmax - k) // 2                     # centre the smaller kernel
        w_comb[off:off + k, off:off + k, c0:c0 + chg, :] = np.transpose(
            w, (2, 3, 0, 1))                       # (k, k, ch_g, C_in)
        c0 += chg
    w_taps = jnp.asarray(w_comb.reshape(kmax * kmax, out_ch, c_in))
    b_col = jnp.concatenate(
        [jnp.asarray(b, jnp.float32) for b in biases]).reshape(out_ch, 1)
    return w_taps, b_col


# ----------------------------------------------------------------------------
# Fused MixConv2d kernel
# ----------------------------------------------------------------------------
def _mixconv_kernel_factory(H, W, P, KMAX):
    HW = H * W
    base = P * W + P                 # offset of flat index 0 inside padded row

    def kernel(x_ref, col_ref, w_ref, b_ref, o_ref):
        # x_ref:   (1, C_in, HW + 2*(P*W + P))  zero-padded, flattened input
        # col_ref: (1, HW) int32  column index of each flat spatial position
        # w_ref:   (KMAX*KMAX, out_ch, C_in)
        # b_ref:   (out_ch, 1)
        # o_ref:   (1, out_ch, HW)
        col = col_ref[...]                                   # (1, HW)

        # Hoisted horizontal-edge masks (one per distinct dx shift).
        masks = {}
        for d in range(-P, P + 1):
            if d > 0:
                masks[d] = col < (W - d)
            elif d < 0:
                masks[d] = col >= (-d)

        acc = None
        for dy in range(KMAX):
            dys = dy - P
            for dx in range(KMAX):
                dxs = dx - P
                s = base + dys * W + dxs                     # static offset
                xs = x_ref[0, :, s:s + HW]                   # (C_in, HW)
                if dxs != 0:                                 # kill row wrap
                    xs = jnp.where(masks[dxs], xs, 0.0)
                w_t = w_ref[dy * KMAX + dx]                  # (out_ch, C_in)
                term = jnp.dot(w_t, xs,
                               preferred_element_type=jnp.float32)
                acc = term if acc is None else acc + term

        o_ref[0] = (acc + b_ref[...]).astype(o_ref.dtype)

    return kernel


def mixconv2d_forward(x, w_taps, b_col, ks):
    """x: (N, C_in, H, W) f32.  Returns (N, out_ch, H, W) f32."""
    N, C_in, H, W = x.shape
    KMAX = max(ks)
    P = KMAX // 2
    HW = H * W
    PAD = P * W + P
    out_ch = int(w_taps.shape[1])

    # Flatten spatial to the lane axis and zero-pad once (XLA side, cheap).
    x_flat = jnp.pad(x.reshape(N, C_in, HW), ((0, 0), (0, 0), (PAD, PAD)))
    col_idx = (jnp.arange(HW, dtype=jnp.int32) % W).reshape(1, HW)

    out_flat = pl.pallas_call(
        _mixconv_kernel_factory(H, W, P, KMAX),
        grid=(N,),
        in_specs=[
            pl.BlockSpec((1, C_in, HW + 2 * PAD), lambda n: (n, 0, 0)),
            pl.BlockSpec(memory_space=pltpu.MemorySpace.VMEM),   # col_idx
            pl.BlockSpec(memory_space=pltpu.MemorySpace.VMEM),   # w_taps
            pl.BlockSpec(memory_space=pltpu.MemorySpace.VMEM),   # bias
        ],
        out_specs=pl.BlockSpec((1, out_ch, HW), lambda n: (n, 0, 0)),
        out_shape=jax.ShapeDtypeStruct((N, out_ch, HW), jnp.float32),
        compiler_params=pltpu.CompilerParams(
            dimension_semantics=("parallel",)),
    )(x_flat, col_idx, w_taps, b_col)

    return out_flat.reshape(N, out_ch, H, W)


# ----------------------------------------------------------------------------
# Pure-JAX reference (mirrors the PyTorch forward) for correctness checking
# ----------------------------------------------------------------------------
def reference_forward(x, weights, biases, ks):
    outs = []
    for w, b, k in zip(weights, biases, ks):
        p = k // 2
        y = lax.conv_general_dilated(
            x, w, window_strides=(1, 1), padding=((p, p), (p, p)),
            dimension_numbers=("NCHW", "OIHW", "NCHW"),
            precision=lax.Precision.HIGHEST)
        outs.append(y + b[None, :, None, None])
    return jnp.concatenate(outs, axis=1)


if __name__ == "__main__":
    # Small shapes consistent with MixConv2d(in_ch=4, out_ch=8, k=(3,5,7))
    N, C_in, H, W = 2, 4, 16, 16
    out_ch = 8
    ks = (3, 5, 7)
    chs = mixconv_channel_split(out_ch, ks, method="equal_params")  # [5, 2, 1]
    assert sum(chs) == out_ch

    key = jax.random.PRNGKey(0)
    keys = jax.random.split(key, 1 + 2 * len(ks))
    x = jax.random.normal(keys[0], (N, C_in, H, W), jnp.float32)
    weights, biases = [], []
    for g, k in enumerate(ks):
        weights.append(0.1 * jax.random.normal(
            keys[1 + 2 * g], (chs[g], C_in, k, k), jnp.float32))
        biases.append(0.1 * jax.random.normal(
            keys[2 + 2 * g], (chs[g],), jnp.float32))

    # One-time prep (would live at module init in a real model).
    w_taps, b_col = prepare_mixconv_params(weights, biases, ks)

    out = mixconv2d_forward(x, w_taps, b_col, ks)
    out = jax.block_until_ready(out)

    ref = reference_forward(x, weights, biases, ks)
    err = float(jnp.max(jnp.abs(out - ref)))
    assert out.shape == (N, out_ch, H, W), out.shape
    # Tolerance covers possible single-pass bf16 MXU rounding at default precision.
    assert err < 2e-2, f"max abs err {err}"
    print("KERNEL_OK")
</pallas_src>

<mosaic_0001>
module attributes {stable_mosaic.version = 11 : i64} {
  func.func @kernel(%arg0: i32, %arg1: memref<1x4x358xf32, #tpu.memory_space<vmem>>, %arg2: memref<1x256xi32, #tpu.memory_space<vmem>>, %arg3: memref<49x8x4xf32, #tpu.memory_space<vmem>>, %arg4: memref<8x1xf32, #tpu.memory_space<vmem>>, %arg5: memref<1x8x256xf32, #tpu.memory_space<vmem>>) attributes {dimension_semantics = [#tpu.dimension_semantics<parallel>], iteration_bounds = array<i64: 2>, scalar_prefetch = 0 : i64, scratch_operands = 0 : i64, tpu.core_type = #tpu.core_type<tc>, window_params = [{transform_indices = @transform_0, window_bounds = array<i64: 1, 4, 358>}, {pipeline_mode = #tpu.pipeline_mode<synchronous>, transform_indices = @transform_1, window_bounds = array<i64: 1, 256>}, {pipeline_mode = #tpu.pipeline_mode<synchronous>, transform_indices = @transform_2, window_bounds = array<i64: 49, 8, 4>}, {pipeline_mode = #tpu.pipeline_mode<synchronous>, transform_indices = @transform_3, window_bounds = array<i64: 8, 1>}, {transform_indices = @transform_4, window_bounds = array<i64: 1, 8, 256>}]} {
    %c0 = arith.constant 0 : index
    %c0_0 = arith.constant 0 : index
    %0 = vector.load %arg2[%c0, %c0_0] : memref<1x256xi32, #tpu.memory_space<vmem>>, vector<1x256xi32>
    %c3_i32 = arith.constant 3 : i32
    %1 = vector.broadcast %c3_i32 : i32 to vector<1x256xi32>
    %2 = arith.cmpi sge, %0, %1 : vector<1x256xi32>
    %c2_i32 = arith.constant 2 : i32
    %3 = vector.broadcast %c2_i32 : i32 to vector<1x256xi32>
    %4 = arith.cmpi sge, %0, %3 : vector<1x256xi32>
    %c1_i32 = arith.constant 1 : i32
    %5 = vector.broadcast %c1_i32 : i32 to vector<1x256xi32>
    %6 = arith.cmpi sge, %0, %5 : vector<1x256xi32>
    %c15_i32 = arith.constant 15 : i32
    %7 = vector.broadcast %c15_i32 : i32 to vector<1x256xi32>
    %8 = arith.cmpi slt, %0, %7 : vector<1x256xi32>
    %c14_i32 = arith.constant 14 : i32
    %9 = vector.broadcast %c14_i32 : i32 to vector<1x256xi32>
    %10 = arith.cmpi slt, %0, %9 : vector<1x256xi32>
    %c13_i32 = arith.constant 13 : i32
    %11 = vector.broadcast %c13_i32 : i32 to vector<1x256xi32>
    %12 = arith.cmpi slt, %0, %11 : vector<1x256xi32>
    %c0_1 = arith.constant 0 : index
    %c0_2 = arith.constant 0 : index
    %c0_3 = arith.constant 0 : index
    %13 = vector.load %arg1[%c0_1, %c0_2, %c0_3] : memref<1x4x358xf32, #tpu.memory_space<vmem>>, vector<1x4x256xf32>
    %14 = vector.shape_cast %13 : vector<1x4x256xf32> to vector<4x256xf32>
    %cst = arith.constant 0.000000e+00 : f32
    %15 = vector.shape_cast %2 : vector<1x256xi1> to vector<1x256xi1>
    %16 = vector.broadcast %15 : vector<1x256xi1> to vector<4x256xi1>
    %17 = vector.broadcast %cst : f32 to vector<4x256xf32>
    %18 = arith.select %16, %14, %17 : vector<4x256xi1>, vector<4x256xf32>
    %c0_4 = arith.constant 0 : index
    %c0_5 = arith.constant 0 : index
    %c0_6 = arith.constant 0 : index
    %19 = vector.load %arg3[%c0_4, %c0_5, %c0_6] : memref<49x8x4xf32, #tpu.memory_space<vmem>>, vector<1x8x4xf32>
    %20 = vector.shape_cast %19 : vector<1x8x4xf32> to vector<8x4xf32>
    %cst_7 = arith.constant dense<0.000000e+00> : vector<8x256xf32>
    %21 = tpu.matmul %20, %18, %cst_7 {dimension_numbers = #tpu.dot_dimension_numbers<[1], [0], [0], [1], [0, 0, 1, 1], [], []>} : vector<8x4xf32>, vector<4x256xf32>, vector<8x256xf32> -> vector<8x256xf32>
    %c0_8 = arith.constant 0 : index
    %c0_9 = arith.constant 0 : index
    %c1 = arith.constant 1 : index
    %22 = vector.load %arg1[%c0_8, %c0_9, %c1] : memref<1x4x358xf32, #tpu.memory_space<vmem>>, vector<1x4x256xf32>
    %23 = vector.shape_cast %22 : vector<1x4x256xf32> to vector<4x256xf32>
    %cst_10 = arith.constant 0.000000e+00 : f32
    %24 = vector.shape_cast %4 : vector<1x256xi1> to vector<1x256xi1>
    %25 = vector.broadcast %24 : vector<1x256xi1> to vector<4x256xi1>
    %26 = vector.broadcast %cst_10 : f32 to vector<4x256xf32>
    %27 = arith.select %25, %23, %26 : vector<4x256xi1>, vector<4x256xf32>
    %c1_11 = arith.constant 1 : index
    %c0_12 = arith.constant 0 : index
    %c0_13 = arith.constant 0 : index
    %28 = vector.load %arg3[%c1_11, %c0_12, %c0_13] : memref<49x8x4xf32, #tpu.memory_space<vmem>>, vector<1x8x4xf32>
    %29 = vector.shape_cast %28 : vector<1x8x4xf32> to vector<8x4xf32>
    %cst_14 = arith.constant dense<0.000000e+00> : vector<8x256xf32>
    %30 = tpu.matmul %29, %27, %cst_14 {dimension_numbers = #tpu.dot_dimension_numbers<[1], [0], [0], [1], [0, 0, 1, 1], [], []>} : vector<8x4xf32>, vector<4x256xf32>, vector<8x256xf32> -> vector<8x256xf32>
    %31 = arith.addf %21, %30 : vector<8x256xf32>
    %c0_15 = arith.constant 0 : index
    %c0_16 = arith.constant 0 : index
    %c2 = arith.constant 2 : index
    %32 = vector.load %arg1[%c0_15, %c0_16, %c2] : memref<1x4x358xf32, #tpu.memory_space<vmem>>, vector<1x4x256xf32>
    %33 = vector.shape_cast %32 : vector<1x4x256xf32> to vector<4x256xf32>
    %cst_17 = arith.constant 0.000000e+00 : f32
    %34 = vector.shape_cast %6 : vector<1x256xi1> to vector<1x256xi1>
    %35 = vector.broadcast %34 : vector<1x256xi1> to vector<4x256xi1>
    %36 = vector.broadcast %cst_17 : f32 to vector<4x256xf32>
    %37 = arith.select %35, %33, %36 : vector<4x256xi1>, vector<4x256xf32>
    %c2_18 = arith.constant 2 : index
    %c0_19 = arith.constant 0 : index
    %c0_20 = arith.constant 0 : index
    %38 = vector.load %arg3[%c2_18, %c0_19, %c0_20] : memref<49x8x4xf32, #tpu.memory_space<vmem>>, vector<1x8x4xf32>
    %39 = vector.shape_cast %38 : vector<1x8x4xf32> to vector<8x4xf32>
    %cst_21 = arith.constant dense<0.000000e+00> : vector<8x256xf32>
    %40 = tpu.matmul %39, %37, %cst_21 {dimension_numbers = #tpu.dot_dimension_numbers<[1], [0], [0], [1], [0, 0, 1, 1], [], []>} : vector<8x4xf32>, vector<4x256xf32>, vector<8x256xf32> -> vector<8x256xf32>
    %41 = arith.addf %31, %40 : vector<8x256xf32>
    %c0_22 = arith.constant 0 : index
    %c0_23 = arith.constant 0 : index
    %c3 = arith.constant 3 : index
    %42 = vector.load %arg1[%c0_22, %c0_23, %c3] : memref<1x4x358xf32, #tpu.memory_space<vmem>>, vector<1x4x256xf32>
    %43 = vector.shape_cast %42 : vector<1x4x256xf32> to vector<4x256xf32>
    %c3_24 = arith.constant 3 : index
    %c0_25 = arith.constant 0 : index
    %c0_26 = arith.constant 0 : index
    %44 = vector.load %arg3[%c3_24, %c0_25, %c0_26] : memref<49x8x4xf32, #tpu.memory_space<vmem>>, vector<1x8x4xf32>
    %45 = vector.shape_cast %44 : vector<1x8x4xf32> to vector<8x4xf32>
    %cst_27 = arith.constant dense<0.000000e+00> : vector<8x256xf32>
    %46 = tpu.matmul %45, %43, %cst_27 {dimension_numbers = #tpu.dot_dimension_numbers<[1], [0], [0], [1], [0, 0, 1, 1], [], []>} : vector<8x4xf32>, vector<4x256xf32>, vector<8x256xf32> -> vector<8x256xf32>
    %47 = arith.addf %41, %46 : vector<8x256xf32>
    %c0_28 = arith.constant 0 : index
    %c0_29 = arith.constant 0 : index
    %c4 = arith.constant 4 : index
    %48 = vector.load %arg1[%c0_28, %c0_29, %c4] : memref<1x4x358xf32, #tpu.memory_space<vmem>>, vector<1x4x256xf32>
    %49 = vector.shape_cast %48 : vector<1x4x256xf32> to vector<4x256xf32>
    %cst_30 = arith.constant 0.000000e+00 : f32
    %50 = vector.shape_cast %8 : vector<1x256xi1> to vector<1x256xi1>
    %51 = vector.broadcast %50 : vector<1x256xi1> to vector<4x256xi1>
    %52 = vector.broadcast %cst_30 : f32 to vector<4x256xf32>
    %53 = arith.select %51, %49, %52 : vector<4x256xi1>, vector<4x256xf32>
    %c4_31 = arith.constant 4 : index
    %c0_32 = arith.constant 0 : index
    %c0_33 = arith.constant 0 : index
    %54 = vector.load %arg3[%c4_31, %c0_32, %c0_33] : memref<49x8x4xf32, #tpu.memory_space<vmem>>, vector<1x8x4xf32>
    %55 = vector.shape_cast %54 : vector<1x8x4xf32> to vector<8x4xf32>
    %cst_34 = arith.constant dense<0.000000e+00> : vector<8x256xf32>
    %56 = tpu.matmul %55, %53, %cst_34 {dimension_numbers = #tpu.dot_dimension_numbers<[1], [0], [0], [1], [0, 0, 1, 1], [], []>} : vector<8x4xf32>, vector<4x256xf32>, vector<8x256xf32> -> vector<8x256xf32>
    %57 = arith.addf %47, %56 : vector<8x256xf32>
    %c0_35 = arith.constant 0 : index
    %c0_36 = arith.constant 0 : index
    %c5 = arith.constant 5 : index
    %58 = vector.load %arg1[%c0_35, %c0_36, %c5] : memref<1x4x358xf32, #tpu.memory_space<vmem>>, vector<1x4x256xf32>
    %59 = vector.shape_cast %58 : vector<1x4x256xf32> to vector<4x256xf32>
    %cst_37 = arith.constant 0.000000e+00 : f32
    %60 = vector.shape_cast %10 : vector<1x256xi1> to vector<1x256xi1>
    %61 = vector.broadcast %60 : vector<1x256xi1> to vector<4x256xi1>
    %62 = vector.broadcast %cst_37 : f32 to vector<4x256xf32>
    %63 = arith.select %61, %59, %62 : vector<4x256xi1>, vector<4x256xf32>
    %c5_38 = arith.constant 5 : index
    %c0_39 = arith.constant 0 : index
    %c0_40 = arith.constant 0 : index
    %64 = vector.load %arg3[%c5_38, %c0_39, %c0_40] : memref<49x8x4xf32, #tpu.memory_space<vmem>>, vector<1x8x4xf32>
    %65 = vector.shape_cast %64 : vector<1x8x4xf32> to vector<8x4xf32>
    %cst_41 = arith.constant dense<0.000000e+00> : vector<8x256xf32>
    %66 = tpu.matmul %65, %63, %cst_41 {dimension_numbers = #tpu.dot_dimension_numbers<[1], [0], [0], [1], [0, 0, 1, 1], [], []>} : vector<8x4xf32>, vector<4x256xf32>, vector<8x256xf32> -> vector<8x256xf32>
    %67 = arith.addf %57, %66 : vector<8x256xf32>
    %c0_42 = arith.constant 0 : index
    %c0_43 = arith.constant 0 : index
    %c6 = arith.constant 6 : index
    %68 = vector.load %arg1[%c0_42, %c0_43, %c6] : memref<1x4x358xf32, #tpu.memory_space<vmem>>, vector<1x4x256xf32>
    %69 = vector.shape_cast %68 : vector<1x4x256xf32> to vector<4x256xf32>
    %cst_44 = arith.constant 0.000000e+00 : f32
    %70 = vector.shape_cast %12 : vector<1x256xi1> to vector<1x256xi1>
    %71 = vector.broadcast %70 : vector<1x256xi1> to vector<4x256xi1>
    %72 = vector.broadcast %cst_44 : f32 to vector<4x256xf32>
    %73 = arith.select %71, %69, %72 : vector<4x256xi1>, vector<4x256xf32>
    %c6_45 = arith.constant 6 : index
    %c0_46 = arith.constant 0 : index
    %c0_47 = arith.constant 0 : index
    %74 = vector.load %arg3[%c6_45, %c0_46, %c0_47] : memref<49x8x4xf32, #tpu.memory_space<vmem>>, vector<1x8x4xf32>
    %75 = vector.shape_cast %74 : vector<1x8x4xf32> to vector<8x4xf32>
    %cst_48 = arith.constant dense<0.000000e+00> : vector<8x256xf32>
    %76 = tpu.matmul %75, %73, %cst_48 {dimension_numbers = #tpu.dot_dimension_numbers<[1], [0], [0], [1], [0, 0, 1, 1], [], []>} : vector<8x4xf32>, vector<4x256xf32>, vector<8x256xf32> -> vector<8x256xf32>
    %77 = arith.addf %67, %76 : vector<8x256xf32>
    %c0_49 = arith.constant 0 : index
    %c0_50 = arith.constant 0 : index
    %c16 = arith.constant 16 : index
    %78 = vector.load %arg1[%c0_49, %c0_50, %c16] : memref<1x4x358xf32, #tpu.memory_space<vmem>>, vector<1x4x256xf32>
    %79 = vector.shape_cast %78 : vector<1x4x256xf32> to vector<4x256xf32>
    %cst_51 = arith.constant 0.000000e+00 : f32
    %80 = vector.shape_cast %2 : vector<1x256xi1> to vector<1x256xi1>
    %81 = vector.broadcast %80 : vector<1x256xi1> to vector<4x256xi1>
    %82 = vector.broadcast %cst_51 : f32 to vector<4x256xf32>
    %83 = arith.select %81, %79, %82 : vector<4x256xi1>, vector<4x256xf32>
    %c7 = arith.constant 7 : index
    %c0_52 = arith.constant 0 : index
    %c0_53 = arith.constant 0 : index
    %84 = vector.load %arg3[%c7, %c0_52, %c0_53] : memref<49x8x4xf32, #tpu.memory_space<vmem>>, vector<1x8x4xf32>
    %85 = vector.shape_cast %84 : vector<1x8x4xf32> to vector<8x4xf32>
    %cst_54 = arith.constant dense<0.000000e+00> : vector<8x256xf32>
    %86 = tpu.matmul %85, %83, %cst_54 {dimension_numbers = #tpu.dot_dimension_numbers<[1], [0], [0], [1], [0, 0, 1, 1], [], []>} : vector<8x4xf32>, vector<4x256xf32>, vector<8x256xf32> -> vector<8x256xf32>
    %87 = arith.addf %77, %86 : vector<8x256xf32>
    %c0_55 = arith.constant 0 : index
    %c0_56 = arith.constant 0 : index
    %c17 = arith.constant 17 : index
    %88 = vector.load %arg1[%c0_55, %c0_56, %c17] : memref<1x4x358xf32, #tpu.memory_space<vmem>>, vector<1x4x256xf32>
    %89 = vector.shape_cast %88 : vector<1x4x256xf32> to vector<4x256xf32>
    %cst_57 = arith.constant 0.000000e+00 : f32
    %90 = vector.shape_cast %4 : vector<1x256xi1> to vector<1x256xi1>
    %91 = vector.broadcast %90 : vector<1x256xi1> to vector<4x256xi1>
    %92 = vector.broadcast %cst_57 : f32 to vector<4x256xf32>
    %93 = arith.select %91, %89, %92 : vector<4x256xi1>, vector<4x256xf32>
    %c8 = arith.constant 8 : index
    %c0_58 = arith.constant 0 : index
    %c0_59 = arith.constant 0 : index
    %94 = vector.load %arg3[%c8, %c0_58, %c0_59] : memref<49x8x4xf32, #tpu.memory_space<vmem>>, vector<1x8x4xf32>
    %95 = vector.shape_cast %94 : vector<1x8x4xf32> to vector<8x4xf32>
    %cst_60 = arith.constant dense<0.000000e+00> : vector<8x256xf32>
    %96 = tpu.matmul %95, %93, %cst_60 {dimension_numbers = #tpu.dot_dimension_numbers<[1], [0], [0], [1], [0, 0, 1, 1], [], []>} : vector<8x4xf32>, vector<4x256xf32>, vector<8x256xf32> -> vector<8x256xf32>
    %97 = arith.addf %87, %96 : vector<8x256xf32>
    %c0_61 = arith.constant 0 : index
    %c0_62 = arith.constant 0 : index
    %c18 = arith.constant 18 : index
    %98 = vector.load %arg1[%c0_61, %c0_62, %c18] : memref<1x4x358xf32, #tpu.memory_space<vmem>>, vector<1x4x256xf32>
    %99 = vector.shape_cast %98 : vector<1x4x256xf32> to vector<4x256xf32>
    %cst_63 = arith.constant 0.000000e+00 : f32
    %100 = vector.shape_cast %6 : vector<1x256xi1> to vector<1x256xi1>
    %101 = vector.broadcast %100 : vector<1x256xi1> to vector<4x256xi1>
    %102 = vector.broadcast %cst_63 : f32 to vector<4x256xf32>
    %103 = arith.select %101, %99, %102 : vector<4x256xi1>, vector<4x256xf32>
    %c9 = arith.constant 9 : index
    %c0_64 = arith.constant 0 : index
    %c0_65 = arith.constant 0 : index
    %104 = vector.load %arg3[%c9, %c0_64, %c0_65] : memref<49x8x4xf32, #tpu.memory_space<vmem>>, vector<1x8x4xf32>
    %105 = vector.shape_cast %104 : vector<1x8x4xf32> to vector<8x4xf32>
    %cst_66 = arith.constant dense<0.000000e+00> : vector<8x256xf32>
    %106 = tpu.matmul %105, %103, %cst_66 {dimension_numbers = #tpu.dot_dimension_numbers<[1], [0], [0], [1], [0, 0, 1, 1], [], []>} : vector<8x4xf32>, vector<4x256xf32>, vector<8x256xf32> -> vector<8x256xf32>
    %107 = arith.addf %97, %106 : vector<8x256xf32>
    %c0_67 = arith.constant 0 : index
    %c0_68 = arith.constant 0 : index
    %c19 = arith.constant 19 : index
    %108 = vector.load %arg1[%c0_67, %c0_68, %c19] : memref<1x4x358xf32, #tpu.memory_space<vmem>>, vector<1x4x256xf32>
    %109 = vector.shape_cast %108 : vector<1x4x256xf32> to vector<4x256xf32>
    %c10 = arith.constant 10 : index
    %c0_69 = arith.constant 0 : index
    %c0_70 = arith.constant 0 : index
    %110 = vector.load %arg3[%c10, %c0_69, %c0_70] : memref<49x8x4xf32, #tpu.memory_space<vmem>>, vector<1x8x4xf32>
    %111 = vector.shape_cast %110 : vector<1x8x4xf32> to vector<8x4xf32>
    %cst_71 = arith.constant dense<0.000000e+00> : vector<8x256xf32>
    %112 = tpu.matmul %111, %109, %cst_71 {dimension_numbers = #tpu.dot_dimension_numbers<[1], [0], [0], [1], [0, 0, 1, 1], [], []>} : vector<8x4xf32>, vector<4x256xf32>, vector<8x256xf32> -> vector<8x256xf32>
    %113 = arith.addf %107, %112 : vector<8x256xf32>
    %c0_72 = arith.constant 0 : index
    %c0_73 = arith.constant 0 : index
    %c20 = arith.constant 20 : index
    %114 = vector.load %arg1[%c0_72, %c0_73, %c20] : memref<1x4x358xf32, #tpu.memory_space<vmem>>, vector<1x4x256xf32>
    %115 = vector.shape_cast %114 : vector<1x4x256xf32> to vector<4x256xf32>
    %cst_74 = arith.constant 0.000000e+00 : f32
    %116 = vector.shape_cast %8 : vector<1x256xi1> to vector<1x256xi1>
    %117 = vector.broadcast %116 : vector<1x256xi1> to vector<4x256xi1>
    %118 = vector.broadcast %cst_74 : f32 to vector<4x256xf32>
    %119 = arith.select %117, %115, %118 : vector<4x256xi1>, vector<4x256xf32>
    %c11 = arith.constant 11 : index
    %c0_75 = arith.constant 0 : index
    %c0_76 = arith.constant 0 : index
    %120 = vector.load %arg3[%c11, %c0_75, %c0_76] : memref<49x8x4xf32, #tpu.memory_space<vmem>>, vector<1x8x4xf32>
    %121 = vector.shape_cast %120 : vector<1x8x4xf32> to vector<8x4xf32>
    %cst_77 = arith.constant dense<0.000000e+00> : vector<8x256xf32>
    %122 = tpu.matmul %121, %119, %cst_77 {dimension_numbers = #tpu.dot_dimension_numbers<[1], [0], [0], [1], [0, 0, 1, 1], [], []>} : vector<8x4xf32>, vector<4x256xf32>, vector<8x256xf32> -> vector<8x256xf32>
    %123 = arith.addf %113, %122 : vector<8x256xf32>
    %c0_78 = arith.constant 0 : index
    %c0_79 = arith.constant 0 : index
    %c21 = arith.constant 21 : index
    %124 = vector.load %arg1[%c0_78, %c0_79, %c21] : memref<1x4x358xf32, #tpu.memory_space<vmem>>, vector<1x4x256xf32>
    %125 = vector.shape_cast %124 : vector<1x4x256xf32> to vector<4x256xf32>
    %cst_80 = arith.constant 0.000000e+00 : f32
    %126 = vector.shape_cast %10 : vector<1x256xi1> to vector<1x256xi1>
    %127 = vector.broadcast %126 : vector<1x256xi1> to vector<4x256xi1>
    %128 = vector.broadcast %cst_80 : f32 to vector<4x256xf32>
    %129 = arith.select %127, %125, %128 : vector<4x256xi1>, vector<4x256xf32>
    %c12 = arith.constant 12 : index
    %c0_81 = arith.constant 0 : index
    %c0_82 = arith.constant 0 : index
    %130 = vector.load %arg3[%c12, %c0_81, %c0_82] : memref<49x8x4xf32, #tpu.memory_space<vmem>>, vector<1x8x4xf32>
    %131 = vector.shape_cast %130 : vector<1x8x4xf32> to vector<8x4xf32>
    %cst_83 = arith.constant dense<0.000000e+00> : vector<8x256xf32>
    %132 = tpu.matmul %131, %129, %cst_83 {dimension_numbers = #tpu.dot_dimension_numbers<[1], [0], [0], [1], [0, 0, 1, 1], [], []>} : vector<8x4xf32>, vector<4x256xf32>, vector<8x256xf32> -> vector<8x256xf32>
    %133 = arith.addf %123, %132 : vector<8x256xf32>
    %c0_84 = arith.constant 0 : index
    %c0_85 = arith.constant 0 : index
    %c22 = arith.constant 22 : index
    %134 = vector.load %arg1[%c0_84, %c0_85, %c22] : memref<1x4x358xf32, #tpu.memory_space<vmem>>, vector<1x4x256xf32>
    %135 = vector.shape_cast %134 : vector<1x4x256xf32> to vector<4x256xf32>
    %cst_86 = arith.constant 0.000000e+00 : f32
    %136 = vector.shape_cast %12 : vector<1x256xi1> to vector<1x256xi1>
    %137 = vector.broadcast %136 : vector<1x256xi1> to vector<4x256xi1>
    %138 = vector.broadcast %cst_86 : f32 to vector<4x256xf32>
    %139 = arith.select %137, %135, %138 : vector<4x256xi1>, vector<4x256xf32>
    %c13 = arith.constant 13 : index
    %c0_87 = arith.constant 0 : index
    %c0_88 = arith.constant 0 : index
    %140 = vector.load %arg3[%c13, %c0_87, %c0_88] : memref<49x8x4xf32, #tpu.memory_space<vmem>>, vector<1x8x4xf32>
    %141 = vector.shape_cast %140 : vector<1x8x4xf32> to vector<8x4xf32>
    %cst_89 = arith.constant dense<0.000000e+00> : vector<8x256xf32>
    %142 = tpu.matmul %141, %139, %cst_89 {dimension_numbers = #tpu.dot_dimension_numbers<[1], [0], [0], [1], [0, 0, 1, 1], [], []>} : vector<8x4xf32>, vector<4x256xf32>, vector<8x256xf32> -> vector<8x256xf32>
    %143 = arith.addf %133, %142 : vector<8x256xf32>
    %c0_90 = arith.constant 0 : index
    %c0_91 = arith.constant 0 : index
    %c32 = arith.constant 32 : index
    %144 = vector.load %arg1[%c0_90, %c0_91, %c32] : memref<1x4x358xf32, #tpu.memory_space<vmem>>, vector<1x4x256xf32>
    %145 = vector.shape_cast %144 : vector<1x4x256xf32> to vector<4x256xf32>
    %cst_92 = arith.constant 0.000000e+00 : f32
    %146 = vector.shape_cast %2 : vector<1x256xi1> to vector<1x256xi1>
    %147 = vector.broadcast %146 : vector<1x256xi1> to vector<4x256xi1>
    %148 = vector.broadcast %cst_92 : f32 to vector<4x256xf32>
    %149 = arith.select %147, %145, %148 : vector<4x256xi1>, vector<4x256xf32>
    %c14 = arith.constant 14 : index
    %c0_93 = arith.constant 0 : index
    %c0_94 = arith.constant 0 : index
    %150 = vector.load %arg3[%c14, %c0_93, %c0_94] : memref<49x8x4xf32, #tpu.memory_space<vmem>>, vector<1x8x4xf32>
    %151 = vector.shape_cast %150 : vector<1x8x4xf32> to vector<8x4xf32>
    %cst_95 = arith.constant dense<0.000000e+00> : vector<8x256xf32>
    %152 = tpu.matmul %151, %149, %cst_95 {dimension_numbers = #tpu.dot_dimension_numbers<[1], [0], [0], [1], [0, 0, 1, 1], [], []>} : vector<8x4xf32>, vector<4x256xf32>, vector<8x256xf32> -> vector<8x256xf32>
    %153 = arith.addf %143, %152 : vector<8x256xf32>
    %c0_96 = arith.constant 0 : index
    %c0_97 = arith.constant 0 : index
    %c33 = arith.constant 33 : index
    %154 = vector.load %arg1[%c0_96, %c0_97, %c33] : memref<1x4x358xf32, #tpu.memory_space<vmem>>, vector<1x4x256xf32>
    %155 = vector.shape_cast %154 : vector<1x4x256xf32> to vector<4x256xf32>
    %cst_98 = arith.constant 0.000000e+00 : f32
    %156 = vector.shape_cast %4 : vector<1x256xi1> to vector<1x256xi1>
    %157 = vector.broadcast %156 : vector<1x256xi1> to vector<4x256xi1>
    %158 = vector.broadcast %cst_98 : f32 to vector<4x256xf32>
    %159 = arith.select %157, %155, %158 : vector<4x256xi1>, vector<4x256xf32>
    %c15 = arith.constant 15 : index
    %c0_99 = arith.constant 0 : index
    %c0_100 = arith.constant 0 : index
    %160 = vector.load %arg3[%c15, %c0_99, %c0_100] : memref<49x8x4xf32, #tpu.memory_space<vmem>>, vector<1x8x4xf32>
    %161 = vector.shape_cast %160 : vector<1x8x4xf32> to vector<8x4xf32>
    %cst_101 = arith.constant dense<0.000000e+00> : vector<8x256xf32>
    %162 = tpu.matmul %161, %159, %cst_101 {dimension_numbers = #tpu.dot_dimension_numbers<[1], [0], [0], [1], [0, 0, 1, 1], [], []>} : vector<8x4xf32>, vector<4x256xf32>, vector<8x256xf32> -> vector<8x256xf32>
    %163 = arith.addf %153, %162 : vector<8x256xf32>
    %c0_102 = arith.constant 0 : index
    %c0_103 = arith.constant 0 : index
    %c34 = arith.constant 34 : index
    %164 = vector.load %arg1[%c0_102, %c0_103, %c34] : memref<1x4x358xf32, #tpu.memory_space<vmem>>, vector<1x4x256xf32>
    %165 = vector.shape_cast %164 : vector<1x4x256xf32> to vector<4x256xf32>
    %cst_104 = arith.constant 0.000000e+00 : f32
    %166 = vector.shape_cast %6 : vector<1x256xi1> to vector<1x256xi1>
    %167 = vector.broadcast %166 : vector<1x256xi1> to vector<4x256xi1>
    %168 = vector.broadcast %cst_104 : f32 to vector<4x256xf32>
    %169 = arith.select %167, %165, %168 : vector<4x256xi1>, vector<4x256xf32>
    %c16_105 = arith.constant 16 : index
    %c0_106 = arith.constant 0 : index
    %c0_107 = arith.constant 0 : index
    %170 = vector.load %arg3[%c16_105, %c0_106, %c0_107] : memref<49x8x4xf32, #tpu.memory_space<vmem>>, vector<1x8x4xf32>
    %171 = vector.shape_cast %170 : vector<1x8x4xf32> to vector<8x4xf32>
    %cst_108 = arith.constant dense<0.000000e+00> : vector<8x256xf32>
    %172 = tpu.matmul %171, %169, %cst_108 {dimension_numbers = #tpu.dot_dimension_numbers<[1], [0], [0], [1], [0, 0, 1, 1], [], []>} : vector<8x4xf32>, vector<4x256xf32>, vector<8x256xf32> -> vector<8x256xf32>
    %173 = arith.addf %163, %172 : vector<8x256xf32>
    %c0_109 = arith.constant 0 : index
    %c0_110 = arith.constant 0 : index
    %c35 = arith.constant 35 : index
    %174 = vector.load %arg1[%c0_109, %c0_110, %c35] : memref<1x4x358xf32, #tpu.memory_space<vmem>>, vector<1x4x256xf32>
    %175 = vector.shape_cast %174 : vector<1x4x256xf32> to vector<4x256xf32>
    %c17_111 = arith.constant 17 : index
    %c0_112 = arith.constant 0 : index
    %c0_113 = arith.constant 0 : index
    %176 = vector.load %arg3[%c17_111, %c0_112, %c0_113] : memref<49x8x4xf32, #tpu.memory_space<vmem>>, vector<1x8x4xf32>
    %177 = vector.shape_cast %176 : vector<1x8x4xf32> to vector<8x4xf32>
    %cst_114 = arith.constant dense<0.000000e+00> : vector<8x256xf32>
    %178 = tpu.matmul %177, %175, %cst_114 {dimension_numbers = #tpu.dot_dimension_numbers<[1], [0], [0], [1], [0, 0, 1, 1], [], []>} : vector<8x4xf32>, vector<4x256xf32>, vector<8x256xf32> -> vector<8x256xf32>
    %179 = arith.addf %173, %178 : vector<8x256xf32>
    %c0_115 = arith.constant 0 : index
    %c0_116 = arith.constant 0 : index
    %c36 = arith.constant 36 : index
    %180 = vector.load %arg1[%c0_115, %c0_116, %c36] : memref<1x4x358xf32, #tpu.memory_space<vmem>>, vector<1x4x256xf32>
    %181 = vector.shape_cast %180 : vector<1x4x256xf32> to vector<4x256xf32>
    %cst_117 = arith.constant 0.000000e+00 : f32
    %182 = vector.shape_cast %8 : vector<1x256xi1> to vector<1x256xi1>
    %183 = vector.broadcast %182 : vector<1x256xi1> to vector<4x256xi1>
    %184 = vector.broadcast %cst_117 : f32 to vector<4x256xf32>
    %185 = arith.select %183, %181, %184 : vector<4x256xi1>, vector<4x256xf32>
    %c18_118 = arith.constant 18 : index
    %c0_119 = arith.constant 0 : index
    %c0_120 = arith.constant 0 : index
    %186 = vector.load %arg3[%c18_118, %c0_119, %c0_120] : memref<49x8x4xf32, #tpu.memory_space<vmem>>, vector<1x8x4xf32>
    %187 = vector.shape_cast %186 : vector<1x8x4xf32> to vector<8x4xf32>
    %cst_121 = arith.constant dense<0.000000e+00> : vector<8x256xf32>
    %188 = tpu.matmul %187, %185, %cst_121 {dimension_numbers = #tpu.dot_dimension_numbers<[1], [0], [0], [1], [0, 0, 1, 1], [], []>} : vector<8x4xf32>, vector<4x256xf32>, vector<8x256xf32> -> vector<8x256xf32>
    %189 = arith.addf %179, %188 : vector<8x256xf32>
    %c0_122 = arith.constant 0 : index
    %c0_123 = arith.constant 0 : index
    %c37 = arith.constant 37 : index
    %190 = vector.load %arg1[%c0_122, %c0_123, %c37] : memref<1x4x358xf32, #tpu.memory_space<vmem>>, vector<1x4x256xf32>
    %191 = vector.shape_cast %190 : vector<1x4x256xf32> to vector<4x256xf32>
    %cst_124 = arith.constant 0.000000e+00 : f32
    %192 = vector.shape_cast %10 : vector<1x256xi1> to vector<1x256xi1>
    %193 = vector.broadcast %192 : vector<1x256xi1> to vector<4x256xi1>
    %194 = vector.broadcast %cst_124 : f32 to vector<4x256xf32>
    %195 = arith.select %193, %191, %194 : vector<4x256xi1>, vector<4x256xf32>
    %c19_125 = arith.constant 19 : index
    %c0_126 = arith.constant 0 : index
    %c0_127 = arith.constant 0 : index
    %196 = vector.load %arg3[%c19_125, %c0_126, %c0_127] : memref<49x8x4xf32, #tpu.memory_space<vmem>>, vector<1x8x4xf32>
    %197 = vector.shape_cast %196 : vector<1x8x4xf32> to vector<8x4xf32>
    %cst_128 = arith.constant dense<0.000000e+00> : vector<8x256xf32>
    %198 = tpu.matmul %197, %195, %cst_128 {dimension_numbers = #tpu.dot_dimension_numbers<[1], [0], [0], [1], [0, 0, 1, 1], [], []>} : vector<8x4xf32>, vector<4x256xf32>, vector<8x256xf32> -> vector<8x256xf32>
    %199 = arith.addf %189, %198 : vector<8x256xf32>
    %c0_129 = arith.constant 0 : index
    %c0_130 = arith.constant 0 : index
    %c38 = arith.constant 38 : index
    %200 = vector.load %arg1[%c0_129, %c0_130, %c38] : memref<1x4x358xf32, #tpu.memory_space<vmem>>, vector<1x4x256xf32>
    %201 = vector.shape_cast %200 : vector<1x4x256xf32> to vector<4x256xf32>
    %cst_131 = arith.constant 0.000000e+00 : f32
    %202 = vector.shape_cast %12 : vector<1x256xi1> to vector<1x256xi1>
    %203 = vector.broadcast %202 : vector<1x256xi1> to vector<4x256xi1>
    %204 = vector.broadcast %cst_131 : f32 to vector<4x256xf32>
    %205 = arith.select %203, %201, %204 : vector<4x256xi1>, vector<4x256xf32>
    %c20_132 = arith.constant 20 : index
    %c0_133 = arith.constant 0 : index
    %c0_134 = arith.constant 0 : index
    %206 = vector.load %arg3[%c20_132, %c0_133, %c0_134] : memref<49x8x4xf32, #tpu.memory_space<vmem>>, vector<1x8x4xf32>
    %207 = vector.shape_cast %206 : vector<1x8x4xf32> to vector<8x4xf32>
    %cst_135 = arith.constant dense<0.000000e+00> : vector<8x256xf32>
    %208 = tpu.matmul %207, %205, %cst_135 {dimension_numbers = #tpu.dot_dimension_numbers<[1], [0], [0], [1], [0, 0, 1, 1], [], []>} : vector<8x4xf32>, vector<4x256xf32>, vector<8x256xf32> -> vector<8x256xf32>
    %209 = arith.addf %199, %208 : vector<8x256xf32>
    %c0_136 = arith.constant 0 : index
    %c0_137 = arith.constant 0 : index
    %c48 = arith.constant 48 : index
    %210 = vector.load %arg1[%c0_136, %c0_137, %c48] : memref<1x4x358xf32, #tpu.memory_space<vmem>>, vector<1x4x256xf32>
    %211 = vector.shape_cast %210 : vector<1x4x256xf32> to vector<4x256xf32>
    %cst_138 = arith.constant 0.000000e+00 : f32
    %212 = vector.shape_cast %2 : vector<1x256xi1> to vector<1x256xi1>
    %213 = vector.broadcast %212 : vector<1x256xi1> to vector<4x256xi1>
    %214 = vector.broadcast %cst_138 : f32 to vector<4x256xf32>
    %215 = arith.select %213, %211, %214 : vector<4x256xi1>, vector<4x256xf32>
    %c21_139 = arith.constant 21 : index
    %c0_140 = arith.constant 0 : index
    %c0_141 = arith.constant 0 : index
    %216 = vector.load %arg3[%c21_139, %c0_140, %c0_141] : memref<49x8x4xf32, #tpu.memory_space<vmem>>, vector<1x8x4xf32>
    %217 = vector.shape_cast %216 : vector<1x8x4xf32> to vector<8x4xf32>
    %cst_142 = arith.constant dense<0.000000e+00> : vector<8x256xf32>
    %218 = tpu.matmul %217, %215, %cst_142 {dimension_numbers = #tpu.dot_dimension_numbers<[1], [0], [0], [1], [0, 0, 1, 1], [], []>} : vector<8x4xf32>, vector<4x256xf32>, vector<8x256xf32> -> vector<8x256xf32>
    %219 = arith.addf %209, %218 : vector<8x256xf32>
    %c0_143 = arith.constant 0 : index
    %c0_144 = arith.constant 0 : index
    %c49 = arith.constant 49 : index
    %220 = vector.load %arg1[%c0_143, %c0_144, %c49] : memref<1x4x358xf32, #tpu.memory_space<vmem>>, vector<1x4x256xf32>
    %221 = vector.shape_cast %220 : vector<1x4x256xf32> to vector<4x256xf32>
    %cst_145 = arith.constant 0.000000e+00 : f32
    %222 = vector.shape_cast %4 : vector<1x256xi1> to vector<1x256xi1>
    %223 = vector.broadcast %222 : vector<1x256xi1> to vector<4x256xi1>
    %224 = vector.broadcast %cst_145 : f32 to vector<4x256xf32>
    %225 = arith.select %223, %221, %224 : vector<4x256xi1>, vector<4x256xf32>
    %c22_146 = arith.constant 22 : index
    %c0_147 = arith.constant 0 : index
    %c0_148 = arith.constant 0 : index
    %226 = vector.load %arg3[%c22_146, %c0_147, %c0_148] : memref<49x8x4xf32, #tpu.memory_space<vmem>>, vector<1x8x4xf32>
    %227 = vector.shape_cast %226 : vector<1x8x4xf32> to vector<8x4xf32>
    %cst_149 = arith.constant dense<0.000000e+00> : vector<8x256xf32>
    %228 = tpu.matmul %227, %225, %cst_149 {dimension_numbers = #tpu.dot_dimension_numbers<[1], [0], [0], [1], [0, 0, 1, 1], [], []>} : vector<8x4xf32>, vector<4x256xf32>, vector<8x256xf32> -> vector<8x256xf32>
    %229 = arith.addf %219, %228 : vector<8x256xf32>
    %c0_150 = arith.constant 0 : index
    %c0_151 = arith.constant 0 : index
    %c50 = arith.constant 50 : index
    %230 = vector.load %arg1[%c0_150, %c0_151, %c50] : memref<1x4x358xf32, #tpu.memory_space<vmem>>, vector<1x4x256xf32>
    %231 = vector.shape_cast %230 : vector<1x4x256xf32> to vector<4x256xf32>
    %cst_152 = arith.constant 0.000000e+00 : f32
    %232 = vector.shape_cast %6 : vector<1x256xi1> to vector<1x256xi1>
    %233 = vector.broadcast %232 : vector<1x256xi1> to vector<4x256xi1>
    %234 = vector.broadcast %cst_152 : f32 to vector<4x256xf32>
    %235 = arith.select %233, %231, %234 : vector<4x256xi1>, vector<4x256xf32>
    %c23 = arith.constant 23 : index
    %c0_153 = arith.constant 0 : index
    %c0_154 = arith.constant 0 : index
    %236 = vector.load %arg3[%c23, %c0_153, %c0_154] : memref<49x8x4xf32, #tpu.memory_space<vmem>>, vector<1x8x4xf32>
    %237 = vector.shape_cast %236 : vector<1x8x4xf32> to vector<8x4xf32>
    %cst_155 = arith.constant dense<0.000000e+00> : vector<8x256xf32>
    %238 = tpu.matmul %237, %235, %cst_155 {dimension_numbers = #tpu.dot_dimension_numbers<[1], [0], [0], [1], [0, 0, 1, 1], [], []>} : vector<8x4xf32>, vector<4x256xf32>, vector<8x256xf32> -> vector<8x256xf32>
    %239 = arith.addf %229, %238 : vector<8x256xf32>
    %c0_156 = arith.constant 0 : index
    %c0_157 = arith.constant 0 : index
    %c51 = arith.constant 51 : index
    %240 = vector.load %arg1[%c0_156, %c0_157, %c51] : memref<1x4x358xf32, #tpu.memory_space<vmem>>, vector<1x4x256xf32>
    %241 = vector.shape_cast %240 : vector<1x4x256xf32> to vector<4x256xf32>
    %c24 = arith.constant 24 : index
    %c0_158 = arith.constant 0 : index
    %c0_159 = arith.constant 0 : index
    %242 = vector.load %arg3[%c24, %c0_158, %c0_159] : memref<49x8x4xf32, #tpu.memory_space<vmem>>, vector<1x8x4xf32>
    %243 = vector.shape_cast %242 : vector<1x8x4xf32> to vector<8x4xf32>
    %cst_160 = arith.constant dense<0.000000e+00> : vector<8x256xf32>
    %244 = tpu.matmul %243, %241, %cst_160 {dimension_numbers = #tpu.dot_dimension_numbers<[1], [0], [0], [1], [0, 0, 1, 1], [], []>} : vector<8x4xf32>, vector<4x256xf32>, vector<8x256xf32> -> vector<8x256xf32>
    %245 = arith.addf %239, %244 : vector<8x256xf32>
    %c0_161 = arith.constant 0 : index
    %c0_162 = arith.constant 0 : index
    %c52 = arith.constant 52 : index
    %246 = vector.load %arg1[%c0_161, %c0_162, %c52] : memref<1x4x358xf32, #tpu.memory_space<vmem>>, vector<1x4x256xf32>
    %247 = vector.shape_cast %246 : vector<1x4x256xf32> to vector<4x256xf32>
    %cst_163 = arith.constant 0.000000e+00 : f32
    %248 = vector.shape_cast %8 : vector<1x256xi1> to vector<1x256xi1>
    %249 = vector.broadcast %248 : vector<1x256xi1> to vector<4x256xi1>
    %250 = vector.broadcast %cst_163 : f32 to vector<4x256xf32>
    %251 = arith.select %249, %247, %250 : vector<4x256xi1>, vector<4x256xf32>
    %c25 = arith.constant 25 : index
    %c0_164 = arith.constant 0 : index
    %c0_165 = arith.constant 0 : index
    %252 = vector.load %arg3[%c25, %c0_164, %c0_165] : memref<49x8x4xf32, #tpu.memory_space<vmem>>, vector<1x8x4xf32>
    %253 = vector.shape_cast %252 : vector<1x8x4xf32> to vector<8x4xf32>
    %cst_166 = arith.constant dense<0.000000e+00> : vector<8x256xf32>
    %254 = tpu.matmul %253, %251, %cst_166 {dimension_numbers = #tpu.dot_dimension_numbers<[1], [0], [0], [1], [0, 0, 1, 1], [], []>} : vector<8x4xf32>, vector<4x256xf32>, vector<8x256xf32> -> vector<8x256xf32>
    %255 = arith.addf %245, %254 : vector<8x256xf32>
    %c0_167 = arith.constant 0 : index
    %c0_168 = arith.constant 0 : index
    %c53 = arith.constant 53 : index
    %256 = vector.load %arg1[%c0_167, %c0_168, %c53] : memref<1x4x358xf32, #tpu.memory_space<vmem>>, vector<1x4x256xf32>
    %257 = vector.shape_cast %256 : vector<1x4x256xf32> to vector<4x256xf32>
    %cst_169 = arith.constant 0.000000e+00 : f32
    %258 = vector.shape_cast %10 : vector<1x256xi1> to vector<1x256xi1>
    %259 = vector.broadcast %258 : vector<1x256xi1> to vector<4x256xi1>
    %260 = vector.broadcast %cst_169 : f32 to vector<4x256xf32>
    %261 = arith.select %259, %257, %260 : vector<4x256xi1>, vector<4x256xf32>
    %c26 = arith.constant 26 : index
    %c0_170 = arith.constant 0 : index
    %c0_171 = arith.constant 0 : index
    %262 = vector.load %arg3[%c26, %c0_170, %c0_171] : memref<49x8x4xf32, #tpu.memory_space<vmem>>, vector<1x8x4xf32>
    %263 = vector.shape_cast %262 : vector<1x8x4xf32> to vector<8x4xf32>
    %cst_172 = arith.constant dense<0.000000e+00> : vector<8x256xf32>
    %264 = tpu.matmul %263, %261, %cst_172 {dimension_numbers = #tpu.dot_dimension_numbers<[1], [0], [0], [1], [0, 0, 1, 1], [], []>} : vector<8x4xf32>, vector<4x256xf32>, vector<8x256xf32> -> vector<8x256xf32>
    %265 = arith.addf %255, %264 : vector<8x256xf32>
    %c0_173 = arith.constant 0 : index
    %c0_174 = arith.constant 0 : index
    %c54 = arith.constant 54 : index
    %266 = vector.load %arg1[%c0_173, %c0_174, %c54] : memref<1x4x358xf32, #tpu.memory_space<vmem>>, vector<1x4x256xf32>
    %267 = vector.shape_cast %266 : vector<1x4x256xf32> to vector<4x256xf32>
    %cst_175 = arith.constant 0.000000e+00 : f32
    %268 = vector.shape_cast %12 : vector<1x256xi1> to vector<1x256xi1>
    %269 = vector.broadcast %268 : vector<1x256xi1> to vector<4x256xi1>
    %270 = vector.broadcast %cst_175 : f32 to vector<4x256xf32>
    %271 = arith.select %269, %267, %270 : vector<4x256xi1>, vector<4x256xf32>
    %c27 = arith.constant 27 : index
    %c0_176 = arith.constant 0 : index
    %c0_177 = arith.constant 0 : index
    %272 = vector.load %arg3[%c27, %c0_176, %c0_177] : memref<49x8x4xf32, #tpu.memory_space<vmem>>, vector<1x8x4xf32>
    %273 = vector.shape_cast %272 : vector<1x8x4xf32> to vector<8x4xf32>
    %cst_178 = arith.constant dense<0.000000e+00> : vector<8x256xf32>
    %274 = tpu.matmul %273, %271, %cst_178 {dimension_numbers = #tpu.dot_dimension_numbers<[1], [0], [0], [1], [0, 0, 1, 1], [], []>} : vector<8x4xf32>, vector<4x256xf32>, vector<8x256xf32> -> vector<8x256xf32>
    %275 = arith.addf %265, %274 : vector<8x256xf32>
    %c0_179 = arith.constant 0 : index
    %c0_180 = arith.constant 0 : index
    %c64 = arith.constant 64 : index
    %276 = vector.load %arg1[%c0_179, %c0_180, %c64] : memref<1x4x358xf32, #tpu.memory_space<vmem>>, vector<1x4x256xf32>
    %277 = vector.shape_cast %276 : vector<1x4x256xf32> to vector<4x256xf32>
    %cst_181 = arith.constant 0.000000e+00 : f32
    %278 = vector.shape_cast %2 : vector<1x256xi1> to vector<1x256xi1>
    %279 = vector.broadcast %278 : vector<1x256xi1> to vector<4x256xi1>
    %280 = vector.broadcast %cst_181 : f32 to vector<4x256xf32>
    %281 = arith.select %279, %277, %280 : vector<4x256xi1>, vector<4x256xf32>
    %c28 = arith.constant 28 : index
    %c0_182 = arith.constant 0 : index
    %c0_183 = arith.constant 0 : index
    %282 = vector.load %arg3[%c28, %c0_182, %c0_183] : memref<49x8x4xf32, #tpu.memory_space<vmem>>, vector<1x8x4xf32>
    %283 = vector.shape_cast %282 : vector<1x8x4xf32> to vector<8x4xf32>
    %cst_184 = arith.constant dense<0.000000e+00> : vector<8x256xf32>
    %284 = tpu.matmul %283, %281, %cst_184 {dimension_numbers = #tpu.dot_dimension_numbers<[1], [0], [0], [1], [0, 0, 1, 1], [], []>} : vector<8x4xf32>, vector<4x256xf32>, vector<8x256xf32> -> vector<8x256xf32>
    %285 = arith.addf %275, %284 : vector<8x256xf32>
    %c0_185 = arith.constant 0 : index
    %c0_186 = arith.constant 0 : index
    %c65 = arith.constant 65 : index
    %286 = vector.load %arg1[%c0_185, %c0_186, %c65] : memref<1x4x358xf32, #tpu.memory_space<vmem>>, vector<1x4x256xf32>
    %287 = vector.shape_cast %286 : vector<1x4x256xf32> to vector<4x256xf32>
    %cst_187 = arith.constant 0.000000e+00 : f32
    %288 = vector.shape_cast %4 : vector<1x256xi1> to vector<1x256xi1>
    %289 = vector.broadcast %288 : vector<1x256xi1> to vector<4x256xi1>
    %290 = vector.broadcast %cst_187 : f32 to vector<4x256xf32>
    %291 = arith.select %289, %287, %290 : vector<4x256xi1>, vector<4x256xf32>
    %c29 = arith.constant 29 : index
    %c0_188 = arith.constant 0 : index
    %c0_189 = arith.constant 0 : index
    %292 = vector.load %arg3[%c29, %c0_188, %c0_189] : memref<49x8x4xf32, #tpu.memory_space<vmem>>, vector<1x8x4xf32>
    %293 = vector.shape_cast %292 : vector<1x8x4xf32> to vector<8x4xf32>
    %cst_190 = arith.constant dense<0.000000e+00> : vector<8x256xf32>
    %294 = tpu.matmul %293, %291, %cst_190 {dimension_numbers = #tpu.dot_dimension_numbers<[1], [0], [0], [1], [0, 0, 1, 1], [], []>} : vector<8x4xf32>, vector<4x256xf32>, vector<8x256xf32> -> vector<8x256xf32>
    %295 = arith.addf %285, %294 : vector<8x256xf32>
    %c0_191 = arith.constant 0 : index
    %c0_192 = arith.constant 0 : index
    %c66 = arith.constant 66 : index
    %296 = vector.load %arg1[%c0_191, %c0_192, %c66] : memref<1x4x358xf32, #tpu.memory_space<vmem>>, vector<1x4x256xf32>
    %297 = vector.shape_cast %296 : vector<1x4x256xf32> to vector<4x256xf32>
    %cst_193 = arith.constant 0.000000e+00 : f32
    %298 = vector.shape_cast %6 : vector<1x256xi1> to vector<1x256xi1>
    %299 = vector.broadcast %298 : vector<1x256xi1> to vector<4x256xi1>
    %300 = vector.broadcast %cst_193 : f32 to vector<4x256xf32>
    %301 = arith.select %299, %297, %300 : vector<4x256xi1>, vector<4x256xf32>
    %c30 = arith.constant 30 : index
    %c0_194 = arith.constant 0 : index
    %c0_195 = arith.constant 0 : index
    %302 = vector.load %arg3[%c30, %c0_194, %c0_195] : memref<49x8x4xf32, #tpu.memory_space<vmem>>, vector<1x8x4xf32>
    %303 = vector.shape_cast %302 : vector<1x8x4xf32> to vector<8x4xf32>
    %cst_196 = arith.constant dense<0.000000e+00> : vector<8x256xf32>
    %304 = tpu.matmul %303, %301, %cst_196 {dimension_numbers = #tpu.dot_dimension_numbers<[1], [0], [0], [1], [0, 0, 1, 1], [], []>} : vector<8x4xf32>, vector<4x256xf32>, vector<8x256xf32> -> vector<8x256xf32>
    %305 = arith.addf %295, %304 : vector<8x256xf32>
    %c0_197 = arith.constant 0 : index
    %c0_198 = arith.constant 0 : index
    %c67 = arith.constant 67 : index
    %306 = vector.load %arg1[%c0_197, %c0_198, %c67] : memref<1x4x358xf32, #tpu.memory_space<vmem>>, vector<1x4x256xf32>
    %307 = vector.shape_cast %306 : vector<1x4x256xf32> to vector<4x256xf32>
    %c31 = arith.constant 31 : index
    %c0_199 = arith.constant 0 : index
    %c0_200 = arith.constant 0 : index
    %308 = vector.load %arg3[%c31, %c0_199, %c0_200] : memref<49x8x4xf32, #tpu.memory_space<vmem>>, vector<1x8x4xf32>
    %309 = vector.shape_cast %308 : vector<1x8x4xf32> to vector<8x4xf32>
    %cst_201 = arith.constant dense<0.000000e+00> : vector<8x256xf32>
    %310 = tpu.matmul %309, %307, %cst_201 {dimension_numbers = #tpu.dot_dimension_numbers<[1], [0], [0], [1], [0, 0, 1, 1], [], []>} : vector<8x4xf32>, vector<4x256xf32>, vector<8x256xf32> -> vector<8x256xf32>
    %311 = arith.addf %305, %310 : vector<8x256xf32>
    %c0_202 = arith.constant 0 : index
    %c0_203 = arith.constant 0 : index
    %c68 = arith.constant 68 : index
    %312 = vector.load %arg1[%c0_202, %c0_203, %c68] : memref<1x4x358xf32, #tpu.memory_space<vmem>>, vector<1x4x256xf32>
    %313 = vector.shape_cast %312 : vector<1x4x256xf32> to vector<4x256xf32>
    %cst_204 = arith.constant 0.000000e+00 : f32
    %314 = vector.shape_cast %8 : vector<1x256xi1> to vector<1x256xi1>
    %315 = vector.broadcast %314 : vector<1x256xi1> to vector<4x256xi1>
    %316 = vector.broadcast %cst_204 : f32 to vector<4x256xf32>
    %317 = arith.select %315, %313, %316 : vector<4x256xi1>, vector<4x256xf32>
    %c32_205 = arith.constant 32 : index
    %c0_206 = arith.constant 0 : index
    %c0_207 = arith.constant 0 : index
    %318 = vector.load %arg3[%c32_205, %c0_206, %c0_207] : memref<49x8x4xf32, #tpu.memory_space<vmem>>, vector<1x8x4xf32>
    %319 = vector.shape_cast %318 : vector<1x8x4xf32> to vector<8x4xf32>
    %cst_208 = arith.constant dense<0.000000e+00> : vector<8x256xf32>
    %320 = tpu.matmul %319, %317, %cst_208 {dimension_numbers = #tpu.dot_dimension_numbers<[1], [0], [0], [1], [0, 0, 1, 1], [], []>} : vector<8x4xf32>, vector<4x256xf32>, vector<8x256xf32> -> vector<8x256xf32>
    %321 = arith.addf %311, %320 : vector<8x256xf32>
    %c0_209 = arith.constant 0 : index
    %c0_210 = arith.constant 0 : index
    %c69 = arith.constant 69 : index
    %322 = vector.load %arg1[%c0_209, %c0_210, %c69] : memref<1x4x358xf32, #tpu.memory_space<vmem>>, vector<1x4x256xf32>
    %323 = vector.shape_cast %322 : vector<1x4x256xf32> to vector<4x256xf32>
    %cst_211 = arith.constant 0.000000e+00 : f32
    %324 = vector.shape_cast %10 : vector<1x256xi1> to vector<1x256xi1>
    %325 = vector.broadcast %324 : vector<1x256xi1> to vector<4x256xi1>
    %326 = vector.broadcast %cst_211 : f32 to vector<4x256xf32>
    %327 = arith.select %325, %323, %326 : vector<4x256xi1>, vector<4x256xf32>
    %c33_212 = arith.constant 33 : index
    %c0_213 = arith.constant 0 : index
    %c0_214 = arith.constant 0 : index
    %328 = vector.load %arg3[%c33_212, %c0_213, %c0_214] : memref<49x8x4xf32, #tpu.memory_space<vmem>>, vector<1x8x4xf32>
    %329 = vector.shape_cast %328 : vector<1x8x4xf32> to vector<8x4xf32>
    %cst_215 = arith.constant dense<0.000000e+00> : vector<8x256xf32>
    %330 = tpu.matmul %329, %327, %cst_215 {dimension_numbers = #tpu.dot_dimension_numbers<[1], [0], [0], [1], [0, 0, 1, 1], [], []>} : vector<8x4xf32>, vector<4x256xf32>, vector<8x256xf32> -> vector<8x256xf32>
    %331 = arith.addf %321, %330 : vector<8x256xf32>
    %c0_216 = arith.constant 0 : index
    %c0_217 = arith.constant 0 : index
    %c70 = arith.constant 70 : index
    %332 = vector.load %arg1[%c0_216, %c0_217, %c70] : memref<1x4x358xf32, #tpu.memory_space<vmem>>, vector<1x4x256xf32>
    %333 = vector.shape_cast %332 : vector<1x4x256xf32> to vector<4x256xf32>
    %cst_218 = arith.constant 0.000000e+00 : f32
    %334 = vector.shape_cast %12 : vector<1x256xi1> to vector<1x256xi1>
    %335 = vector.broadcast %334 : vector<1x256xi1> to vector<4x256xi1>
    %336 = vector.broadcast %cst_218 : f32 to vector<4x256xf32>
    %337 = arith.select %335, %333, %336 : vector<4x256xi1>, vector<4x256xf32>
    %c34_219 = arith.constant 34 : index
    %c0_220 = arith.constant 0 : index
    %c0_221 = arith.constant 0 : index
    %338 = vector.load %arg3[%c34_219, %c0_220, %c0_221] : memref<49x8x4xf32, #tpu.memory_space<vmem>>, vector<1x8x4xf32>
    %339 = vector.shape_cast %338 : vector<1x8x4xf32> to vector<8x4xf32>
    %cst_222 = arith.constant dense<0.000000e+00> : vector<8x256xf32>
    %340 = tpu.matmul %339, %337, %cst_222 {dimension_numbers = #tpu.dot_dimension_numbers<[1], [0], [0], [1], [0, 0, 1, 1], [], []>} : vector<8x4xf32>, vector<4x256xf32>, vector<8x256xf32> -> vector<8x256xf32>
    %341 = arith.addf %331, %340 : vector<8x256xf32>
    %c0_223 = arith.constant 0 : index
    %c0_224 = arith.constant 0 : index
    %c80 = arith.constant 80 : index
    %342 = vector.load %arg1[%c0_223, %c0_224, %c80] : memref<1x4x358xf32, #tpu.memory_space<vmem>>, vector<1x4x256xf32>
    %343 = vector.shape_cast %342 : vector<1x4x256xf32> to vector<4x256xf32>
    %cst_225 = arith.constant 0.000000e+00 : f32
    %344 = vector.shape_cast %2 : vector<1x256xi1> to vector<1x256xi1>
    %345 = vector.broadcast %344 : vector<1x256xi1> to vector<4x256xi1>
    %346 = vector.broadcast %cst_225 : f32 to vector<4x256xf32>
    %347 = arith.select %345, %343, %346 : vector<4x256xi1>, vector<4x256xf32>
    %c35_226 = arith.constant 35 : index
    %c0_227 = arith.constant 0 : index
    %c0_228 = arith.constant 0 : index
    %348 = vector.load %arg3[%c35_226, %c0_227, %c0_228] : memref<49x8x4xf32, #tpu.memory_space<vmem>>, vector<1x8x4xf32>
    %349 = vector.shape_cast %348 : vector<1x8x4xf32> to vector<8x4xf32>
    %cst_229 = arith.constant dense<0.000000e+00> : vector<8x256xf32>
    %350 = tpu.matmul %349, %347, %cst_229 {dimension_numbers = #tpu.dot_dimension_numbers<[1], [0], [0], [1], [0, 0, 1, 1], [], []>} : vector<8x4xf32>, vector<4x256xf32>, vector<8x256xf32> -> vector<8x256xf32>
    %351 = arith.addf %341, %350 : vector<8x256xf32>
    %c0_230 = arith.constant 0 : index
    %c0_231 = arith.constant 0 : index
    %c81 = arith.constant 81 : index
    %352 = vector.load %arg1[%c0_230, %c0_231, %c81] : memref<1x4x358xf32, #tpu.memory_space<vmem>>, vector<1x4x256xf32>
    %353 = vector.shape_cast %352 : vector<1x4x256xf32> to vector<4x256xf32>
    %cst_232 = arith.constant 0.000000e+00 : f32
    %354 = vector.shape_cast %4 : vector<1x256xi1> to vector<1x256xi1>
    %355 = vector.broadcast %354 : vector<1x256xi1> to vector<4x256xi1>
    %356 = vector.broadcast %cst_232 : f32 to vector<4x256xf32>
    %357 = arith.select %355, %353, %356 : vector<4x256xi1>, vector<4x256xf32>
    %c36_233 = arith.constant 36 : index
    %c0_234 = arith.constant 0 : index
    %c0_235 = arith.constant 0 : index
    %358 = vector.load %arg3[%c36_233, %c0_234, %c0_235] : memref<49x8x4xf32, #tpu.memory_space<vmem>>, vector<1x8x4xf32>
    %359 = vector.shape_cast %358 : vector<1x8x4xf32> to vector<8x4xf32>
    %cst_236 = arith.constant dense<0.000000e+00> : vector<8x256xf32>
    %360 = tpu.matmul %359, %357, %cst_236 {dimension_numbers = #tpu.dot_dimension_numbers<[1], [0], [0], [1], [0, 0, 1, 1], [], []>} : vector<8x4xf32>, vector<4x256xf32>, vector<8x256xf32> -> vector<8x256xf32>
    %361 = arith.addf %351, %360 : vector<8x256xf32>
    %c0_237 = arith.constant 0 : index
    %c0_238 = arith.constant 0 : index
    %c82 = arith.constant 82 : index
    %362 = vector.load %arg1[%c0_237, %c0_238, %c82] : memref<1x4x358xf32, #tpu.memory_space<vmem>>, vector<1x4x256xf32>
    %363 = vector.shape_cast %362 : vector<1x4x256xf32> to vector<4x256xf32>
    %cst_239 = arith.constant 0.000000e+00 : f32
    %364 = vector.shape_cast %6 : vector<1x256xi1> to vector<1x256xi1>
    %365 = vector.broadcast %364 : vector<1x256xi1> to vector<4x256xi1>
    %366 = vector.broadcast %cst_239 : f32 to vector<4x256xf32>
    %367 = arith.select %365, %363, %366 : vector<4x256xi1>, vector<4x256xf32>
    %c37_240 = arith.constant 37 : index
    %c0_241 = arith.constant 0 : index
    %c0_242 = arith.constant 0 : index
    %368 = vector.load %arg3[%c37_240, %c0_241, %c0_242] : memref<49x8x4xf32, #tpu.memory_space<vmem>>, vector<1x8x4xf32>
    %369 = vector.shape_cast %368 : vector<1x8x4xf32> to vector<8x4xf32>
    %cst_243 = arith.constant dense<0.000000e+00> : vector<8x256xf32>
    %370 = tpu.matmul %369, %367, %cst_243 {dimension_numbers = #tpu.dot_dimension_numbers<[1], [0], [0], [1], [0, 0, 1, 1], [], []>} : vector<8x4xf32>, vector<4x256xf32>, vector<8x256xf32> -> vector<8x256xf32>
    %371 = arith.addf %361, %370 : vector<8x256xf32>
    %c0_244 = arith.constant 0 : index
    %c0_245 = arith.constant 0 : index
    %c83 = arith.constant 83 : index
    %372 = vector.load %arg1[%c0_244, %c0_245, %c83] : memref<1x4x358xf32, #tpu.memory_space<vmem>>, vector<1x4x256xf32>
    %373 = vector.shape_cast %372 : vector<1x4x256xf32> to vector<4x256xf32>
    %c38_246 = arith.constant 38 : index
    %c0_247 = arith.constant 0 : index
    %c0_248 = arith.constant 0 : index
    %374 = vector.load %arg3[%c38_246, %c0_247, %c0_248] : memref<49x8x4xf32, #tpu.memory_space<vmem>>, vector<1x8x4xf32>
    %375 = vector.shape_cast %374 : vector<1x8x4xf32> to vector<8x4xf32>
    %cst_249 = arith.constant dense<0.000000e+00> : vector<8x256xf32>
    %376 = tpu.matmul %375, %373, %cst_249 {dimension_numbers = #tpu.dot_dimension_numbers<[1], [0], [0], [1], [0, 0, 1, 1], [], []>} : vector<8x4xf32>, vector<4x256xf32>, vector<8x256xf32> -> vector<8x256xf32>
    %377 = arith.addf %371, %376 : vector<8x256xf32>
    %c0_250 = arith.constant 0 : index
    %c0_251 = arith.constant 0 : index
    %c84 = arith.constant 84 : index
    %378 = vector.load %arg1[%c0_250, %c0_251, %c84] : memref<1x4x358xf32, #tpu.memory_space<vmem>>, vector<1x4x256xf32>
    %379 = vector.shape_cast %378 : vector<1x4x256xf32> to vector<4x256xf32>
    %cst_252 = arith.constant 0.000000e+00 : f32
    %380 = vector.shape_cast %8 : vector<1x256xi1> to vector<1x256xi1>
    %381 = vector.broadcast %380 : vector<1x256xi1> to vector<4x256xi1>
    %382 = vector.broadcast %cst_252 : f32 to vector<4x256xf32>
    %383 = arith.select %381, %379, %382 : vector<4x256xi1>, vector<4x256xf32>
    %c39 = arith.constant 39 : index
    %c0_253 = arith.constant 0 : index
    %c0_254 = arith.constant 0 : index
    %384 = vector.load %arg3[%c39, %c0_253, %c0_254] : memref<49x8x4xf32, #tpu.memory_space<vmem>>, vector<1x8x4xf32>
    %385 = vector.shape_cast %384 : vector<1x8x4xf32> to vector<8x4xf32>
    %cst_255 = arith.constant dense<0.000000e+00> : vector<8x256xf32>
    %386 = tpu.matmul %385, %383, %cst_255 {dimension_numbers = #tpu.dot_dimension_numbers<[1], [0], [0], [1], [0, 0, 1, 1], [], []>} : vector<8x4xf32>, vector<4x256xf32>, vector<8x256xf32> -> vector<8x256xf32>
    %387 = arith.addf %377, %386 : vector<8x256xf32>
    %c0_256 = arith.constant 0 : index
    %c0_257 = arith.constant 0 : index
    %c85 = arith.constant 85 : index
    %388 = vector.load %arg1[%c0_256, %c0_257, %c85] : memref<1x4x358xf32, #tpu.memory_space<vmem>>, vector<1x4x256xf32>
    %389 = vector.shape_cast %388 : vector<1x4x256xf32> to vector<4x256xf32>
    %cst_258 = arith.constant 0.000000e+00 : f32
    %390 = vector.shape_cast %10 : vector<1x256xi1> to vector<1x256xi1>
    %391 = vector.broadcast %390 : vector<1x256xi1> to vector<4x256xi1>
    %392 = vector.broadcast %cst_258 : f32 to vector<4x256xf32>
    %393 = arith.select %391, %389, %392 : vector<4x256xi1>, vector<4x256xf32>
    %c40 = arith.constant 40 : index
    %c0_259 = arith.constant 0 : index
    %c0_260 = arith.constant 0 : index
    %394 = vector.load %arg3[%c40, %c0_259, %c0_260] : memref<49x8x4xf32, #tpu.memory_space<vmem>>, vector<1x8x4xf32>
    %395 = vector.shape_cast %394 : vector<1x8x4xf32> to vector<8x4xf32>
    %cst_261 = arith.constant dense<0.000000e+00> : vector<8x256xf32>
    %396 = tpu.matmul %395, %393, %cst_261 {dimension_numbers = #tpu.dot_dimension_numbers<[1], [0], [0], [1], [0, 0, 1, 1], [], []>} : vector<8x4xf32>, vector<4x256xf32>, vector<8x256xf32> -> vector<8x256xf32>
    %397 = arith.addf %387, %396 : vector<8x256xf32>
    %c0_262 = arith.constant 0 : index
    %c0_263 = arith.constant 0 : index
    %c86 = arith.constant 86 : index
    %398 = vector.load %arg1[%c0_262, %c0_263, %c86] : memref<1x4x358xf32, #tpu.memory_space<vmem>>, vector<1x4x256xf32>
    %399 = vector.shape_cast %398 : vector<1x4x256xf32> to vector<4x256xf32>
    %cst_264 = arith.constant 0.000000e+00 : f32
    %400 = vector.shape_cast %12 : vector<1x256xi1> to vector<1x256xi1>
    %401 = vector.broadcast %400 : vector<1x256xi1> to vector<4x256xi1>
    %402 = vector.broadcast %cst_264 : f32 to vector<4x256xf32>
    %403 = arith.select %401, %399, %402 : vector<4x256xi1>, vector<4x256xf32>
    %c41 = arith.constant 41 : index
    %c0_265 = arith.constant 0 : index
    %c0_266 = arith.constant 0 : index
    %404 = vector.load %arg3[%c41, %c0_265, %c0_266] : memref<49x8x4xf32, #tpu.memory_space<vmem>>, vector<1x8x4xf32>
    %405 = vector.shape_cast %404 : vector<1x8x4xf32> to vector<8x4xf32>
    %cst_267 = arith.constant dense<0.000000e+00> : vector<8x256xf32>
    %406 = tpu.matmul %405, %403, %cst_267 {dimension_numbers = #tpu.dot_dimension_numbers<[1], [0], [0], [1], [0, 0, 1, 1], [], []>} : vector<8x4xf32>, vector<4x256xf32>, vector<8x256xf32> -> vector<8x256xf32>
    %407 = arith.addf %397, %406 : vector<8x256xf32>
    %c0_268 = arith.constant 0 : index
    %c0_269 = arith.constant 0 : index
    %c96 = arith.constant 96 : index
    %408 = vector.load %arg1[%c0_268, %c0_269, %c96] : memref<1x4x358xf32, #tpu.memory_space<vmem>>, vector<1x4x256xf32>
    %409 = vector.shape_cast %408 : vector<1x4x256xf32> to vector<4x256xf32>
    %cst_270 = arith.constant 0.000000e+00 : f32
    %410 = vector.shape_cast %2 : vector<1x256xi1> to vector<1x256xi1>
    %411 = vector.broadcast %410 : vector<1x256xi1> to vector<4x256xi1>
    %412 = vector.broadcast %cst_270 : f32 to vector<4x256xf32>
    %413 = arith.select %411, %409, %412 : vector<4x256xi1>, vector<4x256xf32>
    %c42 = arith.constant 42 : index
    %c0_271 = arith.constant 0 : index
    %c0_272 = arith.constant 0 : index
    %414 = vector.load %arg3[%c42, %c0_271, %c0_272] : memref<49x8x4xf32, #tpu.memory_space<vmem>>, vector<1x8x4xf32>
    %415 = vector.shape_cast %414 : vector<1x8x4xf32> to vector<8x4xf32>
    %cst_273 = arith.constant dense<0.000000e+00> : vector<8x256xf32>
    %416 = tpu.matmul %415, %413, %cst_273 {dimension_numbers = #tpu.dot_dimension_numbers<[1], [0], [0], [1], [0, 0, 1, 1], [], []>} : vector<8x4xf32>, vector<4x256xf32>, vector<8x256xf32> -> vector<8x256xf32>
    %417 = arith.addf %407, %416 : vector<8x256xf32>
    %c0_274 = arith.constant 0 : index
    %c0_275 = arith.constant 0 : index
    %c97 = arith.constant 97 : index
    %418 = vector.load %arg1[%c0_274, %c0_275, %c97] : memref<1x4x358xf32, #tpu.memory_space<vmem>>, vector<1x4x256xf32>
    %419 = vector.shape_cast %418 : vector<1x4x256xf32> to vector<4x256xf32>
    %cst_276 = arith.constant 0.000000e+00 : f32
    %420 = vector.shape_cast %4 : vector<1x256xi1> to vector<1x256xi1>
    %421 = vector.broadcast %420 : vector<1x256xi1> to vector<4x256xi1>
    %422 = vector.broadcast %cst_276 : f32 to vector<4x256xf32>
    %423 = arith.select %421, %419, %422 : vector<4x256xi1>, vector<4x256xf32>
    %c43 = arith.constant 43 : index
    %c0_277 = arith.constant 0 : index
    %c0_278 = arith.constant 0 : index
    %424 = vector.load %arg3[%c43, %c0_277, %c0_278] : memref<49x8x4xf32, #tpu.memory_space<vmem>>, vector<1x8x4xf32>
    %425 = vector.shape_cast %424 : vector<1x8x4xf32> to vector<8x4xf32>
    %cst_279 = arith.constant dense<0.000000e+00> : vector<8x256xf32>
    %426 = tpu.matmul %425, %423, %cst_279 {dimension_numbers = #tpu.dot_dimension_numbers<[1], [0], [0], [1], [0, 0, 1, 1], [], []>} : vector<8x4xf32>, vector<4x256xf32>, vector<8x256xf32> -> vector<8x256xf32>
    %427 = arith.addf %417, %426 : vector<8x256xf32>
    %c0_280 = arith.constant 0 : index
    %c0_281 = arith.constant 0 : index
    %c98 = arith.constant 98 : index
    %428 = vector.load %arg1[%c0_280, %c0_281, %c98] : memref<1x4x358xf32, #tpu.memory_space<vmem>>, vector<1x4x256xf32>
    %429 = vector.shape_cast %428 : vector<1x4x256xf32> to vector<4x256xf32>
    %cst_282 = arith.constant 0.000000e+00 : f32
    %430 = vector.shape_cast %6 : vector<1x256xi1> to vector<1x256xi1>
    %431 = vector.broadcast %430 : vector<1x256xi1> to vector<4x256xi1>
    %432 = vector.broadcast %cst_282 : f32 to vector<4x256xf32>
    %433 = arith.select %431, %429, %432 : vector<4x256xi1>, vector<4x256xf32>
    %c44 = arith.constant 44 : index
    %c0_283 = arith.constant 0 : index
    %c0_284 = arith.constant 0 : index
    %434 = vector.load %arg3[%c44, %c0_283, %c0_284] : memref<49x8x4xf32, #tpu.memory_space<vmem>>, vector<1x8x4xf32>
    %435 = vector.shape_cast %434 : vector<1x8x4xf32> to vector<8x4xf32>
    %cst_285 = arith.constant dense<0.000000e+00> : vector<8x256xf32>
    %436 = tpu.matmul %435, %433, %cst_285 {dimension_numbers = #tpu.dot_dimension_numbers<[1], [0], [0], [1], [0, 0, 1, 1], [], []>} : vector<8x4xf32>, vector<4x256xf32>, vector<8x256xf32> -> vector<8x256xf32>
    %437 = arith.addf %427, %436 : vector<8x256xf32>
    %c0_286 = arith.constant 0 : index
    %c0_287 = arith.constant 0 : index
    %c99 = arith.constant 99 : index
    %438 = vector.load %arg1[%c0_286, %c0_287, %c99] : memref<1x4x358xf32, #tpu.memory_space<vmem>>, vector<1x4x256xf32>
    %439 = vector.shape_cast %438 : vector<1x4x256xf32> to vector<4x256xf32>
    %c45 = arith.constant 45 : index
    %c0_288 = arith.constant 0 : index
    %c0_289 = arith.constant 0 : index
    %440 = vector.load %arg3[%c45, %c0_288, %c0_289] : memref<49x8x4xf32, #tpu.memory_space<vmem>>, vector<1x8x4xf32>
    %441 = vector.shape_cast %440 : vector<1x8x4xf32> to vector<8x4xf32>
    %cst_290 = arith.constant dense<0.000000e+00> : vector<8x256xf32>
    %442 = tpu.matmul %441, %439, %cst_290 {dimension_numbers = #tpu.dot_dimension_numbers<[1], [0], [0], [1], [0, 0, 1, 1], [], []>} : vector<8x4xf32>, vector<4x256xf32>, vector<8x256xf32> -> vector<8x256xf32>
    %443 = arith.addf %437, %442 : vector<8x256xf32>
    %c0_291 = arith.constant 0 : index
    %c0_292 = arith.constant 0 : index
    %c100 = arith.constant 100 : index
    %444 = vector.load %arg1[%c0_291, %c0_292, %c100] : memref<1x4x358xf32, #tpu.memory_space<vmem>>, vector<1x4x256xf32>
    %445 = vector.shape_cast %444 : vector<1x4x256xf32> to vector<4x256xf32>
    %cst_293 = arith.constant 0.000000e+00 : f32
    %446 = vector.shape_cast %8 : vector<1x256xi1> to vector<1x256xi1>
    %447 = vector.broadcast %446 : vector<1x256xi1> to vector<4x256xi1>
    %448 = vector.broadcast %cst_293 : f32 to vector<4x256xf32>
    %449 = arith.select %447, %445, %448 : vector<4x256xi1>, vector<4x256xf32>
    %c46 = arith.constant 46 : index
    %c0_294 = arith.constant 0 : index
    %c0_295 = arith.constant 0 : index
    %450 = vector.load %arg3[%c46, %c0_294, %c0_295] : memref<49x8x4xf32, #tpu.memory_space<vmem>>, vector<1x8x4xf32>
    %451 = vector.shape_cast %450 : vector<1x8x4xf32> to vector<8x4xf32>
    %cst_296 = arith.constant dense<0.000000e+00> : vector<8x256xf32>
    %452 = tpu.matmul %451, %449, %cst_296 {dimension_numbers = #tpu.dot_dimension_numbers<[1], [0], [0], [1], [0, 0, 1, 1], [], []>} : vector<8x4xf32>, vector<4x256xf32>, vector<8x256xf32> -> vector<8x256xf32>
    %453 = arith.addf %443, %452 : vector<8x256xf32>
    %c0_297 = arith.constant 0 : index
    %c0_298 = arith.constant 0 : index
    %c101 = arith.constant 101 : index
    %454 = vector.load %arg1[%c0_297, %c0_298, %c101] : memref<1x4x358xf32, #tpu.memory_space<vmem>>, vector<1x4x256xf32>
    %455 = vector.shape_cast %454 : vector<1x4x256xf32> to vector<4x256xf32>
    %cst_299 = arith.constant 0.000000e+00 : f32
    %456 = vector.shape_cast %10 : vector<1x256xi1> to vector<1x256xi1>
    %457 = vector.broadcast %456 : vector<1x256xi1> to vector<4x256xi1>
    %458 = vector.broadcast %cst_299 : f32 to vector<4x256xf32>
    %459 = arith.select %457, %455, %458 : vector<4x256xi1>, vector<4x256xf32>
    %c47 = arith.constant 47 : index
    %c0_300 = arith.constant 0 : index
    %c0_301 = arith.constant 0 : index
    %460 = vector.load %arg3[%c47, %c0_300, %c0_301] : memref<49x8x4xf32, #tpu.memory_space<vmem>>, vector<1x8x4xf32>
    %461 = vector.shape_cast %460 : vector<1x8x4xf32> to vector<8x4xf32>
    %cst_302 = arith.constant dense<0.000000e+00> : vector<8x256xf32>
    %462 = tpu.matmul %461, %459, %cst_302 {dimension_numbers = #tpu.dot_dimension_numbers<[1], [0], [0], [1], [0, 0, 1, 1], [], []>} : vector<8x4xf32>, vector<4x256xf32>, vector<8x256xf32> -> vector<8x256xf32>
    %463 = arith.addf %453, %462 : vector<8x256xf32>
    %c0_303 = arith.constant 0 : index
    %c0_304 = arith.constant 0 : index
    %c102 = arith.constant 102 : index
    %464 = vector.load %arg1[%c0_303, %c0_304, %c102] : memref<1x4x358xf32, #tpu.memory_space<vmem>>, vector<1x4x256xf32>
    %465 = vector.shape_cast %464 : vector<1x4x256xf32> to vector<4x256xf32>
    %cst_305 = arith.constant 0.000000e+00 : f32
    %466 = vector.shape_cast %12 : vector<1x256xi1> to vector<1x256xi1>
    %467 = vector.broadcast %466 : vector<1x256xi1> to vector<4x256xi1>
    %468 = vector.broadcast %cst_305 : f32 to vector<4x256xf32>
    %469 = arith.select %467, %465, %468 : vector<4x256xi1>, vector<4x256xf32>
    %c48_306 = arith.constant 48 : index
    %c0_307 = arith.constant 0 : index
    %c0_308 = arith.constant 0 : index
    %470 = vector.load %arg3[%c48_306, %c0_307, %c0_308] : memref<49x8x4xf32, #tpu.memory_space<vmem>>, vector<1x8x4xf32>
    %471 = vector.shape_cast %470 : vector<1x8x4xf32> to vector<8x4xf32>
    %cst_309 = arith.constant dense<0.000000e+00> : vector<8x256xf32>
    %472 = tpu.matmul %471, %469, %cst_309 {dimension_numbers = #tpu.dot_dimension_numbers<[1], [0], [0], [1], [0, 0, 1, 1], [], []>} : vector<8x4xf32>, vector<4x256xf32>, vector<8x256xf32> -> vector<8x256xf32>
    %473 = arith.addf %463, %472 : vector<8x256xf32>
    %c0_310 = arith.constant 0 : index
    %c0_311 = arith.constant 0 : index
    %474 = vector.load %arg4[%c0_310, %c0_311] : memref<8x1xf32, #tpu.memory_space<vmem>>, vector<8x1xf32>
    %475 = vector.broadcast %474 : vector<8x1xf32> to vector<8x256xf32>
    %476 = arith.addf %473, %475 : vector<8x256xf32>
    %c0_312 = arith.constant 0 : index
    %c0_313 = arith.constant 0 : index
    %c0_314 = arith.constant 0 : index
    %477 = vector.load %arg5[%c0_312, %c0_313, %c0_314] : memref<1x8x256xf32, #tpu.memory_space<vmem>>, vector<1x8x256xf32>
    %478 = vector.shape_cast %477 : vector<1x8x256xf32> to vector<8x256xf32>
    %479 = vector.shape_cast %476 : vector<8x256xf32> to vector<1x8x256xf32>
    tpu.vector_store %arg5[%c0_312, %c0_313, %c0_314], %479 {strides = array<i32>} : memref<1x8x256xf32, #tpu.memory_space<vmem>>, vector<1x8x256xf32>,
    return
  }
  func.func @transform_0(%arg0: i32) -> (i32, i32, i32) {
    %c0_i32 = arith.constant 0 : i32
    %c0_i32_0 = arith.constant 0 : i32
    %c0_i32_1 = arith.constant 0 : i32
    return %arg0, %c0_i32, %c0_i32_0 : i32, i32, i32
  }
  func.func @transform_1(%arg0: i32) -> (i32, i32) {
    %c0_i32 = arith.constant 0 : i32
    %c0_i32_0 = arith.constant 0 : i32
    %c0_i32_1 = arith.constant 0 : i32
    return %c0_i32, %c0_i32_0 : i32, i32
  }
  func.func @transform_2(%arg0: i32) -> (i32, i32, i32) {
    %c0_i32 = arith.constant 0 : i32
    %c0_i32_0 = arith.constant 0 : i32
    %c0_i32_1 = arith.constant 0 : i32
    %c0_i32_2 = arith.constant 0 : i32
    return %c0_i32, %c0_i32_0, %c0_i32_1 : i32, i32, i32
  }
  func.func @transform_3(%arg0: i32) -> (i32, i32) {
    %c0_i32 = arith.constant 0 : i32
    %c0_i32_0 = arith.constant 0 : i32
    %c0_i32_1 = arith.constant 0 : i32
    return %c0_i32, %c0_i32_0 : i32, i32
  }
  func.func @transform_4(%arg0: i32) -> (i32, i32, i32) {
    %c0_i32 = arith.constant 0 : i32
    %c0_i32_0 = arith.constant 0 : i32
    %c0_i32_1 = arith.constant 0 : i32
    return %arg0, %c0_i32, %c0_i32_0 : i32, i32, i32
  }
}

</mosaic_0001>

<llo_original>
// kernel: tpu_custom_call.1
$region0: #{tpu_custom_call.1}
  #allocation0 [shape = 'u32[]', space=smem, size = 0x4, offset = 0x4, fixed_abs, tag = 'smem constant byte address 0x4 - core index']
  #allocation1 [shape = 'u32[72,128]{1,0:T(1,128)}', space=vmem, size = 0x9000, scoped, tag = 'internal scratch']
  %s0 = inlined_call_operand.vmem [shape: f32[2,4,358], index: 0, kind: input, shape index: {}]
  %s1 = inlined_call_operand.vmem [shape: s32[1,256], index: 1, kind: input, shape index: {}]
  %s2 = inlined_call_operand.vmem [shape: f32[49,8,4], index: 2, kind: input, shape index: {}]
  %s3 = inlined_call_operand.vmem [shape: f32[8,1], index: 3, kind: input, shape index: {}]
  %s4 = inlined_call_operand.hbm [shape: f32[2,8,256], index: 4, kind: output, shape index: {}]
  %s5 = sld [smem:[#allocation0]]
  $region49: #{tpu_custom_call.1} parent=0
    _
  %s7 = ssub.s32 1, %s5
  %s8 = scalar_select 0, %s7, %s5
  $region1: #{tpu_custom_call.1} parent=0
    #allocation2 [shape = 'u8[16384]{0}', space=vmem, size = 0x4000, scoped, tag = 'output window, operand 0']
    #allocation3 [shape = 's32[2]{0}', space=sflag, size = 0x8, scoped, tag = 'scoped memory for tpu_custom_call.1']
    %9 = vsyncpa [#allocation3], 0
    %s10 = scalar_lea.sflag [#allocation3], 1
    %11 = vsyncpa %s10, 0
    loop: start=0, step=1, limit=4
    $region2: #{tpu_custom_call.1} parent=1 // loop_pre_header
      _
    $region3: #{tpu_custom_call.1} parent=1 // loop_header
      %s13 = sphi 0, %s17
      %p14 = scmp.ge.s32.totalorder %s13, 4
      %s23 = sphi 0, %s25
      %s26 = sphi 0, %s23
      %s27 = sphi 0, %s26
      %s43 = sphi 0, %s27
      %s47 = sphi 0, %s47
      %s49 = sphi 0, %s47
      %s50 = sphi 0, %s49
      %s64 = sphi 0, %s50
      %s68 = sphi 0, %s68
      %s70 = sphi 0, %s68
      %s71 = sphi 0, %s70
      %s85 = sphi 0, %s71
      %s89 = sphi 0, %s89
      %s91 = sphi 0, %s89
      %s92 = sphi 0, %s91
      %s106 = sphi 0, %s92
      %s112 = sphi 0, %s114
      %s115 = sphi 0, %s112
      %s116 = sphi 0, %s115
      %s132 = sphi 0, %s116
    $region4: #{tpu_custom_call.1} parent=1 // loop_header_branch
      %16 = sbr.rel (%p14) target = $region8
    $region5: #{tpu_custom_call.1} parent=1 // loop_body
      %s18 = ssub.s32 %s13, 1
      %s19 = ssub.s32 %s13, 2
      %s20 = sadd.s32 %s13, 1
      %s21 = ssub.s32 %s13, %s20
      %p22 = scmp.eq.s32.totalorder %s21, 0
      %s24 = sadd.s32 %s23, 1
      %s25 = scalar_select %p22, %s23, %s24
      %p28 = pneg %p22
      %p29 = scmp.eq.s32.totalorder %s13, 1
      %p30 = por %p28, %p29
      %p31 = scmp.ne.s32.totalorder %s23, %s26
      %p32 = scmp.eq.s32.totalorder %s13, 0
      %p33 = por %p31, %p32
      %p34 = scmp.ne.s32.totalorder %s23, %s26
      %p35 = scmp.eq.s32.totalorder %s18, 1
      %p36 = por %p34, %p35
      %p37 = scmp.ne.s32.totalorder %s26, %s27
      %p38 = scmp.eq.s32.totalorder %s18, 0
      %p39 = por %p37, %p38
      %p40 = scmp.ne.s32.totalorder %s26, %s27
      %p41 = scmp.eq.s32.totalorder %s19, 1
      %p42 = por %p40, %p41
      %p44 = scmp.ne.s32.totalorder %s27, %s43
      %p45 = scmp.eq.s32.totalorder %s19, 0
      %p46 = por %p44, %p45
      %s48 = sadd.s32 %s47, 1
      %p51 = scmp.eq.s32.totalorder %s13, 1
      %p52 = scmp.ne.s32.totalorder %s47, %s49
      %p53 = scmp.eq.s32.totalorder %s13, 0
      %p54 = por %p52, %p53
      %p55 = scmp.ne.s32.totalorder %s47, %s49
      %p56 = scmp.eq.s32.totalorder %s18, 1
      %p57 = por %p55, %p56
      %p58 = scmp.ne.s32.totalorder %s49, %s50
      %p59 = scmp.eq.s32.totalorder %s18, 0
      %p60 = por %p58, %p59
      %p61 = scmp.ne.s32.totalorder %s49, %s50
      %p62 = scmp.eq.s32.totalorder %s19, 1
      %p63 = por %p61, %p62
      %p65 = scmp.ne.s32.totalorder %s50, %s64
      %p66 = scmp.eq.s32.totalorder %s19, 0
      %p67 = por %p65, %p66
      %s69 = sadd.s32 %s68, 1
      %p72 = scmp.eq.s32.totalorder %s13, 1
      %p73 = scmp.ne.s32.totalorder %s68, %s70
      %p74 = scmp.eq.s32.totalorder %s13, 0
      %p75 = por %p73, %p74
      %p76 = scmp.ne.s32.totalorder %s68, %s70
      %p77 = scmp.eq.s32.totalorder %s18, 1
      %p78 = por %p76, %p77
      %p79 = scmp.ne.s32.totalorder %s70, %s71
      %p80 = scmp.eq.s32.totalorder %s18, 0
      %p81 = por %p79, %p80
      %p82 = scmp.ne.s32.totalorder %s70, %s71
      %p83 = scmp.eq.s32.totalorder %s19, 1
      %p84 = por %p82, %p83
      %p86 = scmp.ne.s32.totalorder %s71, %s85
      %p87 = scmp.eq.s32.totalorder %s19, 0
      %p88 = por %p86, %p87
      %s90 = sadd.s32 %s89, 1
      %p93 = scmp.eq.s32.totalorder %s13, 1
      %p94 = scmp.ne.s32.totalorder %s89, %s91
      %p95 = scmp.eq.s32.totalorder %s13, 0
      %p96 = por %p94, %p95
      %p97 = scmp.ne.s32.totalorder %s89, %s91
      %p98 = scmp.eq.s32.totalorder %s18, 1
      %p99 = por %p97, %p98
      %p100 = scmp.ne.s32.totalorder %s91, %s92
      %p101 = scmp.eq.s32.totalorder %s18, 0
      %p102 = por %p100, %p101
      %p103 = scmp.ne.s32.totalorder %s91, %s92
      %p104 = scmp.eq.s32.totalorder %s19, 1
      %p105 = por %p103, %p104
      %p107 = scmp.ne.s32.totalorder %s92, %s106
      %p108 = scmp.eq.s32.totalorder %s19, 0
      %p109 = por %p107, %p108
      %s110 = ssub.s32 %s13, %s20
      %p111 = scmp.eq.s32.totalorder %s110, 0
      %s113 = sadd.s32 %s112, 1
      %s114 = scalar_select %p111, %s112, %s113
      %p117 = pneg %p111
      %p118 = scmp.eq.s32.totalorder %s13, 1
      %p119 = por %p117, %p118
      %p120 = scmp.ne.s32.totalorder %s112, %s115
      %p121 = scmp.eq.s32.totalorder %s13, 0
      %p122 = por %p120, %p121
      %p123 = scmp.ne.s32.totalorder %s112, %s115
      %p124 = scmp.eq.s32.totalorder %s18, 1
      %p125 = por %p123, %p124
      %p126 = scmp.ne.s32.totalorder %s115, %s116
      %p127 = scmp.eq.s32.totalorder %s18, 0
      %p128 = por %p126, %p127
      %p129 = scmp.ne.s32.totalorder %s115, %s116
      %p130 = scmp.eq.s32.totalorder %s19, 1
      %p131 = por %p129, %p130
      %p133 = scmp.ne.s32.totalorder %s116, %s132
      %p134 = scmp.eq.s32.totalorder %s19, 0
      %p135 = por %p133, %p134
      %p136 = scmp.le.s32.totalorder 1, %s13
      %p137 = scmp.lt.s32.totalorder %s13, 3
      %p138 = pnand %p136, %p137
      %p139 = pneg %p138
      // Predicated region
      $region9: #{tpu_custom_call.1} parent=5 // pred_check
        _
      $region10: #{tpu_custom_call.1} parent=5 // pred_check_branch
        %141 = sbr.rel (%p138) target = $region12
      $region11: #{tpu_custom_call.1} parent=5 // pred_region
        %s142 = ssub.s32 %s13, 1
        // Predicated region
        $region13: #{tpu_custom_call.1} parent=11 // pred_check
          %p143 = pneg %p60
        $region14: #{tpu_custom_call.1} parent=11 // pred_check_branch
          %145 = sbr.rel (%p143) target = $region16
        $region15: #{tpu_custom_call.1} parent=11 // pred_region
          _
        $region16: #{tpu_custom_call.1} parent=11 // pred_fallthru
          _
        // Predicated region
        $region17: #{tpu_custom_call.1} parent=11 // pred_check
          %p146 = pneg %p81
        $region18: #{tpu_custom_call.1} parent=11 // pred_check_branch
          %148 = sbr.rel (%p146) target = $region20
        $region19: #{tpu_custom_call.1} parent=11 // pred_region
          _
        $region20: #{tpu_custom_call.1} parent=11 // pred_fallthru
          _
        // Predicated region
        $region21: #{tpu_custom_call.1} parent=11 // pred_check
          %p149 = pneg %p102
        $region22: #{tpu_custom_call.1} parent=11 // pred_check_branch
          %151 = sbr.rel (%p149) target = $region24
        $region23: #{tpu_custom_call.1} parent=11 // pred_region
          _
        $region24: #{tpu_custom_call.1} parent=11 // pred_fallthru
          _
      $region12: #{tpu_custom_call.1} parent=5 // pred_fallthru
        _
      %p152 = scmp.lt.s32.totalorder %s13, 2
      // Predicated region
      $region25: #{tpu_custom_call.1} parent=5 // pred_check
        %p153 = pneg %p152
      $region26: #{tpu_custom_call.1} parent=5 // pred_check_branch
        %155 = sbr.rel (%p153) target = $region28
      $region27: #{tpu_custom_call.1} parent=5 // pred_region
        // Predicated region
        $region29: #{tpu_custom_call.1} parent=27 // pred_check
          %p156 = pneg %p33
        $region30: #{tpu_custom_call.1} parent=27 // pred_check_branch
          %158 = sbr.rel (%p156) target = $region32
        $region31: #{tpu_custom_call.1} parent=27 // pred_region
          %p159 = scmp.lt.s32.totalorder %s13, 1
          %s160 = scalar_select %p159, %s13, 1
          %s161 = smul.addr %s160, 3
          %s162 = smul.addr %s161, 4
          %s163 = scalar_lea.vmem %s0, %s162
        $region32: #{tpu_custom_call.1} parent=27 // pred_fallthru
          _
      $region28: #{tpu_custom_call.1} parent=5 // pred_fallthru
        _
      %p164 = scmp.le.s32.totalorder 1, %s13
      %p165 = scmp.lt.s32.totalorder %s13, 3
      %p166 = pnand %p164, %p165
      %p167 = pneg %p166
      // Predicated region
      $region33: #{tpu_custom_call.1} parent=5 // pred_check
        _
      $region34: #{tpu_custom_call.1} parent=5 // pred_check_branch
        %169 = sbr.rel (%p166) target = $region36
      $region35: #{tpu_custom_call.1} parent=5 // pred_region
        %s170 = ssub.s32 %s13, 1
        %p171 = scmp.lt.s32.totalorder %s18, 1
        %s172 = scalar_select %p171, %s18, 1
        %s173 = smul.addr %s172, 3
        %s174 = smul.addr %s173, 4
        %s175 = scalar_lea.vmem %s0, %s174
        %p176 = pneg %p39
        %p177 = pneg %p36
        %p178 = pneg %p60
        %p179 = pneg %p57
        %p180 = pneg %p81
        %p181 = pneg %p78
        %p182 = pneg %p102
        %p183 = pneg %p99
        %p184 = pneg %p128
        %p185 = pneg %p125
        %s186 = sand.u32 %s115, 1
        %s187 = scalar_lea.sflag [#allocation3], %s186
        %s188 = sand.u32 %s115, 1
        %s189 = smul.addr %s188, 16
        %s190 = scalar_lea.vmem [#allocation2], %s189
        %p191 = scmp.lt.s32.totalorder %s18, 1
        %s192 = scalar_select %p191, %s18, 1
        %s193 = smul.addr %s192, 3
        %s194 = smul.addr %s193, 4
        %s195 = scalar_lea.vmem %s0, %s194
        %v196 = vld [vmem:[%s1] sm:$0x3]
        %vm197 = vcmp.ge.s32.totalorder %v196, 3
        %vm198 = vcmp.ge.s32.totalorder %v196, 2
        %vm199 = vcmp.ge.s32.totalorder %v196, 1
        %vm200 = vcmp.lt.s32.totalorder %v196, 15
        %vm201 = vcmp.lt.s32.totalorder %v196, 14
        %vm202 = vcmp.lt.s32.totalorder %v196, 13
        %v203 = vld [vmem:[%s195] sm:$0xff]
        %v204 = vsel %vm197, 1, 0
        %v205 = vperm.slane %v204, 0
        %v206 = vperm.slane %v204, 1
        %vm207 = vcmp.eq.s32.totalorder %v205, 1
        %vm208 = vcmp.eq.s32.totalorder %v206, 1
        %210 = vst [vmem:[#allocation1] ss:$2 sm:$0xff] %v203
        %v211 = vld.sshfl [vmem:[#allocation1] sm:$0xff pattern:$0x75316420]
        %v212 = vld.sshfl [vmem:[#allocation1 + $0x8] sm:$0xff pattern:$0x75316420]
        %v215 = vsel %vm207, %v211, 0.0
        %v216 = vsel %vm208, %v212, 0.0
        %v217 = vld [vmem:[%s2] sm:$0xff]
        %v218 = vld [vmem:[%s195] sm:$0xff]
        %v219 = vld [vmem:[%s195 + $0x8] sm:$0xf]
        %v220 = vsel %vm198, 1, 0
        %v221 = vperm.slane %v220, 0
        %v222 = vperm.slane %v220, 1
        %vm223 = vcmp.eq.s32.totalorder %v221, 1
        %vm224 = vcmp.eq.s32.totalorder %v222, 1
        %227 = vst [vmem:[#allocation1] ss:$2 sm:$0xff] %v218
        %s228 = scalar_lea.vmem [#allocation1], 16
        %229 = vst [vmem:[%s228] ss:$2 sm:$0xff] %v219
        %v230 = vld.sshfl [vmem:[#allocation1] sm:$0xff pattern:$0x75316420]
        %v231 = vld.sshfl [vmem:[#allocation1 + $0x8] sm:$0xff pattern:$0x75316420]
        %v232 = vld.sshfl [vmem:[#allocation1 + $0x10] sm:$0xff pattern:$0x75316420]
        %233 = vrot.lane.b32.xlu0 %v230, 127
        %v234 = vpop.permute.xlu0 %233
        %235 = vrot.lane.b32.xlu0 %v231, 127
        %v236 = vpop.permute.xlu0 %235
        %237 = vrot.lane.b32.xlu0 %v232, 127
        %v238 = vpop.permute.xlu0 %237
        %vm239 = vcmask 1039360
        %v240 = vsel %vm239, %v234, %v236
        %v241 = vsel %vm239, %v236, %v238
        %v244 = vsel %vm223, %v240, 0.0
        %v245 = vsel %vm224, %v241, 0.0
        %s246 = scalar_lea.vmem %s2, 8
        %v247 = vld [vmem:[%s246] sm:$0xff]
        %vm248 = vcmask 31744
        %v250 = vsel %vm248, %v247, 0
        %vm252 = vcmask 1043456
        %v254 = vsel %vm252, %v244, 0
        %v257 = vsel %vm252, %v245, 0
        %259 = vmatpush.msra.mxu0 0.0
        %260 = vmatpush.msra.mxu0 0.0
        %261 = vmatpush.msra.mxu0 0.0
        %262 = vmatpush.msra.mxu0 0.0
        %263 = vmatpush.msra.mxu0 0.0
        %264 = vmatpush.msra.mxu0 0.0
        %265 = vmatpush.msra.mxu0 0.0
        %266 = vmatpush.msra.mxu0 0.0
        %267 = vmatpush.msra.mxu0 0.0
        %268 = vmatpush.msra.mxu0 0.0
        %269 = vmatpush.msra.mxu0 0.0
        %270 = vmatpush.msra.mxu0 0.0
        %271 = vmatpush.msra.mxu0 0.0
        %272 = vmatpush.msra.mxu0 0.0
        %273 = vmatpush.msra.mxu0 0.0
        %274 = vmatpush.msra.mxu0 %v254
        %275 = vmatmul.f32.gmra.mxu0 %v250
        %v276 = vpop.f32.mrf.mxu0
        %v277 = vadd.f32 0.0, %v276
        %278 = vdwg.mxu0
        %279 = vmatpush.msra.mxu0 0.0
        %280 = vmatpush.msra.mxu0 0.0
        %281 = vmatpush.msra.mxu0 0.0
        %282 = vmatpush.msra.mxu0 0.0
        %283 = vmatpush.msra.mxu0 0.0
        %284 = vmatpush.msra.mxu0 0.0
        %285 = vmatpush.msra.mxu0 0.0
        %286 = vmatpush.msra.mxu0 0.0
        %287 = vmatpush.msra.mxu0 0.0
        %288 = vmatpush.msra.mxu0 0.0
        %289 = vmatpush.msra.mxu0 0.0
        %290 = vmatpush.msra.mxu0 0.0
        %291 = vmatpush.msra.mxu0 0.0
        %292 = vmatpush.msra.mxu0 0.0
        %293 = vmatpush.msra.mxu0 0.0
        %294 = vmatpush.msra.mxu0 %v257
        %295 = vmatmul.f32.gmra.mxu0 %v250
        %v296 = vpop.f32.mrf.mxu0
        %v297 = vadd.f32 0.0, %v296
        %298 = vdwg.mxu0
        %v300 = vsel %vm248, %v217, 0
        %v303 = vsel %vm252, %v215, 0
        %v306 = vsel %vm252, %v216, 0
        %308 = vmatpush.msra.mxu0 0.0
        %309 = vmatpush.msra.mxu0 0.0
        %310 = vmatpush.msra.mxu0 0.0
        %311 = vmatpush.msra.mxu0 0.0
        %312 = vmatpush.msra.mxu0 0.0
        %313 = vmatpush.msra.mxu0 0.0
        %314 = vmatpush.msra.mxu0 0.0
        %315 = vmatpush.msra.mxu0 0.0
        %316 = vmatpush.msra.mxu0 0.0
        %317 = vmatpush.msra.mxu0 0.0
        %318 = vmatpush.msra.mxu0 0.0
        %319 = vmatpush.msra.mxu0 0.0
        %320 = vmatpush.msra.mxu0 0.0
        %321 = vmatpush.msra.mxu0 0.0
        %322 = vmatpush.msra.mxu0 0.0
        %323 = vmatpush.msra.mxu0 %v303
        %324 = vmatmul.f32.gmra.mxu0 %v300
        %v325 = vpop.f32.mrf.mxu0
        %v326 = vadd.f32 %v277, %v325
        %327 = vdwg.mxu0
        %328 = vmatpush.msra.mxu0 0.0
        %329 = vmatpush.msra.mxu0 0.0
        %330 = vmatpush.msra.mxu0 0.0
        %331 = vmatpush.msra.mxu0 0.0
        %332 = vmatpush.msra.mxu0 0.0
        %333 = vmatpush.msra.mxu0 0.0
        %334 = vmatpush.msra.mxu0 0.0
        %335 = vmatpush.msra.mxu0 0.0
        %336 = vmatpush.msra.mxu0 0.0
        %337 = vmatpush.msra.mxu0 0.0
        %338 = vmatpush.msra.mxu0 0.0
        %339 = vmatpush.msra.mxu0 0.0
        %340 = vmatpush.msra.mxu0 0.0
        %341 = vmatpush.msra.mxu0 0.0
        %342 = vmatpush.msra.mxu0 0.0
        %343 = vmatpush.msra.mxu0 %v306
        %344 = vmatmul.f32.gmra.mxu0 %v300
        %v345 = vpop.f32.mrf.mxu0
        %v346 = vadd.f32 %v297, %v345
        %347 = vdwg.mxu0
        %v348 = vld [vmem:[%s195] sm:$0xff]
        %v349 = vld [vmem:[%s195 + $0x8] sm:$0xf]
        %v350 = vsel %vm199, 1, 0
        %v351 = vperm.slane %v350, 0
        %v352 = vperm.slane %v350, 1
        %vm353 = vcmp.eq.s32.totalorder %v351, 1
        %vm354 = vcmp.eq.s32.totalorder %v352, 1
        %357 = vst [vmem:[#allocation1] ss:$2 sm:$0xff] %v348
        %s358 = scalar_lea.vmem [#allocation1], 16
        %359 = vst [vmem:[%s358] ss:$2 sm:$0xff] %v349
        %v360 = vld.sshfl [vmem:[#allocation1] sm:$0xff pattern:$0x75316420]
        %v361 = vld.sshfl [vmem:[#allocation1 + $0x8] sm:$0xff pattern:$0x75316420]
        %v362 = vld.sshfl [vmem:[#allocation1 + $0x10] sm:$0xff pattern:$0x75316420]
        %363 = vrot.lane.b32.xlu0 %v360, 126
        %v364 = vpop.permute.xlu0 %363
        %365 = vrot.lane.b32.xlu0 %v361, 126
        %v366 = vpop.permute.xlu0 %365
        %367 = vrot.lane.b32.xlu0 %v362, 126
        %v368 = vpop.permute.xlu0 %367
        %vm369 = vcmask 1031168
        %v370 = vsel %vm369, %v364, %v366
        %v371 = vsel %vm369, %v366, %v368
        %v374 = vsel %vm353, %v370, 0.0
        %v375 = vsel %vm354, %v371, 0.0
        %s376 = scalar_lea.vmem %s2, 16
        %v377 = vld [vmem:[%s376] sm:$0xff]
        %v379 = vsel %vm248, %v377, 0
        %v382 = vsel %vm252, %v374, 0
        %v385 = vsel %vm252, %v375, 0
        %387 = vmatpush.msra.mxu0 0.0
        %388 = vmatpush.msra.mxu0 0.0
        %389 = vmatpush.msra.mxu0 0.0
        %390 = vmatpush.msra.mxu0 0.0
        %391 = vmatpush.msra.mxu0 0.0
        %392 = vmatpush.msra.mxu0 0.0
        %393 = vmatpush.msra.mxu0 0.0
        %394 = vmatpush.msra.mxu0 0.0
        %395 = vmatpush.msra.mxu0 0.0
        %396 = vmatpush.msra.mxu0 0.0
        %397 = vmatpush.msra.mxu0 0.0
        %398 = vmatpush.msra.mxu0 0.0
        %399 = vmatpush.msra.mxu0 0.0
        %400 = vmatpush.msra.mxu0 0.0
        %401 = vmatpush.msra.mxu0 0.0
        %402 = vmatpush.msra.mxu0 %v382
        %403 = vmatmul.f32.gmra.mxu0 %v379
        %v404 = vpop.f32.mrf.mxu0
        %v405 = vadd.f32 0.0, %v404
        %406 = vdwg.mxu0
        %407 = vmatpush.msra.mxu0 0.0
        %408 = vmatpush.msra.mxu0 0.0
        %409 = vmatpush.msra.mxu0 0.0
        %410 = vmatpush.msra.mxu0 0.0
        %411 = vmatpush.msra.mxu0 0.0
        %412 = vmatpush.msra.mxu0 0.0
        %413 = vmatpush.msra.mxu0 0.0
        %414 = vmatpush.msra.mxu0 0.0
        %415 = vmatpush.msra.mxu0 0.0
        %416 = vmatpush.msra.mxu0 0.0
        %417 = vmatpush.msra.mxu0 0.0
        %418 = vmatpush.msra.mxu0 0.0
        %419 = vmatpush.msra.mxu0 0.0
        %420 = vmatpush.msra.mxu0 0.0
        %421 = vmatpush.msra.mxu0 0.0
        %422 = vmatpush.msra.mxu0 %v385
        %423 = vmatmul.f32.gmra.mxu0 %v379
        %v424 = vpop.f32.mrf.mxu0
        %v425 = vadd.f32 0.0, %v424
        %426 = vdwg.mxu0
        %v427 = vadd.f32 %v326, %v405
        %v428 = vadd.f32 %v346, %v425
        %v429 = vld [vmem:[%s195] sm:$0xff]
        %v430 = vld [vmem:[%s195 + $0x8] sm:$0xf]
        %s431 = scalar_lea.vmem %s2, 24
        %v432 = vld [vmem:[%s431] sm:$0xff]
        %435 = vst [vmem:[#allocation1] ss:$2 sm:$0xff] %v429
        %s436 = scalar_lea.vmem [#allocation1], 16
        %437 = vst [vmem:[%s436] ss:$2 sm:$0xff] %v430
        %v438 = vld.sshfl [vmem:[#allocation1] sm:$0xff pattern:$0x75316420]
        %v439 = vld.sshfl [vmem:[#allocation1 + $0x8] sm:$0xff pattern:$0x75316420]
        %v440 = vld.sshfl [vmem:[#allocation1 + $0x10] sm:$0xff pattern:$0x75316420]
        %441 = vrot.lane.b32.xlu0 %v438, 125
        %v442 = vpop.permute.xlu0 %441
        %443 = vrot.lane.b32.xlu0 %v439, 125
        %v444 = vpop.permute.xlu0 %443
        %445 = vrot.lane.b32.xlu0 %v440, 125
        %v446 = vpop.permute.xlu0 %445
        %vm447 = vcmask 1022976
        %v448 = vsel %vm447, %v442, %v444
        %v449 = vsel %vm447, %v444, %v446
        %v451 = vsel %vm248, %v432, 0
        %v453 = vsel %vm252, %v448, 0
        %v455 = vsel %vm252, %v449, 0
        %457 = vmatpush.msra.mxu0 0.0
        %458 = vmatpush.msra.mxu0 0.0
        %459 = vmatpush.msra.mxu0 0.0
        %460 = vmatpush.msra.mxu0 0.0
        %461 = vmatpush.msra.mxu0 0.0
        %462 = vmatpush.msra.mxu0 0.0
        %463 = vmatpush.msra.mxu0 0.0
        %464 = vmatpush.msra.mxu0 0.0
        %465 = vmatpush.msra.mxu0 0.0
        %466 = vmatpush.msra.mxu0 0.0
        %467 = vmatpush.msra.mxu0 0.0
        %468 = vmatpush.msra.mxu0 0.0
        %469 = vmatpush.msra.mxu0 0.0
        %470 = vmatpush.msra.mxu0 0.0
        %471 = vmatpush.msra.mxu0 0.0
        %472 = vmatpush.msra.mxu0 %v453
        %473 = vmatmul.f32.gmra.mxu0 %v451
        %v474 = vpop.f32.mrf.mxu0
        %v475 = vadd.f32 0.0, %v474
        %476 = vdwg.mxu0
        %477 = vmatpush.msra.mxu0 0.0
        %478 = vmatpush.msra.mxu0 0.0
        %479 = vmatpush.msra.mxu0 0.0
        %480 = vmatpush.msra.mxu0 0.0
        %481 = vmatpush.msra.mxu0 0.0
        %482 = vmatpush.msra.mxu0 0.0
        %483 = vmatpush.msra.mxu0 0.0
        %484 = vmatpush.msra.mxu0 0.0
        %485 = vmatpush.msra.mxu0 0.0
        %486 = vmatpush.msra.mxu0 0.0
        %487 = vmatpush.msra.mxu0 0.0
        %488 = vmatpush.msra.mxu0 0.0
        %489 = vmatpush.msra.mxu0 0.0
        %490 = vmatpush.msra.mxu0 0.0
        %491 = vmatpush.msra.mxu0 0.0
        %492 = vmatpush.msra.mxu0 %v455
        %493 = vmatmul.f32.gmra.mxu0 %v451
        %v494 = vpop.f32.mrf.mxu0
        %v495 = vadd.f32 0.0, %v494
        %496 = vdwg.mxu0
        %v497 = vadd.f32 %v427, %v475
        %v498 = vadd.f32 %v428, %v495
        %v499 = vld [vmem:[%s195] sm:$0xff]
        %v500 = vld [vmem:[%s195 + $0x8] sm:$0xf]
        %v501 = vsel %vm200, 1, 0
        %v502 = vperm.slane %v501, 0
        %v503 = vperm.slane %v501, 1
        %vm504 = vcmp.eq.s32.totalorder %v502, 1
        %vm505 = vcmp.eq.s32.totalorder %v503, 1
        %508 = vst [vmem:[#allocation1] ss:$2 sm:$0xff] %v499
        %s509 = scalar_lea.vmem [#allocation1], 16
        %510 = vst [vmem:[%s509] ss:$2 sm:$0xff] %v500
        %v511 = vld.sshfl [vmem:[#allocation1] sm:$0xff pattern:$0x75316420]
        %v512 = vld.sshfl [vmem:[#allocation1 + $0x8] sm:$0xff pattern:$0x75316420]
        %v513 = vld.sshfl [vmem:[#allocation1 + $0x10] sm:$0xff pattern:$0x75316420]
        %514 = vrot.lane.b32.xlu0 %v511, 124
        %v515 = vpop.permute.xlu0 %514
        %516 = vrot.lane.b32.xlu0 %v512, 124
        %v517 = vpop.permute.xlu0 %516
        %518 = vrot.lane.b32.xlu0 %v513, 124
        %v519 = vpop.permute.xlu0 %518
        %vm520 = vcmask 1014784
        %v521 = vsel %vm520, %v515, %v517
        %v522 = vsel %vm520, %v517, %v519
        %v525 = vsel %vm504, %v521, 0.0
        %v526 = vsel %vm505, %v522, 0.0
        %s527 = scalar_lea.vmem %s2, 32
        %v528 = vld [vmem:[%s527] sm:$0xff]
        %v530 = vsel %vm248, %v528, 0
        %v533 = vsel %vm252, %v525, 0
        %v536 = vsel %vm252, %v526, 0
        %538 = vmatpush.msra.mxu0 0.0
        %539 = vmatpush.msra.mxu0 0.0
        %540 = vmatpush.msra.mxu0 0.0
        %541 = vmatpush.msra.mxu0 0.0
        %542 = vmatpush.msra.mxu0 0.0
        %543 = vmatpush.msra.mxu0 0.0
        %544 = vmatpush.msra.mxu0 0.0
        %545 = vmatpush.msra.mxu0 0.0
        %546 = vmatpush.msra.mxu0 0.0
        %547 = vmatpush.msra.mxu0 0.0
        %548 = vmatpush.msra.mxu0 0.0
        %549 = vmatpush.msra.mxu0 0.0
        %550 = vmatpush.msra.mxu0 0.0
        %551 = vmatpush.msra.mxu0 0.0
        %552 = vmatpush.msra.mxu0 0.0
        %553 = vmatpush.msra.mxu0 %v533
        %554 = vmatmul.f32.gmra.mxu0 %v530
        %v555 = vpop.f32.mrf.mxu0
        %v556 = vadd.f32 0.0, %v555
        %557 = vdwg.mxu0
        %558 = vmatpush.msra.mxu0 0.0
        %559 = vmatpush.msra.mxu0 0.0
        %560 = vmatpush.msra.mxu0 0.0
        %561 = vmatpush.msra.mxu0 0.0
        %562 = vmatpush.msra.mxu0 0.0
        %563 = vmatpush.msra.mxu0 0.0
        %564 = vmatpush.msra.mxu0 0.0
        %565 = vmatpush.msra.mxu0 0.0
        %566 = vmatpush.msra.mxu0 0.0
        %567 = vmatpush.msra.mxu0 0.0
        %568 = vmatpush.msra.mxu0 0.0
        %569 = vmatpush.msra.mxu0 0.0
        %570 = vmatpush.msra.mxu0 0.0
        %571 = vmatpush.msra.mxu0 0.0
        %572 = vmatpush.msra.mxu0 0.0
        %573 = vmatpush.msra.mxu0 %v536
        %574 = vmatmul.f32.gmra.mxu0 %v530
        %v575 = vpop.f32.mrf.mxu0
        %v576 = vadd.f32 0.0, %v575
        %577 = vdwg.mxu0
        %v578 = vadd.f32 %v497, %v556
        %v579 = vadd.f32 %v498, %v576
        %v580 = vld [vmem:[%s195] sm:$0xff]
        %v581 = vld [vmem:[%s195 + $0x8] sm:$0xf]
        %v582 = vsel %vm201, 1, 0
        %v583 = vperm.slane %v582, 0
        %v584 = vperm.slane %v582, 1
        %vm585 = vcmp.eq.s32.totalorder %v583, 1
        %vm586 = vcmp.eq.s32.totalorder %v584, 1
        %589 = vst [vmem:[#allocation1] ss:$2 sm:$0xff] %v580
        %s590 = scalar_lea.vmem [#allocation1], 16
        %591 = vst [vmem:[%s590] ss:$2 sm:$0xff] %v581
        %v592 = vld.sshfl [vmem:[#allocation1] sm:$0xff pattern:$0x75316420]
        %v593 = vld.sshfl [vmem:[#allocation1 + $0x8] sm:$0xff pattern:$0x75316420]
        %v594 = vld.sshfl [vmem:[#allocation1 + $0x10] sm:$0xff pattern:$0x75316420]
        %595 = vrot.lane.b32.xlu0 %v592, 123
        %v596 = vpop.permute.xlu0 %595
        %597 = vrot.lane.b32.xlu0 %v593, 123
        %v598 = vpop.permute.xlu0 %597
        %599 = vrot.lane.b32.xlu0 %v594, 123
        %v600 = vpop.permute.xlu0 %599
        %vm601 = vcmask 1006592
        %v602 = vsel %vm601, %v596, %v598
        %v603 = vsel %vm601, %v598, %v600
        %v606 = vsel %vm585, %v602, 0.0
        %v607 = vsel %vm586, %v603, 0.0
        %s608 = scalar_lea.vmem %s2, 40
        %v609 = vld [vmem:[%s608] sm:$0xff]
        %v611 = vsel %vm248, %v609, 0
        %v614 = vsel %vm252, %v606, 0
        %v617 = vsel %vm252, %v607, 0
        %619 = vmatpush.msra.mxu0 0.0
        %620 = vmatpush.msra.mxu0 0.0
        %621 = vmatpush.msra.mxu0 0.0
        %622 = vmatpush.msra.mxu0 0.0
        %623 = vmatpush.msra.mxu0 0.0
        %624 = vmatpush.msra.mxu0 0.0
        %625 = vmatpush.msra.mxu0 0.0
        %626 = vmatpush.msra.mxu0 0.0
        %627 = vmatpush.msra.mxu0 0.0
        %628 = vmatpush.msra.mxu0 0.0
        %629 = vmatpush.msra.mxu0 0.0
        %630 = vmatpush.msra.mxu0 0.0
        %631 = vmatpush.msra.mxu0 0.0
        %632 = vmatpush.msra.mxu0 0.0
        %633 = vmatpush.msra.mxu0 0.0
        %634 = vmatpush.msra.mxu0 %v614
        %635 = vmatmul.f32.gmra.mxu0 %v611
        %v636 = vpop.f32.mrf.mxu0
        %v637 = vadd.f32 0.0, %v636
        %638 = vdwg.mxu0
        %639 = vmatpush.msra.mxu0 0.0
        %640 = vmatpush.msra.mxu0 0.0
        %641 = vmatpush.msra.mxu0 0.0
        %642 = vmatpush.msra.mxu0 0.0
        %643 = vmatpush.msra.mxu0 0.0
        %644 = vmatpush.msra.mxu0 0.0
        %645 = vmatpush.msra.mxu0 0.0
        %646 = vmatpush.msra.mxu0 0.0
        %647 = vmatpush.msra.mxu0 0.0
        %648 = vmatpush.msra.mxu0 0.0
        %649 = vmatpush.msra.mxu0 0.0
        %650 = vmatpush.msra.mxu0 0.0
        %651 = vmatpush.msra.mxu0 0.0
        %652 = vmatpush.msra.mxu0 0.0
        %653 = vmatpush.msra.mxu0 0.0
        %654 = vmatpush.msra.mxu0 %v617
        %655 = vmatmul.f32.gmra.mxu0 %v611
        %v656 = vpop.f32.mrf.mxu0
        %v657 = vadd.f32 0.0, %v656
        %658 = vdwg.mxu0
        %v659 = vadd.f32 %v578, %v637
        %v660 = vadd.f32 %v579, %v657
        %v661 = vld [vmem:[%s195] sm:$0xff]
        %v662 = vld [vmem:[%s195 + $0x8] sm:$0xf]
        %v663 = vsel %vm202, 1, 0
        %v664 = vperm.slane %v663, 0
        %v665 = vperm.slane %v663, 1
        %vm666 = vcmp.eq.s32.totalorder %v664, 1
        %vm667 = vcmp.eq.s32.totalorder %v665, 1
        %670 = vst [vmem:[#allocation1] ss:$2 sm:$0xff] %v661
        %s671 = scalar_lea.vmem [#allocation1], 16
        %672 = vst [vmem:[%s671] ss:$2 sm:$0xff] %v662
        %v673 = vld.sshfl [vmem:[#allocation1] sm:$0xff pattern:$0x75316420]
        %v674 = vld.sshfl [vmem:[#allocation1 + $0x8] sm:$0xff pattern:$0x75316420]
        %v675 = vld.sshfl [vmem:[#allocation1 + $0x10] sm:$0xff pattern:$0x75316420]
        %676 = vrot.lane.b32.xlu0 %v673, 122
        %v677 = vpop.permute.xlu0 %676
        %678 = vrot.lane.b32.xlu0 %v674, 122
        %v679 = vpop.permute.xlu0 %678
        %680 = vrot.lane.b32.xlu0 %v675, 122
        %v681 = vpop.permute.xlu0 %680
        %vm682 = vcmask 998400
        %v683 = vsel %vm682, %v677, %v679
        %v684 = vsel %vm682, %v679, %v681
        %v687 = vsel %vm666, %v683, 0.0
        %v688 = vsel %vm667, %v684, 0.0
        %s689 = scalar_lea.vmem %s2, 48
        %v690 = vld [vmem:[%s689] sm:$0xff]
        %v692 = vsel %vm248, %v690, 0
        %v695 = vsel %vm252, %v687, 0
        %v698 = vsel %vm252, %v688, 0
        %700 = vmatpush.msra.mxu0 0.0
        %701 = vmatpush.msra.mxu0 0.0
        %702 = vmatpush.msra.mxu0 0.0
        %703 = vmatpush.msra.mxu0 0.0
        %704 = vmatpush.msra.mxu0 0.0
        %705 = vmatpush.msra.mxu0 0.0
        %706 = vmatpush.msra.mxu0 0.0
        %707 = vmatpush.msra.mxu0 0.0
        %708 = vmatpush.msra.mxu0 0.0
        %709 = vmatpush.msra.mxu0 0.0
        %710 = vmatpush.msra.mxu0 0.0
        %711 = vmatpush.msra.mxu0 0.0
        %712 = vmatpush.msra.mxu0 0.0
        %713 = vmatpush.msra.mxu0 0.0
        %714 = vmatpush.msra.mxu0 0.0
        %715 = vmatpush.msra.mxu0 %v695
        %716 = vmatmul.f32.gmra.mxu0 %v692
        %v717 = vpop.f32.mrf.mxu0
        %v718 = vadd.f32 0.0, %v717
        %719 = vdwg.mxu0
        %720 = vmatpush.msra.mxu0 0.0
        %721 = vmatpush.msra.mxu0 0.0
        %722 = vmatpush.msra.mxu0 0.0
        %723 = vmatpush.msra.mxu0 0.0
        %724 = vmatpush.msra.mxu0 0.0
        %725 = vmatpush.msra.mxu0 0.0
        %726 = vmatpush.msra.mxu0 0.0
        %727 = vmatpush.msra.mxu0 0.0
        %728 = vmatpush.msra.mxu0 0.0
        %729 = vmatpush.msra.mxu0 0.0
        %730 = vmatpush.msra.mxu0 0.0
        %731 = vmatpush.msra.mxu0 0.0
        %732 = vmatpush.msra.mxu0 0.0
        %733 = vmatpush.msra.mxu0 0.0
        %734 = vmatpush.msra.mxu0 0.0
        %735 = vmatpush.msra.mxu0 %v698
        %736 = vmatmul.f32.gmra.mxu0 %v692
        %v737 = vpop.f32.mrf.mxu0
        %v738 = vadd.f32 0.0, %v737
        %739 = vdwg.mxu0
        %v740 = vadd.f32 %v659, %v718
        %v741 = vadd.f32 %v660, %v738
        %v742 = vld [vmem:[%s195] sm:$0xff]
        %v743 = vld [vmem:[%s195 + $0x8] sm:$0xf]
        %746 = vst [vmem:[#allocation1] ss:$2 sm:$0xff] %v742
        %s747 = scalar_lea.vmem [#allocation1], 16
        %748 = vst [vmem:[%s747] ss:$2 sm:$0xff] %v743
        %v749 = vld.sshfl [vmem:[#allocation1] sm:$0xff pattern:$0x75316420]
        %v750 = vld.sshfl [vmem:[#allocation1 + $0x8] sm:$0xff pattern:$0x75316420]
        %v751 = vld.sshfl [vmem:[#allocation1 + $0x10] sm:$0xff pattern:$0x75316420]
        %752 = vrot.lane.b32.xlu0 %v749, 112
        %v753 = vpop.permute.xlu0 %752
        %754 = vrot.lane.b32.xlu0 %v750, 112
        %v755 = vpop.permute.xlu0 %754
        %756 = vrot.lane.b32.xlu0 %v751, 112
        %v757 = vpop.permute.xlu0 %756
        %vm758 = vcmask 916480
        %v759 = vsel %vm758, %v753, %v755
        %v760 = vsel %vm758, %v755, %v757
        %v763 = vsel %vm207, %v759, 0.0
        %v764 = vsel %vm208, %v760, 0.0
        %s765 = scalar_lea.vmem %s2, 56
        %v766 = vld [vmem:[%s765] sm:$0xff]
        %v768 = vsel %vm248, %v766, 0
        %v771 = vsel %vm252, %v763, 0
        %v774 = vsel %vm252, %v764, 0
        %776 = vmatpush.msra.mxu0 0.0
        %777 = vmatpush.msra.mxu0 0.0
        %778 = vmatpush.msra.mxu0 0.0
        %779 = vmatpush.msra.mxu0 0.0
        %780 = vmatpush.msra.mxu0 0.0
        %781 = vmatpush.msra.mxu0 0.0
        %782 = vmatpush.msra.mxu0 0.0
        %783 = vmatpush.msra.mxu0 0.0
        %784 = vmatpush.msra.mxu0 0.0
        %785 = vmatpush.msra.mxu0 0.0
        %786 = vmatpush.msra.mxu0 0.0
        %787 = vmatpush.msra.mxu0 0.0
        %788 = vmatpush.msra.mxu0 0.0
        %789 = vmatpush.msra.mxu0 0.0
        %790 = vmatpush.msra.mxu0 0.0
        %791 = vmatpush.msra.mxu0 %v771
        %792 = vmatmul.f32.gmra.mxu0 %v768
        %v793 = vpop.f32.mrf.mxu0
        %v794 = vadd.f32 0.0, %v793
        %795 = vdwg.mxu0
        %796 = vmatpush.msra.mxu0 0.0
        %797 = vmatpush.msra.mxu0 0.0
        %798 = vmatpush.msra.mxu0 0.0
        %799 = vmatpush.msra.mxu0 0.0
        %800 = vmatpush.msra.mxu0 0.0
        %801 = vmatpush.msra.mxu0 0.0
        %802 = vmatpush.msra.mxu0 0.0
        %803 = vmatpush.msra.mxu0 0.0
        %804 = vmatpush.msra.mxu0 0.0
        %805 = vmatpush.msra.mxu0 0.0
        %806 = vmatpush.msra.mxu0 0.0
        %807 = vmatpush.msra.mxu0 0.0
        %808 = vmatpush.msra.mxu0 0.0
        %809 = vmatpush.msra.mxu0 0.0
        %810 = vmatpush.msra.mxu0 0.0
        %811 = vmatpush.msra.mxu0 %v774
        %812 = vmatmul.f32.gmra.mxu0 %v768
        %v813 = vpop.f32.mrf.mxu0
        %v814 = vadd.f32 0.0, %v813
        %815 = vdwg.mxu0
        %v816 = vadd.f32 %v740, %v794
        %v817 = vadd.f32 %v741, %v814
        %v818 = vld [vmem:[%s195] sm:$0xff]
        %v819 = vld [vmem:[%s195 + $0x8] sm:$0xf]
        %822 = vst [vmem:[#allocation1] ss:$2 sm:$0xff] %v818
        %s823 = scalar_lea.vmem [#allocation1], 16
        %824 = vst [vmem:[%s823] ss:$2 sm:$0xff] %v819
        %v825 = vld.sshfl [vmem:[#allocation1] sm:$0xff pattern:$0x75316420]
        %v826 = vld.sshfl [vmem:[#allocation1 + $0x8] sm:$0xff pattern:$0x75316420]
        %v827 = vld.sshfl [vmem:[#allocation1 + $0x10] sm:$0xff pattern:$0x75316420]
        %828 = vrot.lane.b32.xlu0 %v825, 111
        %v829 = vpop.permute.xlu0 %828
        %830 = vrot.lane.b32.xlu0 %v826, 111
        %v831 = vpop.permute.xlu0 %830
        %832 = vrot.lane.b32.xlu0 %v827, 111
        %v833 = vpop.permute.xlu0 %832
        %vm834 = vcmask 908288
        %v835 = vsel %vm834, %v829, %v831
        %v836 = vsel %vm834, %v831, %v833
        %v839 = vsel %vm223, %v835, 0.0
        %v840 = vsel %vm224, %v836, 0.0
        %s841 = scalar_lea.vmem %s2, 64
        %v842 = vld [vmem:[%s841] sm:$0xff]
        %v844 = vsel %vm248, %v842, 0
        %v847 = vsel %vm252, %v839, 0
        %v850 = vsel %vm252, %v840, 0
        %852 = vmatpush.msra.mxu0 0.0
        %853 = vmatpush.msra.mxu0 0.0
        %854 = vmatpush.msra.mxu0 0.0
        %855 = vmatpush.msra.mxu0 0.0
        %856 = vmatpush.msra.mxu0 0.0
        %857 = vmatpush.msra.mxu0 0.0
        %858 = vmatpush.msra.mxu0 0.0
        %859 = vmatpush.msra.mxu0 0.0
        %860 = vmatpush.msra.mxu0 0.0
        %861 = vmatpush.msra.mxu0 0.0
        %862 = vmatpush.msra.mxu0 0.0
        %863 = vmatpush.msra.mxu0 0.0
        %864 = vmatpush.msra.mxu0 0.0
        %865 = vmatpush.msra.mxu0 0.0
        %866 = vmatpush.msra.mxu0 0.0
        %867 = vmatpush.msra.mxu0 %v847
        %868 = vmatmul.f32.gmra.mxu0 %v844
        %v869 = vpop.f32.mrf.mxu0
        %v870 = vadd.f32 0.0, %v869
        %871 = vdwg.mxu0
        %872 = vmatpush.msra.mxu0 0.0
        %873 = vmatpush.msra.mxu0 0.0
        %874 = vmatpush.msra.mxu0 0.0
        %875 = vmatpush.msra.mxu0 0.0
        %876 = vmatpush.msra.mxu0 0.0
        %877 = vmatpush.msra.mxu0 0.0
        %878 = vmatpush.msra.mxu0 0.0
        %879 = vmatpush.msra.mxu0 0.0
        %880 = vmatpush.msra.mxu0 0.0
        %881 = vmatpush.msra.mxu0 0.0
        %882 = vmatpush.msra.mxu0 0.0
        %883 = vmatpush.msra.mxu0 0.0
        %884 = vmatpush.msra.mxu0 0.0
        %885 = vmatpush.msra.mxu0 0.0
        %886 = vmatpush.msra.mxu0 0.0
        %887 = vmatpush.msra.mxu0 %v850
        %888 = vmatmul.f32.gmra.mxu0 %v844
        %v889 = vpop.f32.mrf.mxu0
        %v890 = vadd.f32 0.0, %v889
        %891 = vdwg.mxu0
        %v892 = vadd.f32 %v816, %v870
        %v893 = vadd.f32 %v817, %v890
        %v894 = vld [vmem:[%s195] sm:$0xff]
        %v895 = vld [vmem:[%s195 + $0x8] sm:$0xf]
        %898 = vst [vmem:[#allocation1] ss:$2 sm:$0xff] %v894
        %s899 = scalar_lea.vmem [#allocation1], 16
        %900 = vst [vmem:[%s899] ss:$2 sm:$0xff] %v895
        %v901 = vld.sshfl [vmem:[#allocation1] sm:$0xff pattern:$0x75316420]
        %v902 = vld.sshfl [vmem:[#allocation1 + $0x8] sm:$0xff pattern:$0x75316420]
        %v903 = vld.sshfl [vmem:[#allocation1 + $0x10] sm:$0xff pattern:$0x75316420]
        %904 = vrot.lane.b32.xlu0 %v901, 110
        %v905 = vpop.permute.xlu0 %904
        %906 = vrot.lane.b32.xlu0 %v902, 110
        %v907 = vpop.permute.xlu0 %906
        %908 = vrot.lane.b32.xlu0 %v903, 110
        %v909 = vpop.permute.xlu0 %908
        %vm910 = vcmask 900096
        %v911 = vsel %vm910, %v905, %v907
        %v912 = vsel %vm910, %v907, %v909
        %v915 = vsel %vm353, %v911, 0.0
        %v916 = vsel %vm354, %v912, 0.0
        %s917 = scalar_lea.vmem %s2, 72
        %v918 = vld [vmem:[%s917] sm:$0xff]
        %v920 = vsel %vm248, %v918, 0
        %v923 = vsel %vm252, %v915, 0
        %v926 = vsel %vm252, %v916, 0
        %928 = vmatpush.msra.mxu0 0.0
        %929 = vmatpush.msra.mxu0 0.0
        %930 = vmatpush.msra.mxu0 0.0
        %931 = vmatpush.msra.mxu0 0.0
        %932 = vmatpush.msra.mxu0 0.0
        %933 = vmatpush.msra.mxu0 0.0
        %934 = vmatpush.msra.mxu0 0.0
        %935 = vmatpush.msra.mxu0 0.0
        %936 = vmatpush.msra.mxu0 0.0
        %937 = vmatpush.msra.mxu0 0.0
        %938 = vmatpush.msra.mxu0 0.0
        %939 = vmatpush.msra.mxu0 0.0
        %940 = vmatpush.msra.mxu0 0.0
        %941 = vmatpush.msra.mxu0 0.0
        %942 = vmatpush.msra.mxu0 0.0
        %943 = vmatpush.msra.mxu0 %v923
        %944 = vmatmul.f32.gmra.mxu0 %v920
        %v945 = vpop.f32.mrf.mxu0
        %v946 = vadd.f32 0.0, %v945
        %947 = vdwg.mxu0
        %948 = vmatpush.msra.mxu0 0.0
        %949 = vmatpush.msra.mxu0 0.0
        %950 = vmatpush.msra.mxu0 0.0
        %951 = vmatpush.msra.mxu0 0.0
        %952 = vmatpush.msra.mxu0 0.0
        %953 = vmatpush.msra.mxu0 0.0
        %954 = vmatpush.msra.mxu0 0.0
        %955 = vmatpush.msra.mxu0 0.0
        %956 = vmatpush.msra.mxu0 0.0
        %957 = vmatpush.msra.mxu0 0.0
        %958 = vmatpush.msra.mxu0 0.0
        %959 = vmatpush.msra.mxu0 0.0
        %960 = vmatpush.msra.mxu0 0.0
        %961 = vmatpush.msra.mxu0 0.0
        %962 = vmatpush.msra.mxu0 0.0
        %963 = vmatpush.msra.mxu0 %v926
        %964 = vmatmul.f32.gmra.mxu0 %v920
        %v965 = vpop.f32.mrf.mxu0
        %v966 = vadd.f32 0.0, %v965
        %967 = vdwg.mxu0
        %v968 = vadd.f32 %v892, %v946
        %v969 = vadd.f32 %v893, %v966
        %v970 = vld [vmem:[%s195] sm:$0xff]
        %v971 = vld [vmem:[%s195 + $0x8] sm:$0xf]
        %s972 = scalar_lea.vmem %s2, 80
        %v973 = vld [vmem:[%s972] sm:$0xff]
        %976 = vst [vmem:[#allocation1] ss:$2 sm:$0xff] %v970
        %s977 = scalar_lea.vmem [#allocation1], 16
        %978 = vst [vmem:[%s977] ss:$2 sm:$0xff] %v971
        %v979 = vld.sshfl [vmem:[#allocation1] sm:$0xff pattern:$0x75316420]
        %v980 = vld.sshfl [vmem:[#allocation1 + $0x8] sm:$0xff pattern:$0x75316420]
        %v981 = vld.sshfl [vmem:[#allocation1 + $0x10] sm:$0xff pattern:$0x75316420]
        %982 = vrot.lane.b32.xlu0 %v979, 109
        %v983 = vpop.permute.xlu0 %982
        %984 = vrot.lane.b32.xlu0 %v980, 109
        %v985 = vpop.permute.xlu0 %984
        %986 = vrot.lane.b32.xlu0 %v981, 109
        %v987 = vpop.permute.xlu0 %986
        %vm988 = vcmask 891904
        %v989 = vsel %vm988, %v983, %v985
        %v990 = vsel %vm988, %v985, %v987
        %v992 = vsel %vm248, %v973, 0
        %v994 = vsel %vm252, %v989, 0
        %v996 = vsel %vm252, %v990, 0
        %998 = vmatpush.msra.mxu0 0.0
        %999 = vmatpush.msra.mxu0 0.0
        %1000 = vmatpush.msra.mxu0 0.0
        %1001 = vmatpush.msra.mxu0 0.0
        %1002 = vmatpush.msra.mxu0 0.0
        %1003 = vmatpush.msra.mxu0 0.0
        %1004 = vmatpush.msra.mxu0 0.0
        %1005 = vmatpush.msra.mxu0 0.0
        %1006 = vmatpush.msra.mxu0 0.0
        %1007 = vmatpush.msra.mxu0 0.0
        %1008 = vmatpush.msra.mxu0 0.0
        %1009 = vmatpush.msra.mxu0 0.0
        %1010 = vmatpush.msra.mxu0 0.0
        %1011 = vmatpush.msra.mxu0 0.0
        %1012 = vmatpush.msra.mxu0 0.0
        %1013 = vmatpush.msra.mxu0 %v994
        %1014 = vmatmul.f32.gmra.mxu0 %v992
        %v1015 = vpop.f32.mrf.mxu0
        %v1016 = vadd.f32 0.0, %v1015
        %1017 = vdwg.mxu0
        %1018 = vmatpush.msra.mxu0 0.0
        %1019 = vmatpush.msra.mxu0 0.0
        %1020 = vmatpush.msra.mxu0 0.0
        %1021 = vmatpush.msra.mxu0 0.0
        %1022 = vmatpush.msra.mxu0 0.0
        %1023 = vmatpush.msra.mxu0 0.0
        %1024 = vmatpush.msra.mxu0 0.0
        %1025 = vmatpush.msra.mxu0 0.0
        %1026 = vmatpush.msra.mxu0 0.0
        %1027 = vmatpush.msra.mxu0 0.0
        %1028 = vmatpush.msra.mxu0 0.0
        %1029 = vmatpush.msra.mxu0 0.0
        %1030 = vmatpush.msra.mxu0 0.0
        %1031 = vmatpush.msra.mxu0 0.0
        %1032 = vmatpush.msra.mxu0 0.0
        %1033 = vmatpush.msra.mxu0 %v996
        %1034 = vmatmul.f32.gmra.mxu0 %v992
        %v1035 = vpop.f32.mrf.mxu0
        %v1036 = vadd.f32 0.0, %v1035
        %1037 = vdwg.mxu0
        %v1038 = vadd.f32 %v968, %v1016
        %v1039 = vadd.f32 %v969, %v1036
        %v1040 = vld [vmem:[%s195] sm:$0xff]
        %v1041 = vld [vmem:[%s195 + $0x8] sm:$0xf]
        %1044 = vst [vmem:[#allocation1] ss:$2 sm:$0xff] %v1040
        %s1045 = scalar_lea.vmem [#allocation1], 16
        %1046 = vst [vmem:[%s1045] ss:$2 sm:$0xff] %v1041
        %v1047 = vld.sshfl [vmem:[#allocation1] sm:$0xff pattern:$0x75316420]
        %v1048 = vld.sshfl [vmem:[#allocation1 + $0x8] sm:$0xff pattern:$0x75316420]
        %v1049 = vld.sshfl [vmem:[#allocation1 + $0x10] sm:$0xff pattern:$0x75316420]
        %1050 = vrot.lane.b32.xlu0 %v1047, 108
        %v1051 = vpop.permute.xlu0 %1050
        %1052 = vrot.lane.b32.xlu0 %v1048, 108
        %v1053 = vpop.permute.xlu0 %1052
        %1054 = vrot.lane.b32.xlu0 %v1049, 108
        %v1055 = vpop.permute.xlu0 %1054
        %vm1056 = vcmask 883712
        %v1057 = vsel %vm1056, %v1051, %v1053
        %v1058 = vsel %vm1056, %v1053, %v1055
        %v1061 = vsel %vm504, %v1057, 0.0
        %v1062 = vsel %vm505, %v1058, 0.0
        %s1063 = scalar_lea.vmem %s2, 88
        %v1064 = vld [vmem:[%s1063] sm:$0xff]
        %v1066 = vsel %vm248, %v1064, 0
        %v1069 = vsel %vm252, %v1061, 0
        %v1072 = vsel %vm252, %v1062, 0
        %1074 = vmatpush.msra.mxu0 0.0
        %1075 = vmatpush.msra.mxu0 0.0
        %1076 = vmatpush.msra.mxu0 0.0
        %1077 = vmatpush.msra.mxu0 0.0
        %1078 = vmatpush.msra.mxu0 0.0
        %1079 = vmatpush.msra.mxu0 0.0
        %1080 = vmatpush.msra.mxu0 0.0
        %1081 = vmatpush.msra.mxu0 0.0
        %1082 = vmatpush.msra.mxu0 0.0
        %1083 = vmatpush.msra.mxu0 0.0
        %1084 = vmatpush.msra.mxu0 0.0
        %1085 = vmatpush.msra.mxu0 0.0
        %1086 = vmatpush.msra.mxu0 0.0
        %1087 = vmatpush.msra.mxu0 0.0
        %1088 = vmatpush.msra.mxu0 0.0
        %1089 = vmatpush.msra.mxu0 %v1069
        %1090 = vmatmul.f32.gmra.mxu0 %v1066
        %v1091 = vpop.f32.mrf.mxu0
        %v1092 = vadd.f32 0.0, %v1091
        %1093 = vdwg.mxu0
        %1094 = vmatpush.msra.mxu0 0.0
        %1095 = vmatpush.msra.mxu0 0.0
        %1096 = vmatpush.msra.mxu0 0.0
        %1097 = vmatpush.msra.mxu0 0.0
        %1098 = vmatpush.msra.mxu0 0.0
        %1099 = vmatpush.msra.mxu0 0.0
        %1100 = vmatpush.msra.mxu0 0.0
        %1101 = vmatpush.msra.mxu0 0.0
        %1102 = vmatpush.msra.mxu0 0.0
        %1103 = vmatpush.msra.mxu0 0.0
        %1104 = vmatpush.msra.mxu0 0.0
        %1105 = vmatpush.msra.mxu0 0.0
        %1106 = vmatpush.msra.mxu0 0.0
        %1107 = vmatpush.msra.mxu0 0.0
        %1108 = vmatpush.msra.mxu0 0.0
        %1109 = vmatpush.msra.mxu0 %v1072
        %1110 = vmatmul.f32.gmra.mxu0 %v1066
        %v1111 = vpop.f32.mrf.mxu0
        %v1112 = vadd.f32 0.0, %v1111
        %1113 = vdwg.mxu0
        %v1114 = vadd.f32 %v1038, %v1092
        %v1115 = vadd.f32 %v1039, %v1112
        %v1116 = vld [vmem:[%s195] sm:$0xff]
        %v1117 = vld [vmem:[%s195 + $0x8] sm:$0xf]
        %1120 = vst [vmem:[#allocation1] ss:$2 sm:$0xff] %v1116
        %s1121 = scalar_lea.vmem [#allocation1], 16
        %1122 = vst [vmem:[%s1121] ss:$2 sm:$0xff] %v1117
        %v1123 = vld.sshfl [vmem:[#allocation1] sm:$0xff pattern:$0x75316420]
        %v1124 = vld.sshfl [vmem:[#allocation1 + $0x8] sm:$0xff pattern:$0x75316420]
        %v1125 = vld.sshfl [vmem:[#allocation1 + $0x10] sm:$0xff pattern:$0x75316420]
        %1126 = vrot.lane.b32.xlu0 %v1123, 107
        %v1127 = vpop.permute.xlu0 %1126
        %1128 = vrot.lane.b32.xlu0 %v1124, 107
        %v1129 = vpop.permute.xlu0 %1128
        %1130 = vrot.lane.b32.xlu0 %v1125, 107
        %v1131 = vpop.permute.xlu0 %1130
        %vm1132 = vcmask 875520
        %v1133 = vsel %vm1132, %v1127, %v1129
        %v1134 = vsel %vm1132, %v1129, %v1131
        %v1137 = vsel %vm585, %v1133, 0.0
        %v1138 = vsel %vm586, %v1134, 0.0
        %s1139 = scalar_lea.vmem %s2, 96
        %v1140 = vld [vmem:[%s1139] sm:$0xff]
        %v1142 = vsel %vm248, %v1140, 0
        %v1145 = vsel %vm252, %v1137, 0
        %v1148 = vsel %vm252, %v1138, 0
        %1150 = vmatpush.msra.mxu0 0.0
        %1151 = vmatpush.msra.mxu0 0.0
        %1152 = vmatpush.msra.mxu0 0.0
        %1153 = vmatpush.msra.mxu0 0.0
        %1154 = vmatpush.msra.mxu0 0.0
        %1155 = vmatpush.msra.mxu0 0.0
        %1156 = vmatpush.msra.mxu0 0.0
        %1157 = vmatpush.msra.mxu0 0.0
        %1158 = vmatpush.msra.mxu0 0.0
        %1159 = vmatpush.msra.mxu0 0.0
        %1160 = vmatpush.msra.mxu0 0.0
        %1161 = vmatpush.msra.mxu0 0.0
        %1162 = vmatpush.msra.mxu0 0.0
        %1163 = vmatpush.msra.mxu0 0.0
        %1164 = vmatpush.msra.mxu0 0.0
        %1165 = vmatpush.msra.mxu0 %v1145
        %1166 = vmatmul.f32.gmra.mxu0 %v1142
        %v1167 = vpop.f32.mrf.mxu0
        %v1168 = vadd.f32 0.0, %v1167
        %1169 = vdwg.mxu0
        %1170 = vmatpush.msra.mxu0 0.0
        %1171 = vmatpush.msra.mxu0 0.0
        %1172 = vmatpush.msra.mxu0 0.0
        %1173 = vmatpush.msra.mxu0 0.0
        %1174 = vmatpush.msra.mxu0 0.0
        %1175 = vmatpush.msra.mxu0 0.0
        %1176 = vmatpush.msra.mxu0 0.0
        %1177 = vmatpush.msra.mxu0 0.0
        %1178 = vmatpush.msra.mxu0 0.0
        %1179 = vmatpush.msra.mxu0 0.0
        %1180 = vmatpush.msra.mxu0 0.0
        %1181 = vmatpush.msra.mxu0 0.0
        %1182 = vmatpush.msra.mxu0 0.0
        %1183 = vmatpush.msra.mxu0 0.0
        %1184 = vmatpush.msra.mxu0 0.0
        %1185 = vmatpush.msra.mxu0 %v1148
        %1186 = vmatmul.f32.gmra.mxu0 %v1142
        %v1187 = vpop.f32.mrf.mxu0
        %v1188 = vadd.f32 0.0, %v1187
        %1189 = vdwg.mxu0
        %v1190 = vadd.f32 %v1114, %v1168
        %v1191 = vadd.f32 %v1115, %v1188
        %v1192 = vld [vmem:[%s195] sm:$0xff]
        %v1193 = vld [vmem:[%s195 + $0x8] sm:$0xf]
        %1196 = vst [vmem:[#allocation1] ss:$2 sm:$0xff] %v1192
        %s1197 = scalar_lea.vmem [#allocation1], 16
        %1198 = vst [vmem:[%s1197] ss:$2 sm:$0xff] %v1193
        %v1199 = vld.sshfl [vmem:[#allocation1] sm:$0xff pattern:$0x75316420]
        %v1200 = vld.sshfl [vmem:[#allocation1 + $0x8] sm:$0xff pattern:$0x75316420]
        %v1201 = vld.sshfl [vmem:[#allocation1 + $0x10] sm:$0xff pattern:$0x75316420]
        %1202 = vrot.lane.b32.xlu0 %v1199, 106
        %v1203 = vpop.permute.xlu0 %1202
        %1204 = vrot.lane.b32.xlu0 %v1200, 106
        %v1205 = vpop.permute.xlu0 %1204
        %1206 = vrot.lane.b32.xlu0 %v1201, 106
        %v1207 = vpop.permute.xlu0 %1206
        %vm1208 = vcmask 867328
        %v1209 = vsel %vm1208, %v1203, %v1205
        %v1210 = vsel %vm1208, %v1205, %v1207
        %v1213 = vsel %vm666, %v1209, 0.0
        %v1214 = vsel %vm667, %v1210, 0.0
        %s1215 = scalar_lea.vmem %s2, 104
        %v1216 = vld [vmem:[%s1215] sm:$0xff]
        %v1218 = vsel %vm248, %v1216, 0
        %v1221 = vsel %vm252, %v1213, 0
        %v1224 = vsel %vm252, %v1214, 0
        %1226 = vmatpush.msra.mxu0 0.0
        %1227 = vmatpush.msra.mxu0 0.0
        %1228 = vmatpush.msra.mxu0 0.0
        %1229 = vmatpush.msra.mxu0 0.0
        %1230 = vmatpush.msra.mxu0 0.0
        %1231 = vmatpush.msra.mxu0 0.0
        %1232 = vmatpush.msra.mxu0 0.0
        %1233 = vmatpush.msra.mxu0 0.0
        %1234 = vmatpush.msra.mxu0 0.0
        %1235 = vmatpush.msra.mxu0 0.0
        %1236 = vmatpush.msra.mxu0 0.0
        %1237 = vmatpush.msra.mxu0 0.0
        %1238 = vmatpush.msra.mxu0 0.0
        %1239 = vmatpush.msra.mxu0 0.0
        %1240 = vmatpush.msra.mxu0 0.0
        %1241 = vmatpush.msra.mxu0 %v1221
        %1242 = vmatmul.f32.gmra.mxu0 %v1218
        %v1243 = vpop.f32.mrf.mxu0
        %v1244 = vadd.f32 0.0, %v1243
        %1245 = vdwg.mxu0
        %1246 = vmatpush.msra.mxu0 0.0
        %1247 = vmatpush.msra.mxu0 0.0
        %1248 = vmatpush.msra.mxu0 0.0
        %1249 = vmatpush.msra.mxu0 0.0
        %1250 = vmatpush.msra.mxu0 0.0
        %1251 = vmatpush.msra.mxu0 0.0
        %1252 = vmatpush.msra.mxu0 0.0
        %1253 = vmatpush.msra.mxu0 0.0
        %1254 = vmatpush.msra.mxu0 0.0
        %1255 = vmatpush.msra.mxu0 0.0
        %1256 = vmatpush.msra.mxu0 0.0
        %1257 = vmatpush.msra.mxu0 0.0
        %1258 = vmatpush.msra.mxu0 0.0
        %1259 = vmatpush.msra.mxu0 0.0
        %1260 = vmatpush.msra.mxu0 0.0
        %1261 = vmatpush.msra.mxu0 %v1224
        %1262 = vmatmul.f32.gmra.mxu0 %v1218
        %v1263 = vpop.f32.mrf.mxu0
        %v1264 = vadd.f32 0.0, %v1263
        %1265 = vdwg.mxu0
        %v1266 = vadd.f32 %v1190, %v1244
        %v1267 = vadd.f32 %v1191, %v1264
        %v1268 = vld [vmem:[%s195] sm:$0xff]
        %v1269 = vld [vmem:[%s195 + $0x8] sm:$0xf]
        %1272 = vst [vmem:[#allocation1] ss:$2 sm:$0xff] %v1268
        %s1273 = scalar_lea.vmem [#allocation1], 16
        %1274 = vst [vmem:[%s1273] ss:$2 sm:$0xff] %v1269
        %v1275 = vld.sshfl [vmem:[#allocation1] sm:$0xff pattern:$0x75316420]
        %v1276 = vld.sshfl [vmem:[#allocation1 + $0x8] sm:$0xff pattern:$0x75316420]
        %v1277 = vld.sshfl [vmem:[#allocation1 + $0x10] sm:$0xff pattern:$0x75316420]
        %1278 = vrot.lane.b32.xlu0 %v1275, 96
        %v1279 = vpop.permute.xlu0 %1278
        %1280 = vrot.lane.b32.xlu0 %v1276, 96
        %v1281 = vpop.permute.xlu0 %1280
        %1282 = vrot.lane.b32.xlu0 %v1277, 96
        %v1283 = vpop.permute.xlu0 %1282
        %vm1284 = vcmask 785408
        %v1285 = vsel %vm1284, %v1279, %v1281
        %v1286 = vsel %vm1284, %v1281, %v1283
        %v1289 = vsel %vm207, %v1285, 0.0
        %v1290 = vsel %vm208, %v1286, 0.0
        %s1291 = scalar_lea.vmem %s2, 112
        %v1292 = vld [vmem:[%s1291] sm:$0xff]
        %v1294 = vsel %vm248, %v1292, 0
        %v1297 = vsel %vm252, %v1289, 0
        %v1300 = vsel %vm252, %v1290, 0
        %1302 = vmatpush.msra.mxu0 0.0
        %1303 = vmatpush.msra.mxu0 0.0
        %1304 = vmatpush.msra.mxu0 0.0
        %1305 = vmatpush.msra.mxu0 0.0
        %1306 = vmatpush.msra.mxu0 0.0
        %1307 = vmatpush.msra.mxu0 0.0
        %1308 = vmatpush.msra.mxu0 0.0
        %1309 = vmatpush.msra.mxu0 0.0
        %1310 = vmatpush.msra.mxu0 0.0
        %1311 = vmatpush.msra.mxu0 0.0
        %1312 = vmatpush.msra.mxu0 0.0
        %1313 = vmatpush.msra.mxu0 0.0
        %1314 = vmatpush.msra.mxu0 0.0
        %1315 = vmatpush.msra.mxu0 0.0
        %1316 = vmatpush.msra.mxu0 0.0
        %1317 = vmatpush.msra.mxu0 %v1297
        %1318 = vmatmul.f32.gmra.mxu0 %v1294
        %v1319 = vpop.f32.mrf.mxu0
        %v1320 = vadd.f32 0.0, %v1319
        %1321 = vdwg.mxu0
        %1322 = vmatpush.msra.mxu0 0.0
        %1323 = vmatpush.msra.mxu0 0.0
        %1324 = vmatpush.msra.mxu0 0.0
        %1325 = vmatpush.msra.mxu0 0.0
        %1326 = vmatpush.msra.mxu0 0.0
        %1327 = vmatpush.msra.mxu0 0.0
        %1328 = vmatpush.msra.mxu0 0.0
        %1329 = vmatpush.msra.mxu0 0.0
        %1330 = vmatpush.msra.mxu0 0.0
        %1331 = vmatpush.msra.mxu0 0.0
        %1332 = vmatpush.msra.mxu0 0.0
        %1333 = vmatpush.msra.mxu0 0.0
        %1334 = vmatpush.msra.mxu0 0.0
        %1335 = vmatpush.msra.mxu0 0.0
        %1336 = vmatpush.msra.mxu0 0.0
        %1337 = vmatpush.msra.mxu0 %v1300
        %1338 = vmatmul.f32.gmra.mxu0 %v1294
        %v1339 = vpop.f32.mrf.mxu0
        %v1340 = vadd.f32 0.0, %v1339
        %1341 = vdwg.mxu0
        %v1342 = vadd.f32 %v1266, %v1320
        %v1343 = vadd.f32 %v1267, %v1340
        %v1344 = vld [vmem:[%s195] sm:$0xff]
        %v1345 = vld [vmem:[%s195 + $0x8] sm:$0xf]
        %1348 = vst [vmem:[#allocation1] ss:$2 sm:$0xff] %v1344
        %s1349 = scalar_lea.vmem [#allocation1], 16
        %1350 = vst [vmem:[%s1349] ss:$2 sm:$0xff] %v1345
        %v1351 = vld.sshfl [vmem:[#allocation1] sm:$0xff pattern:$0x75316420]
        %v1352 = vld.sshfl [vmem:[#allocation1 + $0x8] sm:$0xff pattern:$0x75316420]
        %v1353 = vld.sshfl [vmem:[#allocation1 + $0x10] sm:$0xff pattern:$0x75316420]
        %1354 = vrot.lane.b32.xlu0 %v1351, 95
        %v1355 = vpop.permute.xlu0 %1354
        %1356 = vrot.lane.b32.xlu0 %v1352, 95
        %v1357 = vpop.permute.xlu0 %1356
        %1358 = vrot.lane.b32.xlu0 %v1353, 95
        %v1359 = vpop.permute.xlu0 %1358
        %vm1360 = vcmask 777216
        %v1361 = vsel %vm1360, %v1355, %v1357
        %v1362 = vsel %vm1360, %v1357, %v1359
        %v1365 = vsel %vm223, %v1361, 0.0
        %v1366 = vsel %vm224, %v1362, 0.0
        %s1367 = scalar_lea.vmem %s2, 120
        %v1368 = vld [vmem:[%s1367] sm:$0xff]
        %v1370 = vsel %vm248, %v1368, 0
        %v1373 = vsel %vm252, %v1365, 0
        %v1376 = vsel %vm252, %v1366, 0
        %1378 = vmatpush.msra.mxu0 0.0
        %1379 = vmatpush.msra.mxu0 0.0
        %1380 = vmatpush.msra.mxu0 0.0
        %1381 = vmatpush.msra.mxu0 0.0
        %1382 = vmatpush.msra.mxu0 0.0
        %1383 = vmatpush.msra.mxu0 0.0
        %1384 = vmatpush.msra.mxu0 0.0
        %1385 = vmatpush.msra.mxu0 0.0
        %1386 = vmatpush.msra.mxu0 0.0
        %1387 = vmatpush.msra.mxu0 0.0
        %1388 = vmatpush.msra.mxu0 0.0
        %1389 = vmatpush.msra.mxu0 0.0
        %1390 = vmatpush.msra.mxu0 0.0
        %1391 = vmatpush.msra.mxu0 0.0
        %1392 = vmatpush.msra.mxu0 0.0
        %1393 = vmatpush.msra.mxu0 %v1373
        %1394 = vmatmul.f32.gmra.mxu0 %v1370
        %v1395 = vpop.f32.mrf.mxu0
        %v1396 = vadd.f32 0.0, %v1395
        %1397 = vdwg.mxu0
        %1398 = vmatpush.msra.mxu0 0.0
        %1399 = vmatpush.msra.mxu0 0.0
        %1400 = vmatpush.msra.mxu0 0.0
        %1401 = vmatpush.msra.mxu0 0.0
        %1402 = vmatpush.msra.mxu0 0.0
        %1403 = vmatpush.msra.mxu0 0.0
        %1404 = vmatpush.msra.mxu0 0.0
        %1405 = vmatpush.msra.mxu0 0.0
        %1406 = vmatpush.msra.mxu0 0.0
        %1407 = vmatpush.msra.mxu0 0.0
        %1408 = vmatpush.msra.mxu0 0.0
        %1409 = vmatpush.msra.mxu0 0.0
        %1410 = vmatpush.msra.mxu0 0.0
        %1411 = vmatpush.msra.mxu0 0.0
        %1412 = vmatpush.msra.mxu0 0.0
        %1413 = vmatpush.msra.mxu0 %v1376
        %1414 = vmatmul.f32.gmra.mxu0 %v1370
        %v1415 = vpop.f32.mrf.mxu0
        %v1416 = vadd.f32 0.0, %v1415
        %1417 = vdwg.mxu0
        %v1418 = vadd.f32 %v1342, %v1396
        %v1419 = vadd.f32 %v1343, %v1416
        %v1420 = vld [vmem:[%s195] sm:$0xff]
        %v1421 = vld [vmem:[%s195 + $0x8] sm:$0xf]
        %1424 = vst [vmem:[#allocation1] ss:$2 sm:$0xff] %v1420
        %s1425 = scalar_lea.vmem [#allocation1], 16
        %1426 = vst [vmem:[%s1425] ss:$2 sm:$0xff] %v1421
        %v1427 = vld.sshfl [vmem:[#allocation1] sm:$0xff pattern:$0x75316420]
        %v1428 = vld.sshfl [vmem:[#allocation1 + $0x8] sm:$0xff pattern:$0x75316420]
        %v1429 = vld.sshfl [vmem:[#allocation1 + $0x10] sm:$0xff pattern:$0x75316420]
        %1430 = vrot.lane.b32.xlu0 %v1427, 94
        %v1431 = vpop.permute.xlu0 %1430
        %1432 = vrot.lane.b32.xlu0 %v1428, 94
        %v1433 = vpop.permute.xlu0 %1432
        %1434 = vrot.lane.b32.xlu0 %v1429, 94
        %v1435 = vpop.permute.xlu0 %1434
        %vm1436 = vcmask 769024
        %v1437 = vsel %vm1436, %v1431, %v1433
        %v1438 = vsel %vm1436, %v1433, %v1435
        %v1441 = vsel %vm353, %v1437, 0.0
        %v1442 = vsel %vm354, %v1438, 0.0
        %s1443 = scalar_lea.vmem %s2, 128
        %v1444 = vld [vmem:[%s1443] sm:$0xff]
        %v1446 = vsel %vm248, %v1444, 0
        %v1449 = vsel %vm252, %v1441, 0
        %v1452 = vsel %vm252, %v1442, 0
        %1454 = vmatpush.msra.mxu0 0.0
        %1455 = vmatpush.msra.mxu0 0.0
        %1456 = vmatpush.msra.mxu0 0.0
        %1457 = vmatpush.msra.mxu0 0.0
        %1458 = vmatpush.msra.mxu0 0.0
        %1459 = vmatpush.msra.mxu0 0.0
        %1460 = vmatpush.msra.mxu0 0.0
        %1461 = vmatpush.msra.mxu0 0.0
        %1462 = vmatpush.msra.mxu0 0.0
        %1463 = vmatpush.msra.mxu0 0.0
        %1464 = vmatpush.msra.mxu0 0.0
        %1465 = vmatpush.msra.mxu0 0.0
        %1466 = vmatpush.msra.mxu0 0.0
        %1467 = vmatpush.msra.mxu0 0.0
        %1468 = vmatpush.msra.mxu0 0.0
        %1469 = vmatpush.msra.mxu0 %v1449
        %1470 = vmatmul.f32.gmra.mxu0 %v1446
        %v1471 = vpop.f32.mrf.mxu0
        %v1472 = vadd.f32 0.0, %v1471
        %1473 = vdwg.mxu0
        %1474 = vmatpush.msra.mxu0 0.0
        %1475 = vmatpush.msra.mxu0 0.0
        %1476 = vmatpush.msra.mxu0 0.0
        %1477 = vmatpush.msra.mxu0 0.0
        %1478 = vmatpush.msra.mxu0 0.0
        %1479 = vmatpush.msra.mxu0 0.0
        %1480 = vmatpush.msra.mxu0 0.0
        %1481 = vmatpush.msra.mxu0 0.0
        %1482 = vmatpush.msra.mxu0 0.0
        %1483 = vmatpush.msra.mxu0 0.0
        %1484 = vmatpush.msra.mxu0 0.0
        %1485 = vmatpush.msra.mxu0 0.0
        %1486 = vmatpush.msra.mxu0 0.0
        %1487 = vmatpush.msra.mxu0 0.0
        %1488 = vmatpush.msra.mxu0 0.0
        %1489 = vmatpush.msra.mxu0 %v1452
        %1490 = vmatmul.f32.gmra.mxu0 %v1446
        %v1491 = vpop.f32.mrf.mxu0
        %v1492 = vadd.f32 0.0, %v1491
        %1493 = vdwg.mxu0
        %v1494 = vadd.f32 %v1418, %v1472
        %v1495 = vadd.f32 %v1419, %v1492
        %v1496 = vld [vmem:[%s195] sm:$0xff]
        %v1497 = vld [vmem:[%s195 + $0x8] sm:$0xf]
        %s1498 = scalar_lea.vmem %s2, 136
        %v1499 = vld [vmem:[%s1498] sm:$0xff]
        %1502 = vst [vmem:[#allocation1] ss:$2 sm:$0xff] %v1496
        %s1503 = scalar_lea.vmem [#allocation1], 16
        %1504 = vst [vmem:[%s1503] ss:$2 sm:$0xff] %v1497
        %v1505 = vld.sshfl [vmem:[#allocation1] sm:$0xff pattern:$0x75316420]
        %v1506 = vld.sshfl [vmem:[#allocation1 + $0x8] sm:$0xff pattern:$0x75316420]
        %v1507 = vld.sshfl [vmem:[#allocation1 + $0x10] sm:$0xff pattern:$0x75316420]
        %1508 = vrot.lane.b32.xlu0 %v1505, 93
        %v1509 = vpop.permute.xlu0 %1508
        %1510 = vrot.lane.b32.xlu0 %v1506, 93
        %v1511 = vpop.permute.xlu0 %1510
        %1512 = vrot.lane.b32.xlu0 %v1507, 93
        %v1513 = vpop.permute.xlu0 %1512
        %vm1514 = vcmask 760832
        %v1515 = vsel %vm1514, %v1509, %v1511
        %v1516 = vsel %vm1514, %v1511, %v1513
        %v1518 = vsel %vm248, %v1499, 0
        %v1520 = vsel %vm252, %v1515, 0
        %v1522 = vsel %vm252, %v1516, 0
        %1524 = vmatpush.msra.mxu0 0.0
        %1525 = vmatpush.msra.mxu0 0.0
        %1526 = vmatpush.msra.mxu0 0.0
        %1527 = vmatpush.msra.mxu0 0.0
        %1528 = vmatpush.msra.mxu0 0.0
        %1529 = vmatpush.msra.mxu0 0.0
        %1530 = vmatpush.msra.mxu0 0.0
        %1531 = vmatpush.msra.mxu0 0.0
        %1532 = vmatpush.msra.mxu0 0.0
        %1533 = vmatpush.msra.mxu0 0.0
        %1534 = vmatpush.msra.mxu0 0.0
        %1535 = vmatpush.msra.mxu0 0.0
        %1536 = vmatpush.msra.mxu0 0.0
        %1537 = vmatpush.msra.mxu0 0.0
        %1538 = vmatpush.msra.mxu0 0.0
        %1539 = vmatpush.msra.mxu0 %v1520
        %1540 = vmatmul.f32.gmra.mxu0 %v1518
        %v1541 = vpop.f32.mrf.mxu0
        %v1542 = vadd.f32 0.0, %v1541
        %1543 = vdwg.mxu0
        %1544 = vmatpush.msra.mxu0 0.0
        %1545 = vmatpush.msra.mxu0 0.0
        %1546 = vmatpush.msra.mxu0 0.0
        %1547 = vmatpush.msra.mxu0 0.0
        %1548 = vmatpush.msra.mxu0 0.0
        %1549 = vmatpush.msra.mxu0 0.0
        %1550 = vmatpush.msra.mxu0 0.0
        %1551 = vmatpush.msra.mxu0 0.0
        %1552 = vmatpush.msra.mxu0 0.0
        %1553 = vmatpush.msra.mxu0 0.0
        %1554 = vmatpush.msra.mxu0 0.0
        %1555 = vmatpush.msra.mxu0 0.0
        %1556 = vmatpush.msra.mxu0 0.0
        %1557 = vmatpush.msra.mxu0 0.0
        %1558 = vmatpush.msra.mxu0 0.0
        %1559 = vmatpush.msra.mxu0 %v1522
        %1560 = vmatmul.f32.gmra.mxu0 %v1518
        %v1561 = vpop.f32.mrf.mxu0
        %v1562 = vadd.f32 0.0, %v1561
        %1563 = vdwg.mxu0
        %v1564 = vadd.f32 %v1494, %v1542
        %v1565 = vadd.f32 %v1495, %v1562
        %v1566 = vld [vmem:[%s195] sm:$0xff]
        %v1567 = vld [vmem:[%s195 + $0x8] sm:$0xf]
        %1570 = vst [vmem:[#allocation1] ss:$2 sm:$0xff] %v1566
        %s1571 = scalar_lea.vmem [#allocation1], 16
        %1572 = vst [vmem:[%s1571] ss:$2 sm:$0xff] %v1567
        %v1573 = vld.sshfl [vmem:[#allocation1] sm:$0xff pattern:$0x75316420]
        %v1574 = vld.sshfl [vmem:[#allocation1 + $0x8] sm:$0xff pattern:$0x75316420]
        %v1575 = vld.sshfl [vmem:[#allocation1 + $0x10] sm:$0xff pattern:$0x75316420]
        %1576 = vrot.lane.b32.xlu0 %v1573, 92
        %v1577 = vpop.permute.xlu0 %1576
        %1578 = vrot.lane.b32.xlu0 %v1574, 92
        %v1579 = vpop.permute.xlu0 %1578
        %1580 = vrot.lane.b32.xlu0 %v1575, 92
        %v1581 = vpop.permute.xlu0 %1580
        %vm1582 = vcmask 752640
        %v1583 = vsel %vm1582, %v1577, %v1579
        %v1584 = vsel %vm1582, %v1579, %v1581
        %v1587 = vsel %vm504, %v1583, 0.0
        %v1588 = vsel %vm505, %v1584, 0.0
        %s1589 = scalar_lea.vmem %s2, 144
        %v1590 = vld [vmem:[%s1589] sm:$0xff]
        %v1592 = vsel %vm248, %v1590, 0
        %v1595 = vsel %vm252, %v1587, 0
        %v1598 = vsel %vm252, %v1588, 0
        %1600 = vmatpush.msra.mxu0 0.0
        %1601 = vmatpush.msra.mxu0 0.0
        %1602 = vmatpush.msra.mxu0 0.0
        %1603 = vmatpush.msra.mxu0 0.0
        %1604 = vmatpush.msra.mxu0 0.0
        %1605 = vmatpush.msra.mxu0 0.0
        %1606 = vmatpush.msra.mxu0 0.0
        %1607 = vmatpush.msra.mxu0 0.0
        %1608 = vmatpush.msra.mxu0 0.0
        %1609 = vmatpush.msra.mxu0 0.0
        %1610 = vmatpush.msra.mxu0 0.0
        %1611 = vmatpush.msra.mxu0 0.0
        %1612 = vmatpush.msra.mxu0 0.0
        %1613 = vmatpush.msra.mxu0 0.0
        %1614 = vmatpush.msra.mxu0 0.0
        %1615 = vmatpush.msra.mxu0 %v1595
        %1616 = vmatmul.f32.gmra.mxu0 %v1592
        %v1617 = vpop.f32.mrf.mxu0
        %v1618 = vadd.f32 0.0, %v1617
        %1619 = vdwg.mxu0
        %1620 = vmatpush.msra.mxu0 0.0
        %1621 = vmatpush.msra.mxu0 0.0
        %1622 = vmatpush.msra.mxu0 0.0
        %1623 = vmatpush.msra.mxu0 0.0
        %1624 = vmatpush.msra.mxu0 0.0
        %1625 = vmatpush.msra.mxu0 0.0
        %1626 = vmatpush.msra.mxu0 0.0
        %1627 = vmatpush.msra.mxu0 0.0
        %1628 = vmatpush.msra.mxu0 0.0
        %1629 = vmatpush.msra.mxu0 0.0
        %1630 = vmatpush.msra.mxu0 0.0
        %1631 = vmatpush.msra.mxu0 0.0
        %1632 = vmatpush.msra.mxu0 0.0
        %1633 = vmatpush.msra.mxu0 0.0
        %1634 = vmatpush.msra.mxu0 0.0
        %1635 = vmatpush.msra.mxu0 %v1598
        %1636 = vmatmul.f32.gmra.mxu0 %v1592
        %v1637 = vpop.f32.mrf.mxu0
        %v1638 = vadd.f32 0.0, %v1637
        %1639 = vdwg.mxu0
        %v1640 = vadd.f32 %v1564, %v1618
        %v1641 = vadd.f32 %v1565, %v1638
        %v1642 = vld [vmem:[%s195] sm:$0xff]
        %v1643 = vld [vmem:[%s195 + $0x8] sm:$0xf]
        %1646 = vst [vmem:[#allocation1] ss:$2 sm:$0xff] %v1642
        %s1647 = scalar_lea.vmem [#allocation1], 16
        %1648 = vst [vmem:[%s1647] ss:$2 sm:$0xff] %v1643
        %v1649 = vld.sshfl [vmem:[#allocation1] sm:$0xff pattern:$0x75316420]
        %v1650 = vld.sshfl [vmem:[#allocation1 + $0x8] sm:$0xff pattern:$0x75316420]
        %v1651 = vld.sshfl [vmem:[#allocation1 + $0x10] sm:$0xff pattern:$0x75316420]
        %1652 = vrot.lane.b32.xlu0 %v1649, 91
        %v1653 = vpop.permute.xlu0 %1652
        %1654 = vrot.lane.b32.xlu0 %v1650, 91
        %v1655 = vpop.permute.xlu0 %1654
        %1656 = vrot.lane.b32.xlu0 %v1651, 91
        %v1657 = vpop.permute.xlu0 %1656
        %vm1658 = vcmask 744448
        %v1659 = vsel %vm1658, %v1653, %v1655
        %v1660 = vsel %vm1658, %v1655, %v1657
        %v1663 = vsel %vm585, %v1659, 0.0
        %v1664 = vsel %vm586, %v1660, 0.0
        %s1665 = scalar_lea.vmem %s2, 152
        %v1666 = vld [vmem:[%s1665] sm:$0xff]
        %v1668 = vsel %vm248, %v1666, 0
        %v1671 = vsel %vm252, %v1663, 0
        %v1674 = vsel %vm252, %v1664, 0
        %1676 = vmatpush.msra.mxu0 0.0
        %1677 = vmatpush.msra.mxu0 0.0
        %1678 = vmatpush.msra.mxu0 0.0
        %1679 = vmatpush.msra.mxu0 0.0
        %1680 = vmatpush.msra.mxu0 0.0
        %1681 = vmatpush.msra.mxu0 0.0
        %1682 = vmatpush.msra.mxu0 0.0
        %1683 = vmatpush.msra.mxu0 0.0
        %1684 = vmatpush.msra.mxu0 0.0
        %1685 = vmatpush.msra.mxu0 0.0
        %1686 = vmatpush.msra.mxu0 0.0
        %1687 = vmatpush.msra.mxu0 0.0
        %1688 = vmatpush.msra.mxu0 0.0
        %1689 = vmatpush.msra.mxu0 0.0
        %1690 = vmatpush.msra.mxu0 0.0
        %1691 = vmatpush.msra.mxu0 %v1671
        %1692 = vmatmul.f32.gmra.mxu0 %v1668
        %v1693 = vpop.f32.mrf.mxu0
        %v1694 = vadd.f32 0.0, %v1693
        %1695 = vdwg.mxu0
        %1696 = vmatpush.msra.mxu0 0.0
        %1697 = vmatpush.msra.mxu0 0.0
        %1698 = vmatpush.msra.mxu0 0.0
        %1699 = vmatpush.msra.mxu0 0.0
        %1700 = vmatpush.msra.mxu0 0.0
        %1701 = vmatpush.msra.mxu0 0.0
        %1702 = vmatpush.msra.mxu0 0.0
        %1703 = vmatpush.msra.mxu0 0.0
        %1704 = vmatpush.msra.mxu0 0.0
        %1705 = vmatpush.msra.mxu0 0.0
        %1706 = vmatpush.msra.mxu0 0.0
        %1707 = vmatpush.msra.mxu0 0.0
        %1708 = vmatpush.msra.mxu0 0.0
        %1709 = vmatpush.msra.mxu0 0.0
        %1710 = vmatpush.msra.mxu0 0.0
        %1711 = vmatpush.msra.mxu0 %v1674
        %1712 = vmatmul.f32.gmra.mxu0 %v1668
        %v1713 = vpop.f32.mrf.mxu0
        %v1714 = vadd.f32 0.0, %v1713
        %1715 = vdwg.mxu0
        %v1716 = vadd.f32 %v1640, %v1694
        %v1717 = vadd.f32 %v1641, %v1714
        %v1718 = vld [vmem:[%s195] sm:$0xff]
        %v1719 = vld [vmem:[%s195 + $0x8] sm:$0xf]
        %1722 = vst [vmem:[#allocation1] ss:$2 sm:$0xff] %v1718
        %s1723 = scalar_lea.vmem [#allocation1], 16
        %1724 = vst [vmem:[%s1723] ss:$2 sm:$0xff] %v1719
        %v1725 = vld.sshfl [vmem:[#allocation1] sm:$0xff pattern:$0x75316420]
        %v1726 = vld.sshfl [vmem:[#allocation1 + $0x8] sm:$0xff pattern:$0x75316420]
        %v1727 = vld.sshfl [vmem:[#allocation1 + $0x10] sm:$0xff pattern:$0x75316420]
        %1728 = vrot.lane.b32.xlu0 %v1725, 90
        %v1729 = vpop.permute.xlu0 %1728
        %1730 = vrot.lane.b32.xlu0 %v1726, 90
        %v1731 = vpop.permute.xlu0 %1730
        %1732 = vrot.lane.b32.xlu0 %v1727, 90
        %v1733 = vpop.permute.xlu0 %1732
        %vm1734 = vcmask 736256
        %v1735 = vsel %vm1734, %v1729, %v1731
        %v1736 = vsel %vm1734, %v1731, %v1733
        %v1739 = vsel %vm666, %v1735, 0.0
        %v1740 = vsel %vm667, %v1736, 0.0
        %s1741 = scalar_lea.vmem %s2, 160
        %v1742 = vld [vmem:[%s1741] sm:$0xff]
        %v1744 = vsel %vm248, %v1742, 0
        %v1747 = vsel %vm252, %v1739, 0
        %v1750 = vsel %vm252, %v1740, 0
        %1752 = vmatpush.msra.mxu0 0.0
        %1753 = vmatpush.msra.mxu0 0.0
        %1754 = vmatpush.msra.mxu0 0.0
        %1755 = vmatpush.msra.mxu0 0.0
        %1756 = vmatpush.msra.mxu0 0.0
        %1757 = vmatpush.msra.mxu0 0.0
        %1758 = vmatpush.msra.mxu0 0.0
        %1759 = vmatpush.msra.mxu0 0.0
        %1760 = vmatpush.msra.mxu0 0.0
        %1761 = vmatpush.msra.mxu0 0.0
        %1762 = vmatpush.msra.mxu0 0.0
        %1763 = vmatpush.msra.mxu0 0.0
        %1764 = vmatpush.msra.mxu0 0.0
        %1765 = vmatpush.msra.mxu0 0.0
        %1766 = vmatpush.msra.mxu0 0.0
        %1767 = vmatpush.msra.mxu0 %v1747
        %1768 = vmatmul.f32.gmra.mxu0 %v1744
        %v1769 = vpop.f32.mrf.mxu0
        %v1770 = vadd.f32 0.0, %v1769
        %1771 = vdwg.mxu0
        %1772 = vmatpush.msra.mxu0 0.0
        %1773 = vmatpush.msra.mxu0 0.0
        %1774 = vmatpush.msra.mxu0 0.0
        %1775 = vmatpush.msra.mxu0 0.0
        %1776 = vmatpush.msra.mxu0 0.0
        %1777 = vmatpush.msra.mxu0 0.0
        %1778 = vmatpush.msra.mxu0 0.0
        %1779 = vmatpush.msra.mxu0 0.0
        %1780 = vmatpush.msra.mxu0 0.0
        %1781 = vmatpush.msra.mxu0 0.0
        %1782 = vmatpush.msra.mxu0 0.0
        %1783 = vmatpush.msra.mxu0 0.0
        %1784 = vmatpush.msra.mxu0 0.0
        %1785 = vmatpush.msra.mxu0 0.0
        %1786 = vmatpush.msra.mxu0 0.0
        %1787 = vmatpush.msra.mxu0 %v1750
        %1788 = vmatmul.f32.gmra.mxu0 %v1744
        %v1789 = vpop.f32.mrf.mxu0
        %v1790 = vadd.f32 0.0, %v1789
        %1791 = vdwg.mxu0
        %v1792 = vadd.f32 %v1716, %v1770
        %v1793 = vadd.f32 %v1717, %v1790
        %v1794 = vld [vmem:[%s195] sm:$0xff]
        %v1795 = vld [vmem:[%s195 + $0x8] sm:$0xf]
        %1798 = vst [vmem:[#allocation1] ss:$2 sm:$0xff] %v1794
        %s1799 = scalar_lea.vmem [#allocation1], 16
        %1800 = vst [vmem:[%s1799] ss:$2 sm:$0xff] %v1795
        %v1801 = vld.sshfl [vmem:[#allocation1] sm:$0xff pattern:$0x75316420]
        %v1802 = vld.sshfl [vmem:[#allocation1 + $0x8] sm:$0xff pattern:$0x75316420]
        %v1803 = vld.sshfl [vmem:[#allocation1 + $0x10] sm:$0xff pattern:$0x75316420]
        %1804 = vrot.lane.b32.xlu0 %v1801, 80
        %v1805 = vpop.permute.xlu0 %1804
        %1806 = vrot.lane.b32.xlu0 %v1802, 80
        %v1807 = vpop.permute.xlu0 %1806
        %1808 = vrot.lane.b32.xlu0 %v1803, 80
        %v1809 = vpop.permute.xlu0 %1808
        %vm1810 = vcmask 654336
        %v1811 = vsel %vm1810, %v1805, %v1807
        %v1812 = vsel %vm1810, %v1807, %v1809
        %v1815 = vsel %vm207, %v1811, 0.0
        %v1816 = vsel %vm208, %v1812, 0.0
        %s1817 = scalar_lea.vmem %s2, 168
        %v1818 = vld [vmem:[%s1817] sm:$0xff]
        %v1820 = vsel %vm248, %v1818, 0
        %v1823 = vsel %vm252, %v1815, 0
        %v1826 = vsel %vm252, %v1816, 0
        %1828 = vmatpush.msra.mxu0 0.0
        %1829 = vmatpush.msra.mxu0 0.0
        %1830 = vmatpush.msra.mxu0 0.0
        %1831 = vmatpush.msra.mxu0 0.0
        %1832 = vmatpush.msra.mxu0 0.0
        %1833 = vmatpush.msra.mxu0 0.0
        %1834 = vmatpush.msra.mxu0 0.0
        %1835 = vmatpush.msra.mxu0 0.0
        %1836 = vmatpush.msra.mxu0 0.0
        %1837 = vmatpush.msra.mxu0 0.0
        %1838 = vmatpush.msra.mxu0 0.0
        %1839 = vmatpush.msra.mxu0 0.0
        %1840 = vmatpush.msra.mxu0 0.0
        %1841 = vmatpush.msra.mxu0 0.0
        %1842 = vmatpush.msra.mxu0 0.0
        %1843 = vmatpush.msra.mxu0 %v1823
        %1844 = vmatmul.f32.gmra.mxu0 %v1820
        %v1845 = vpop.f32.mrf.mxu0
        %v1846 = vadd.f32 0.0, %v1845
        %1847 = vdwg.mxu0
        %1848 = vmatpush.msra.mxu0 0.0
        %1849 = vmatpush.msra.mxu0 0.0
        %1850 = vmatpush.msra.mxu0 0.0
        %1851 = vmatpush.msra.mxu0 0.0
        %1852 = vmatpush.msra.mxu0 0.0
        %1853 = vmatpush.msra.mxu0 0.0
        %1854 = vmatpush.msra.mxu0 0.0
        %1855 = vmatpush.msra.mxu0 0.0
        %1856 = vmatpush.msra.mxu0 0.0
        %1857 = vmatpush.msra.mxu0 0.0
        %1858 = vmatpush.msra.mxu0 0.0
        %1859 = vmatpush.msra.mxu0 0.0
        %1860 = vmatpush.msra.mxu0 0.0
        %1861 = vmatpush.msra.mxu0 0.0
        %1862 = vmatpush.msra.mxu0 0.0
        %1863 = vmatpush.msra.mxu0 %v1826
        %1864 = vmatmul.f32.gmra.mxu0 %v1820
        %v1865 = vpop.f32.mrf.mxu0
        %v1866 = vadd.f32 0.0, %v1865
        %1867 = vdwg.mxu0
        %v1868 = vadd.f32 %v1792, %v1846
        %v1869 = vadd.f32 %v1793, %v1866
        %v1870 = vld [vmem:[%s195] sm:$0xff]
        %v1871 = vld [vmem:[%s195 + $0x8] sm:$0xf]
        %1874 = vst [vmem:[#allocation1] ss:$2 sm:$0xff] %v1870
        %s1875 = scalar_lea.vmem [#allocation1], 16
        %1876 = vst [vmem:[%s1875] ss:$2 sm:$0xff] %v1871
        %v1877 = vld.sshfl [vmem:[#allocation1] sm:$0xff pattern:$0x75316420]
        %v1878 = vld.sshfl [vmem:[#allocation1 + $0x8] sm:$0xff pattern:$0x75316420]
        %v1879 = vld.sshfl [vmem:[#allocation1 + $0x10] sm:$0xff pattern:$0x75316420]
        %1880 = vrot.lane.b32.xlu0 %v1877, 79
        %v1881 = vpop.permute.xlu0 %1880
        %1882 = vrot.lane.b32.xlu0 %v1878, 79
        %v1883 = vpop.permute.xlu0 %1882
        %1884 = vrot.lane.b32.xlu0 %v1879, 79
        %v1885 = vpop.permute.xlu0 %1884
        %vm1886 = vcmask 646144
        %v1887 = vsel %vm1886, %v1881, %v1883
        %v1888 = vsel %vm1886, %v1883, %v1885
        %v1891 = vsel %vm223, %v1887, 0.0
        %v1892 = vsel %vm224, %v1888, 0.0
        %s1893 = scalar_lea.vmem %s2, 176
        %v1894 = vld [vmem:[%s1893] sm:$0xff]
        %v1896 = vsel %vm248, %v1894, 0
        %v1899 = vsel %vm252, %v1891, 0
        %v1902 = vsel %vm252, %v1892, 0
        %1904 = vmatpush.msra.mxu0 0.0
        %1905 = vmatpush.msra.mxu0 0.0
        %1906 = vmatpush.msra.mxu0 0.0
        %1907 = vmatpush.msra.mxu0 0.0
        %1908 = vmatpush.msra.mxu0 0.0
        %1909 = vmatpush.msra.mxu0 0.0
        %1910 = vmatpush.msra.mxu0 0.0
        %1911 = vmatpush.msra.mxu0 0.0
        %1912 = vmatpush.msra.mxu0 0.0
        %1913 = vmatpush.msra.mxu0 0.0
        %1914 = vmatpush.msra.mxu0 0.0
        %1915 = vmatpush.msra.mxu0 0.0
        %1916 = vmatpush.msra.mxu0 0.0
        %1917 = vmatpush.msra.mxu0 0.0
        %1918 = vmatpush.msra.mxu0 0.0
        %1919 = vmatpush.msra.mxu0 %v1899
        %1920 = vmatmul.f32.gmra.mxu0 %v1896
        %v1921 = vpop.f32.mrf.mxu0
        %v1922 = vadd.f32 0.0, %v1921
        %1923 = vdwg.mxu0
        %1924 = vmatpush.msra.mxu0 0.0
        %1925 = vmatpush.msra.mxu0 0.0
        %1926 = vmatpush.msra.mxu0 0.0
        %1927 = vmatpush.msra.mxu0 0.0
        %1928 = vmatpush.msra.mxu0 0.0
        %1929 = vmatpush.msra.mxu0 0.0
        %1930 = vmatpush.msra.mxu0 0.0
        %1931 = vmatpush.msra.mxu0 0.0
        %1932 = vmatpush.msra.mxu0 0.0
        %1933 = vmatpush.msra.mxu0 0.0
        %1934 = vmatpush.msra.mxu0 0.0
        %1935 = vmatpush.msra.mxu0 0.0
        %1936 = vmatpush.msra.mxu0 0.0
        %1937 = vmatpush.msra.mxu0 0.0
        %1938 = vmatpush.msra.mxu0 0.0
        %1939 = vmatpush.msra.mxu0 %v1902
        %1940 = vmatmul.f32.gmra.mxu0 %v1896
        %v1941 = vpop.f32.mrf.mxu0
        %v1942 = vadd.f32 0.0, %v1941
        %1943 = vdwg.mxu0
        %v1944 = vadd.f32 %v1868, %v1922
        %v1945 = vadd.f32 %v1869, %v1942
        %v1946 = vld [vmem:[%s195] sm:$0xff]
        %v1947 = vld [vmem:[%s195 + $0x8] sm:$0xf]
        %1950 = vst [vmem:[#allocation1] ss:$2 sm:$0xff] %v1946
        %s1951 = scalar_lea.vmem [#allocation1], 16
        %1952 = vst [vmem:[%s1951] ss:$2 sm:$0xff] %v1947
        %v1953 = vld.sshfl [vmem:[#allocation1] sm:$0xff pattern:$0x75316420]
        %v1954 = vld.sshfl [vmem:[#allocation1 + $0x8] sm:$0xff pattern:$0x75316420]
        %v1955 = vld.sshfl [vmem:[#allocation1 + $0x10] sm:$0xff pattern:$0x75316420]
        %1956 = vrot.lane.b32.xlu0 %v1953, 78
        %v1957 = vpop.permute.xlu0 %1956
        %1958 = vrot.lane.b32.xlu0 %v1954, 78
        %v1959 = vpop.permute.xlu0 %1958
        %1960 = vrot.lane.b32.xlu0 %v1955, 78
        %v1961 = vpop.permute.xlu0 %1960
        %vm1962 = vcmask 637952
        %v1963 = vsel %vm1962, %v1957, %v1959
        %v1964 = vsel %vm1962, %v1959, %v1961
        %v1967 = vsel %vm353, %v1963, 0.0
        %v1968 = vsel %vm354, %v1964, 0.0
        %s1969 = scalar_lea.vmem %s2, 184
        %v1970 = vld [vmem:[%s1969] sm:$0xff]
        %v1972 = vsel %vm248, %v1970, 0
        %v1975 = vsel %vm252, %v1967, 0
        %v1978 = vsel %vm252, %v1968, 0
        %1980 = vmatpush.msra.mxu0 0.0
        %1981 = vmatpush.msra.mxu0 0.0
        %1982 = vmatpush.msra.mxu0 0.0
        %1983 = vmatpush.msra.mxu0 0.0
        %1984 = vmatpush.msra.mxu0 0.0
        %1985 = vmatpush.msra.mxu0 0.0
        %1986 = vmatpush.msra.mxu0 0.0
        %1987 = vmatpush.msra.mxu0 0.0
        %1988 = vmatpush.msra.mxu0 0.0
        %1989 = vmatpush.msra.mxu0 0.0
        %1990 = vmatpush.msra.mxu0 0.0
        %1991 = vmatpush.msra.mxu0 0.0
        %1992 = vmatpush.msra.mxu0 0.0
        %1993 = vmatpush.msra.mxu0 0.0
        %1994 = vmatpush.msra.mxu0 0.0
        %1995 = vmatpush.msra.mxu0 %v1975
        %1996 = vmatmul.f32.gmra.mxu0 %v1972
        %v1997 = vpop.f32.mrf.mxu0
        %v1998 = vadd.f32 0.0, %v1997
        %1999 = vdwg.mxu0
        %2000 = vmatpush.msra.mxu0 0.0
        %2001 = vmatpush.msra.mxu0 0.0
        %2002 = vmatpush.msra.mxu0 0.0
        %2003 = vmatpush.msra.mxu0 0.0
        %2004 = vmatpush.msra.mxu0 0.0
        %2005 = vmatpush.msra.mxu0 0.0
        %2006 = vmatpush.msra.mxu0 0.0
        %2007 = vmatpush.msra.mxu0 0.0
        %2008 = vmatpush.msra.mxu0 0.0
        %2009 = vmatpush.msra.mxu0 0.0
        %2010 = vmatpush.msra.mxu0 0.0
        %2011 = vmatpush.msra.mxu0 0.0
        %2012 = vmatpush.msra.mxu0 0.0
        %2013 = vmatpush.msra.mxu0 0.0
        %2014 = vmatpush.msra.mxu0 0.0
        %2015 = vmatpush.msra.mxu0 %v1978
        %2016 = vmatmul.f32.gmra.mxu0 %v1972
        %v2017 = vpop.f32.mrf.mxu0
        %v2018 = vadd.f32 0.0, %v2017
        %2019 = vdwg.mxu0
        %v2020 = vadd.f32 %v1944, %v1998
        %v2021 = vadd.f32 %v1945, %v2018
        %v2022 = vld [vmem:[%s195] sm:$0xff]
        %v2023 = vld [vmem:[%s195 + $0x8] sm:$0xf]
        %s2024 = scalar_lea.vmem %s2, 192
        %v2025 = vld [vmem:[%s2024] sm:$0xff]
        %2028 = vst [vmem:[#allocation1] ss:$2 sm:$0xff] %v2022
        %s2029 = scalar_lea.vmem [#allocation1], 16
        %2030 = vst [vmem:[%s2029] ss:$2 sm:$0xff] %v2023
        %v2031 = vld.sshfl [vmem:[#allocation1] sm:$0xff pattern:$0x75316420]
        %v2032 = vld.sshfl [vmem:[#allocation1 + $0x8] sm:$0xff pattern:$0x75316420]
        %v2033 = vld.sshfl [vmem:[#allocation1 + $0x10] sm:$0xff pattern:$0x75316420]
        %2034 = vrot.lane.b32.xlu0 %v2031, 77
        %v2035 = vpop.permute.xlu0 %2034
        %2036 = vrot.lane.b32.xlu0 %v2032, 77
        %v2037 = vpop.permute.xlu0 %2036
        %2038 = vrot.lane.b32.xlu0 %v2033, 77
        %v2039 = vpop.permute.xlu0 %2038
        %vm2040 = vcmask 629760
        %v2041 = vsel %vm2040, %v2035, %v2037
        %v2042 = vsel %vm2040, %v2037, %v2039
        %v2044 = vsel %vm248, %v2025, 0
        %v2046 = vsel %vm252, %v2041, 0
        %v2048 = vsel %vm252, %v2042, 0
        %2050 = vmatpush.msra.mxu0 0.0
        %2051 = vmatpush.msra.mxu0 0.0
        %2052 = vmatpush.msra.mxu0 0.0
        %2053 = vmatpush.msra.mxu0 0.0
        %2054 = vmatpush.msra.mxu0 0.0
        %2055 = vmatpush.msra.mxu0 0.0
        %2056 = vmatpush.msra.mxu0 0.0
        %2057 = vmatpush.msra.mxu0 0.0
        %2058 = vmatpush.msra.mxu0 0.0
        %2059 = vmatpush.msra.mxu0 0.0
        %2060 = vmatpush.msra.mxu0 0.0
        %2061 = vmatpush.msra.mxu0 0.0
        %2062 = vmatpush.msra.mxu0 0.0
        %2063 = vmatpush.msra.mxu0 0.0
        %2064 = vmatpush.msra.mxu0 0.0
        %2065 = vmatpush.msra.mxu0 %v2046
        %2066 = vmatmul.f32.gmra.mxu0 %v2044
        %v2067 = vpop.f32.mrf.mxu0
        %v2068 = vadd.f32 0.0, %v2067
        %2069 = vdwg.mxu0
        %2070 = vmatpush.msra.mxu0 0.0
        %2071 = vmatpush.msra.mxu0 0.0
        %2072 = vmatpush.msra.mxu0 0.0
        %2073 = vmatpush.msra.mxu0 0.0
        %2074 = vmatpush.msra.mxu0 0.0
        %2075 = vmatpush.msra.mxu0 0.0
        %2076 = vmatpush.msra.mxu0 0.0
        %2077 = vmatpush.msra.mxu0 0.0
        %2078 = vmatpush.msra.mxu0 0.0
        %2079 = vmatpush.msra.mxu0 0.0
        %2080 = vmatpush.msra.mxu0 0.0
        %2081 = vmatpush.msra.mxu0 0.0
        %2082 = vmatpush.msra.mxu0 0.0
        %2083 = vmatpush.msra.mxu0 0.0
        %2084 = vmatpush.msra.mxu0 0.0
        %2085 = vmatpush.msra.mxu0 %v2048
        %2086 = vmatmul.f32.gmra.mxu0 %v2044
        %v2087 = vpop.f32.mrf.mxu0
        %v2088 = vadd.f32 0.0, %v2087
        %2089 = vdwg.mxu0
        %v2090 = vadd.f32 %v2020, %v2068
        %v2091 = vadd.f32 %v2021, %v2088
        %v2092 = vld [vmem:[%s195] sm:$0xff]
        %v2093 = vld [vmem:[%s195 + $0x8] sm:$0xf]
        %2096 = vst [vmem:[#allocation1] ss:$2 sm:$0xff] %v2092
        %s2097 = scalar_lea.vmem [#allocation1], 16
        %2098 = vst [vmem:[%s2097] ss:$2 sm:$0xff] %v2093
        %v2099 = vld.sshfl [vmem:[#allocation1] sm:$0xff pattern:$0x75316420]
        %v2100 = vld.sshfl [vmem:[#allocation1 + $0x8] sm:$0xff pattern:$0x75316420]
        %v2101 = vld.sshfl [vmem:[#allocation1 + $0x10] sm:$0xff pattern:$0x75316420]
        %2102 = vrot.lane.b32.xlu0 %v2099, 76
        %v2103 = vpop.permute.xlu0 %2102
        %2104 = vrot.lane.b32.xlu0 %v2100, 76
        %v2105 = vpop.permute.xlu0 %2104
        %2106 = vrot.lane.b32.xlu0 %v2101, 76
        %v2107 = vpop.permute.xlu0 %2106
        %vm2108 = vcmask 621568
        %v2109 = vsel %vm2108, %v2103, %v2105
        %v2110 = vsel %vm2108, %v2105, %v2107
        %v2113 = vsel %vm504, %v2109, 0.0
        %v2114 = vsel %vm505, %v2110, 0.0
        %s2115 = scalar_lea.vmem %s2, 200
        %v2116 = vld [vmem:[%s2115] sm:$0xff]
        %v2118 = vsel %vm248, %v2116, 0
        %v2121 = vsel %vm252, %v2113, 0
        %v2124 = vsel %vm252, %v2114, 0
        %2126 = vmatpush.msra.mxu0 0.0
        %2127 = vmatpush.msra.mxu0 0.0
        %2128 = vmatpush.msra.mxu0 0.0
        %2129 = vmatpush.msra.mxu0 0.0
        %2130 = vmatpush.msra.mxu0 0.0
        %2131 = vmatpush.msra.mxu0 0.0
        %2132 = vmatpush.msra.mxu0 0.0
        %2133 = vmatpush.msra.mxu0 0.0
        %2134 = vmatpush.msra.mxu0 0.0
        %2135 = vmatpush.msra.mxu0 0.0
        %2136 = vmatpush.msra.mxu0 0.0
        %2137 = vmatpush.msra.mxu0 0.0
        %2138 = vmatpush.msra.mxu0 0.0
        %2139 = vmatpush.msra.mxu0 0.0
        %2140 = vmatpush.msra.mxu0 0.0
        %2141 = vmatpush.msra.mxu0 %v2121
        %2142 = vmatmul.f32.gmra.mxu0 %v2118
        %v2143 = vpop.f32.mrf.mxu0
        %v2144 = vadd.f32 0.0, %v2143
        %2145 = vdwg.mxu0
        %2146 = vmatpush.msra.mxu0 0.0
        %2147 = vmatpush.msra.mxu0 0.0
        %2148 = vmatpush.msra.mxu0 0.0
        %2149 = vmatpush.msra.mxu0 0.0
        %2150 = vmatpush.msra.mxu0 0.0
        %2151 = vmatpush.msra.mxu0 0.0
        %2152 = vmatpush.msra.mxu0 0.0
        %2153 = vmatpush.msra.mxu0 0.0
        %2154 = vmatpush.msra.mxu0 0.0
        %2155 = vmatpush.msra.mxu0 0.0
        %2156 = vmatpush.msra.mxu0 0.0
        %2157 = vmatpush.msra.mxu0 0.0
        %2158 = vmatpush.msra.mxu0 0.0
        %2159 = vmatpush.msra.mxu0 0.0
        %2160 = vmatpush.msra.mxu0 0.0
        %2161 = vmatpush.msra.mxu0 %v2124
        %2162 = vmatmul.f32.gmra.mxu0 %v2118
        %v2163 = vpop.f32.mrf.mxu0
        %v2164 = vadd.f32 0.0, %v2163
        %2165 = vdwg.mxu0
        %v2166 = vadd.f32 %v2090, %v2144
        %v2167 = vadd.f32 %v2091, %v2164
        %v2168 = vld [vmem:[%s195] sm:$0xff]
        %v2169 = vld [vmem:[%s195 + $0x8] sm:$0xf]
        %2172 = vst [vmem:[#allocation1] ss:$2 sm:$0xff] %v2168
        %s2173 = scalar_lea.vmem [#allocation1], 16
        %2174 = vst [vmem:[%s2173] ss:$2 sm:$0xff] %v2169
        %v2175 = vld.sshfl [vmem:[#allocation1] sm:$0xff pattern:$0x75316420]
        %v2176 = vld.sshfl [vmem:[#allocation1 + $0x8] sm:$0xff pattern:$0x75316420]
        %v2177 = vld.sshfl [vmem:[#allocation1 + $0x10] sm:$0xff pattern:$0x75316420]
        %2178 = vrot.lane.b32.xlu0 %v2175, 75
        %v2179 = vpop.permute.xlu0 %2178
        %2180 = vrot.lane.b32.xlu0 %v2176, 75
        %v2181 = vpop.permute.xlu0 %2180
        %2182 = vrot.lane.b32.xlu0 %v2177, 75
        %v2183 = vpop.permute.xlu0 %2182
        %vm2184 = vcmask 613376
        %v2185 = vsel %vm2184, %v2179, %v2181
        %v2186 = vsel %vm2184, %v2181, %v2183
        %v2189 = vsel %vm585, %v2185, 0.0
        %v2190 = vsel %vm586, %v2186, 0.0
        %s2191 = scalar_lea.vmem %s2, 208
        %v2192 = vld [vmem:[%s2191] sm:$0xff]
        %v2194 = vsel %vm248, %v2192, 0
        %v2197 = vsel %vm252, %v2189, 0
        %v2200 = vsel %vm252, %v2190, 0
        %2202 = vmatpush.msra.mxu0 0.0
        %2203 = vmatpush.msra.mxu0 0.0
        %2204 = vmatpush.msra.mxu0 0.0
        %2205 = vmatpush.msra.mxu0 0.0
        %2206 = vmatpush.msra.mxu0 0.0
        %2207 = vmatpush.msra.mxu0 0.0
        %2208 = vmatpush.msra.mxu0 0.0
        %2209 = vmatpush.msra.mxu0 0.0
        %2210 = vmatpush.msra.mxu0 0.0
        %2211 = vmatpush.msra.mxu0 0.0
        %2212 = vmatpush.msra.mxu0 0.0
        %2213 = vmatpush.msra.mxu0 0.0
        %2214 = vmatpush.msra.mxu0 0.0
        %2215 = vmatpush.msra.mxu0 0.0
        %2216 = vmatpush.msra.mxu0 0.0
        %2217 = vmatpush.msra.mxu0 %v2197
        %2218 = vmatmul.f32.gmra.mxu0 %v2194
        %v2219 = vpop.f32.mrf.mxu0
        %v2220 = vadd.f32 0.0, %v2219
        %2221 = vdwg.mxu0
        %2222 = vmatpush.msra.mxu0 0.0
        %2223 = vmatpush.msra.mxu0 0.0
        %2224 = vmatpush.msra.mxu0 0.0
        %2225 = vmatpush.msra.mxu0 0.0
        %2226 = vmatpush.msra.mxu0 0.0
        %2227 = vmatpush.msra.mxu0 0.0
        %2228 = vmatpush.msra.mxu0 0.0
        %2229 = vmatpush.msra.mxu0 0.0
        %2230 = vmatpush.msra.mxu0 0.0
        %2231 = vmatpush.msra.mxu0 0.0
        %2232 = vmatpush.msra.mxu0 0.0
        %2233 = vmatpush.msra.mxu0 0.0
        %2234 = vmatpush.msra.mxu0 0.0
        %2235 = vmatpush.msra.mxu0 0.0
        %2236 = vmatpush.msra.mxu0 0.0
        %2237 = vmatpush.msra.mxu0 %v2200
        %2238 = vmatmul.f32.gmra.mxu0 %v2194
        %v2239 = vpop.f32.mrf.mxu0
        %v2240 = vadd.f32 0.0, %v2239
        %2241 = vdwg.mxu0
        %v2242 = vadd.f32 %v2166, %v2220
        %v2243 = vadd.f32 %v2167, %v2240
        %v2244 = vld [vmem:[%s195] sm:$0xff]
        %v2245 = vld [vmem:[%s195 + $0x8] sm:$0xf]
        %2248 = vst [vmem:[#allocation1] ss:$2 sm:$0xff] %v2244
        %s2249 = scalar_lea.vmem [#allocation1], 16
        %2250 = vst [vmem:[%s2249] ss:$2 sm:$0xff] %v2245
        %v2251 = vld.sshfl [vmem:[#allocation1] sm:$0xff pattern:$0x75316420]
        %v2252 = vld.sshfl [vmem:[#allocation1 + $0x8] sm:$0xff pattern:$0x75316420]
        %v2253 = vld.sshfl [vmem:[#allocation1 + $0x10] sm:$0xff pattern:$0x75316420]
        %2254 = vrot.lane.b32.xlu0 %v2251, 74
        %v2255 = vpop.permute.xlu0 %2254
        %2256 = vrot.lane.b32.xlu0 %v2252, 74
        %v2257 = vpop.permute.xlu0 %2256
        %2258 = vrot.lane.b32.xlu0 %v2253, 74
        %v2259 = vpop.permute.xlu0 %2258
        %vm2260 = vcmask 605184
        %v2261 = vsel %vm2260, %v2255, %v2257
        %v2262 = vsel %vm2260, %v2257, %v2259
        %v2265 = vsel %vm666, %v2261, 0.0
        %v2266 = vsel %vm667, %v2262, 0.0
        %s2267 = scalar_lea.vmem %s2, 216
        %v2268 = vld [vmem:[%s2267] sm:$0xff]
        %v2270 = vsel %vm248, %v2268, 0
        %v2273 = vsel %vm252, %v2265, 0
        %v2276 = vsel %vm252, %v2266, 0
        %2278 = vmatpush.msra.mxu0 0.0
        %2279 = vmatpush.msra.mxu0 0.0
        %2280 = vmatpush.msra.mxu0 0.0
        %2281 = vmatpush.msra.mxu0 0.0
        %2282 = vmatpush.msra.mxu0 0.0
        %2283 = vmatpush.msra.mxu0 0.0
        %2284 = vmatpush.msra.mxu0 0.0
        %2285 = vmatpush.msra.mxu0 0.0
        %2286 = vmatpush.msra.mxu0 0.0
        %2287 = vmatpush.msra.mxu0 0.0
        %2288 = vmatpush.msra.mxu0 0.0
        %2289 = vmatpush.msra.mxu0 0.0
        %2290 = vmatpush.msra.mxu0 0.0
        %2291 = vmatpush.msra.mxu0 0.0
        %2292 = vmatpush.msra.mxu0 0.0
        %2293 = vmatpush.msra.mxu0 %v2273
        %2294 = vmatmul.f32.gmra.mxu0 %v2270
        %v2295 = vpop.f32.mrf.mxu0
        %v2296 = vadd.f32 0.0, %v2295
        %2297 = vdwg.mxu0
        %2298 = vmatpush.msra.mxu0 0.0
        %2299 = vmatpush.msra.mxu0 0.0
        %2300 = vmatpush.msra.mxu0 0.0
        %2301 = vmatpush.msra.mxu0 0.0
        %2302 = vmatpush.msra.mxu0 0.0
        %2303 = vmatpush.msra.mxu0 0.0
        %2304 = vmatpush.msra.mxu0 0.0
        %2305 = vmatpush.msra.mxu0 0.0
        %2306 = vmatpush.msra.mxu0 0.0
        %2307 = vmatpush.msra.mxu0 0.0
        %2308 = vmatpush.msra.mxu0 0.0
        %2309 = vmatpush.msra.mxu0 0.0
        %2310 = vmatpush.msra.mxu0 0.0
        %2311 = vmatpush.msra.mxu0 0.0
        %2312 = vmatpush.msra.mxu0 0.0
        %2313 = vmatpush.msra.mxu0 %v2276
        %2314 = vmatmul.f32.gmra.mxu0 %v2270
        %v2315 = vpop.f32.mrf.mxu0
        %v2316 = vadd.f32 0.0, %v2315
        %2317 = vdwg.mxu0
        %v2318 = vadd.f32 %v2242, %v2296
        %v2319 = vadd.f32 %v2243, %v2316
        %v2320 = vld [vmem:[%s195] sm:$0xff]
        %v2321 = vld [vmem:[%s195 + $0x8] sm:$0xf]
        %2324 = vst [vmem:[#allocation1] ss:$2 sm:$0xff] %v2320
        %s2325 = scalar_lea.vmem [#allocation1], 16
        %2326 = vst [vmem:[%s2325] ss:$2 sm:$0xff] %v2321
        %v2327 = vld.sshfl [vmem:[#allocation1] sm:$0xff pattern:$0x75316420]
        %v2328 = vld.sshfl [vmem:[#allocation1 + $0x8] sm:$0xff pattern:$0x75316420]
        %v2329 = vld.sshfl [vmem:[#allocation1 + $0x10] sm:$0xff pattern:$0x75316420]
        %2330 = vrot.lane.b32.xlu0 %v2327, 64
        %v2331 = vpop.permute.xlu0 %2330
        %2332 = vrot.lane.b32.xlu0 %v2328, 64
        %v2333 = vpop.permute.xlu0 %2332
        %2334 = vrot.lane.b32.xlu0 %v2329, 64
        %v2335 = vpop.permute.xlu0 %2334
        %vm2336 = vcmask 523264
        %v2337 = vsel %vm2336, %v2331, %v2333
        %v2338 = vsel %vm2336, %v2333, %v2335
        %v2341 = vsel %vm207, %v2337, 0.0
        %v2342 = vsel %vm208, %v2338, 0.0
        %s2343 = scalar_lea.vmem %s2, 224
        %v2344 = vld [vmem:[%s2343] sm:$0xff]
        %v2346 = vsel %vm248, %v2344, 0
        %v2349 = vsel %vm252, %v2341, 0
        %v2352 = vsel %vm252, %v2342, 0
        %2354 = vmatpush.msra.mxu0 0.0
        %2355 = vmatpush.msra.mxu0 0.0
        %2356 = vmatpush.msra.mxu0 0.0
        %2357 = vmatpush.msra.mxu0 0.0
        %2358 = vmatpush.msra.mxu0 0.0
        %2359 = vmatpush.msra.mxu0 0.0
        %2360 = vmatpush.msra.mxu0 0.0
        %2361 = vmatpush.msra.mxu0 0.0
        %2362 = vmatpush.msra.mxu0 0.0
        %2363 = vmatpush.msra.mxu0 0.0
        %2364 = vmatpush.msra.mxu0 0.0
        %2365 = vmatpush.msra.mxu0 0.0
        %2366 = vmatpush.msra.mxu0 0.0
        %2367 = vmatpush.msra.mxu0 0.0
        %2368 = vmatpush.msra.mxu0 0.0
        %2369 = vmatpush.msra.mxu0 %v2349
        %2370 = vmatmul.f32.gmra.mxu0 %v2346
        %v2371 = vpop.f32.mrf.mxu0
        %v2372 = vadd.f32 0.0, %v2371
        %2373 = vdwg.mxu0
        %2374 = vmatpush.msra.mxu0 0.0
        %2375 = vmatpush.msra.mxu0 0.0
        %2376 = vmatpush.msra.mxu0 0.0
        %2377 = vmatpush.msra.mxu0 0.0
        %2378 = vmatpush.msra.mxu0 0.0
        %2379 = vmatpush.msra.mxu0 0.0
        %2380 = vmatpush.msra.mxu0 0.0
        %2381 = vmatpush.msra.mxu0 0.0
        %2382 = vmatpush.msra.mxu0 0.0
        %2383 = vmatpush.msra.mxu0 0.0
        %2384 = vmatpush.msra.mxu0 0.0
        %2385 = vmatpush.msra.mxu0 0.0
        %2386 = vmatpush.msra.mxu0 0.0
        %2387 = vmatpush.msra.mxu0 0.0
        %2388 = vmatpush.msra.mxu0 0.0
        %2389 = vmatpush.msra.mxu0 %v2352
        %2390 = vmatmul.f32.gmra.mxu0 %v2346
        %v2391 = vpop.f32.mrf.mxu0
        %v2392 = vadd.f32 0.0, %v2391
        %2393 = vdwg.mxu0
        %v2394 = vadd.f32 %v2318, %v2372
        %v2395 = vadd.f32 %v2319, %v2392
        %v2396 = vld [vmem:[%s195] sm:$0xff]
        %v2397 = vld [vmem:[%s195 + $0x8] sm:$0xf]
        %2400 = vst [vmem:[#allocation1] ss:$2 sm:$0xff] %v2396
        %s2401 = scalar_lea.vmem [#allocation1], 16
        %2402 = vst [vmem:[%s2401] ss:$2 sm:$0xff] %v2397
        %v2403 = vld.sshfl [vmem:[#allocation1] sm:$0xff pattern:$0x75316420]
        %v2404 = vld.sshfl [vmem:[#allocation1 + $0x8] sm:$0xff pattern:$0x75316420]
        %v2405 = vld.sshfl [vmem:[#allocation1 + $0x10] sm:$0xff pattern:$0x75316420]
        %2406 = vrot.lane.b32.xlu0 %v2403, 63
        %v2407 = vpop.permute.xlu0 %2406
        %2408 = vrot.lane.b32.xlu0 %v2404, 63
        %v2409 = vpop.permute.xlu0 %2408
        %2410 = vrot.lane.b32.xlu0 %v2405, 63
        %v2411 = vpop.permute.xlu0 %2410
        %vm2412 = vcmask 515072
        %v2413 = vsel %vm2412, %v2407, %v2409
        %v2414 = vsel %vm2412, %v2409, %v2411
        %v2417 = vsel %vm223, %v2413, 0.0
        %v2418 = vsel %vm224, %v2414, 0.0
        %s2419 = scalar_lea.vmem %s2, 232
        %v2420 = vld [vmem:[%s2419] sm:$0xff]
        %v2422 = vsel %vm248, %v2420, 0
        %v2425 = vsel %vm252, %v2417, 0
        %v2428 = vsel %vm252, %v2418, 0
        %2430 = vmatpush.msra.mxu0 0.0
        %2431 = vmatpush.msra.mxu0 0.0
        %2432 = vmatpush.msra.mxu0 0.0
        %2433 = vmatpush.msra.mxu0 0.0
        %2434 = vmatpush.msra.mxu0 0.0
        %2435 = vmatpush.msra.mxu0 0.0
        %2436 = vmatpush.msra.mxu0 0.0
        %2437 = vmatpush.msra.mxu0 0.0
        %2438 = vmatpush.msra.mxu0 0.0
        %2439 = vmatpush.msra.mxu0 0.0
        %2440 = vmatpush.msra.mxu0 0.0
        %2441 = vmatpush.msra.mxu0 0.0
        %2442 = vmatpush.msra.mxu0 0.0
        %2443 = vmatpush.msra.mxu0 0.0
        %2444 = vmatpush.msra.mxu0 0.0
        %2445 = vmatpush.msra.mxu0 %v2425
        %2446 = vmatmul.f32.gmra.mxu0 %v2422
        %v2447 = vpop.f32.mrf.mxu0
        %v2448 = vadd.f32 0.0, %v2447
        %2449 = vdwg.mxu0
        %2450 = vmatpush.msra.mxu0 0.0
        %2451 = vmatpush.msra.mxu0 0.0
        %2452 = vmatpush.msra.mxu0 0.0
        %2453 = vmatpush.msra.mxu0 0.0
        %2454 = vmatpush.msra.mxu0 0.0
        %2455 = vmatpush.msra.mxu0 0.0
        %2456 = vmatpush.msra.mxu0 0.0
        %2457 = vmatpush.msra.mxu0 0.0
        %2458 = vmatpush.msra.mxu0 0.0
        %2459 = vmatpush.msra.mxu0 0.0
        %2460 = vmatpush.msra.mxu0 0.0
        %2461 = vmatpush.msra.mxu0 0.0
        %2462 = vmatpush.msra.mxu0 0.0
        %2463 = vmatpush.msra.mxu0 0.0
        %2464 = vmatpush.msra.mxu0 0.0
        %2465 = vmatpush.msra.mxu0 %v2428
        %2466 = vmatmul.f32.gmra.mxu0 %v2422
        %v2467 = vpop.f32.mrf.mxu0
        %v2468 = vadd.f32 0.0, %v2467
        %2469 = vdwg.mxu0
        %v2470 = vadd.f32 %v2394, %v2448
        %v2471 = vadd.f32 %v2395, %v2468
        %v2472 = vld [vmem:[%s195] sm:$0xff]
        %v2473 = vld [vmem:[%s195 + $0x8] sm:$0xf]
        %2476 = vst [vmem:[#allocation1] ss:$2 sm:$0xff] %v2472
        %s2477 = scalar_lea.vmem [#allocation1], 16
        %2478 = vst [vmem:[%s2477] ss:$2 sm:$0xff] %v2473
        %v2479 = vld.sshfl [vmem:[#allocation1] sm:$0xff pattern:$0x75316420]
        %v2480 = vld.sshfl [vmem:[#allocation1 + $0x8] sm:$0xff pattern:$0x75316420]
        %v2481 = vld.sshfl [vmem:[#allocation1 + $0x10] sm:$0xff pattern:$0x75316420]
        %2482 = vrot.lane.b32.xlu0 %v2479, 62
        %v2483 = vpop.permute.xlu0 %2482
        %2484 = vrot.lane.b32.xlu0 %v2480, 62
        %v2485 = vpop.permute.xlu0 %2484
        %2486 = vrot.lane.b32.xlu0 %v2481, 62
        %v2487 = vpop.permute.xlu0 %2486
        %vm2488 = vcmask 506880
        %v2489 = vsel %vm2488, %v2483, %v2485
        %v2490 = vsel %vm2488, %v2485, %v2487
        %v2493 = vsel %vm353, %v2489, 0.0
        %v2494 = vsel %vm354, %v2490, 0.0
        %s2495 = scalar_lea.vmem %s2, 240
        %v2496 = vld [vmem:[%s2495] sm:$0xff]
        %v2498 = vsel %vm248, %v2496, 0
        %v2501 = vsel %vm252, %v2493, 0
        %v2504 = vsel %vm252, %v2494, 0
        %2506 = vmatpush.msra.mxu0 0.0
        %2507 = vmatpush.msra.mxu0 0.0
        %2508 = vmatpush.msra.mxu0 0.0
        %2509 = vmatpush.msra.mxu0 0.0
        %2510 = vmatpush.msra.mxu0 0.0
        %2511 = vmatpush.msra.mxu0 0.0
        %2512 = vmatpush.msra.mxu0 0.0
        %2513 = vmatpush.msra.mxu0 0.0
        %2514 = vmatpush.msra.mxu0 0.0
        %2515 = vmatpush.msra.mxu0 0.0
        %2516 = vmatpush.msra.mxu0 0.0
        %2517 = vmatpush.msra.mxu0 0.0
        %2518 = vmatpush.msra.mxu0 0.0
        %2519 = vmatpush.msra.mxu0 0.0
        %2520 = vmatpush.msra.mxu0 0.0
        %2521 = vmatpush.msra.mxu0 %v2501
        %2522 = vmatmul.f32.gmra.mxu0 %v2498
        %v2523 = vpop.f32.mrf.mxu0
        %v2524 = vadd.f32 0.0, %v2523
        %2525 = vdwg.mxu0
        %2526 = vmatpush.msra.mxu0 0.0
        %2527 = vmatpush.msra.mxu0 0.0
        %2528 = vmatpush.msra.mxu0 0.0
        %2529 = vmatpush.msra.mxu0 0.0
        %2530 = vmatpush.msra.mxu0 0.0
        %2531 = vmatpush.msra.mxu0 0.0
        %2532 = vmatpush.msra.mxu0 0.0
        %2533 = vmatpush.msra.mxu0 0.0
        %2534 = vmatpush.msra.mxu0 0.0
        %2535 = vmatpush.msra.mxu0 0.0
        %2536 = vmatpush.msra.mxu0 0.0
        %2537 = vmatpush.msra.mxu0 0.0
        %2538 = vmatpush.msra.mxu0 0.0
        %2539 = vmatpush.msra.mxu0 0.0
        %2540 = vmatpush.msra.mxu0 0.0
        %2541 = vmatpush.msra.mxu0 %v2504
        %2542 = vmatmul.f32.gmra.mxu0 %v2498
        %v2543 = vpop.f32.mrf.mxu0
        %v2544 = vadd.f32 0.0, %v2543
        %2545 = vdwg.mxu0
        %v2546 = vadd.f32 %v2470, %v2524
        %v2547 = vadd.f32 %v2471, %v2544
        %v2548 = vld [vmem:[%s195] sm:$0xff]
        %v2549 = vld [vmem:[%s195 + $0x8] sm:$0xf]
        %s2550 = scalar_lea.vmem %s2, 248
        %v2551 = vld [vmem:[%s2550] sm:$0xff]
        %2554 = vst [vmem:[#allocation1] ss:$2 sm:$0xff] %v2548
        %s2555 = scalar_lea.vmem [#allocation1], 16
        %2556 = vst [vmem:[%s2555] ss:$2 sm:$0xff] %v2549
        %v2557 = vld.sshfl [vmem:[#allocation1] sm:$0xff pattern:$0x75316420]
        %v2558 = vld.sshfl [vmem:[#allocation1 + $0x8] sm:$0xff pattern:$0x75316420]
        %v2559 = vld.sshfl [vmem:[#allocation1 + $0x10] sm:$0xff pattern:$0x75316420]
        %2560 = vrot.lane.b32.xlu0 %v2557, 61
        %v2561 = vpop.permute.xlu0 %2560
        %2562 = vrot.lane.b32.xlu0 %v2558, 61
        %v2563 = vpop.permute.xlu0 %2562
        %2564 = vrot.lane.b32.xlu0 %v2559, 61
        %v2565 = vpop.permute.xlu0 %2564
        %vm2566 = vcmask 498688
        %v2567 = vsel %vm2566, %v2561, %v2563
        %v2568 = vsel %vm2566, %v2563, %v2565
        %v2570 = vsel %vm248, %v2551, 0
        %v2572 = vsel %vm252, %v2567, 0
        %v2574 = vsel %vm252, %v2568, 0
        %2576 = vmatpush.msra.mxu0 0.0
        %2577 = vmatpush.msra.mxu0 0.0
        %2578 = vmatpush.msra.mxu0 0.0
        %2579 = vmatpush.msra.mxu0 0.0
        %2580 = vmatpush.msra.mxu0 0.0
        %2581 = vmatpush.msra.mxu0 0.0
        %2582 = vmatpush.msra.mxu0 0.0
        %2583 = vmatpush.msra.mxu0 0.0
        %2584 = vmatpush.msra.mxu0 0.0
        %2585 = vmatpush.msra.mxu0 0.0
        %2586 = vmatpush.msra.mxu0 0.0
        %2587 = vmatpush.msra.mxu0 0.0
        %2588 = vmatpush.msra.mxu0 0.0
        %2589 = vmatpush.msra.mxu0 0.0
        %2590 = vmatpush.msra.mxu0 0.0
        %2591 = vmatpush.msra.mxu0 %v2572
        %2592 = vmatmul.f32.gmra.mxu0 %v2570
        %v2593 = vpop.f32.mrf.mxu0
        %v2594 = vadd.f32 0.0, %v2593
        %2595 = vdwg.mxu0
        %2596 = vmatpush.msra.mxu0 0.0
        %2597 = vmatpush.msra.mxu0 0.0
        %2598 = vmatpush.msra.mxu0 0.0
        %2599 = vmatpush.msra.mxu0 0.0
        %2600 = vmatpush.msra.mxu0 0.0
        %2601 = vmatpush.msra.mxu0 0.0
        %2602 = vmatpush.msra.mxu0 0.0
        %2603 = vmatpush.msra.mxu0 0.0
        %2604 = vmatpush.msra.mxu0 0.0
        %2605 = vmatpush.msra.mxu0 0.0
        %2606 = vmatpush.msra.mxu0 0.0
        %2607 = vmatpush.msra.mxu0 0.0
        %2608 = vmatpush.msra.mxu0 0.0
        %2609 = vmatpush.msra.mxu0 0.0
        %2610 = vmatpush.msra.mxu0 0.0
        %2611 = vmatpush.msra.mxu0 %v2574
        %2612 = vmatmul.f32.gmra.mxu0 %v2570
        %v2613 = vpop.f32.mrf.mxu0
        %v2614 = vadd.f32 0.0, %v2613
        %2615 = vdwg.mxu0
        %v2616 = vadd.f32 %v2546, %v2594
        %v2617 = vadd.f32 %v2547, %v2614
        %v2618 = vld [vmem:[%s195] sm:$0xff]
        %v2619 = vld [vmem:[%s195 + $0x8] sm:$0xf]
        %2622 = vst [vmem:[#allocation1] ss:$2 sm:$0xff] %v2618
        %s2623 = scalar_lea.vmem [#allocation1], 16
        %2624 = vst [vmem:[%s2623] ss:$2 sm:$0xff] %v2619
        %v2625 = vld.sshfl [vmem:[#allocation1] sm:$0xff pattern:$0x75316420]
        %v2626 = vld.sshfl [vmem:[#allocation1 + $0x8] sm:$0xff pattern:$0x75316420]
        %v2627 = vld.sshfl [vmem:[#allocation1 + $0x10] sm:$0xff pattern:$0x75316420]
        %2628 = vrot.lane.b32.xlu0 %v2625, 60
        %v2629 = vpop.permute.xlu0 %2628
        %2630 = vrot.lane.b32.xlu0 %v2626, 60
        %v2631 = vpop.permute.xlu0 %2630
        %2632 = vrot.lane.b32.xlu0 %v2627, 60
        %v2633 = vpop.permute.xlu0 %2632
        %vm2634 = vcmask 490496
        %v2635 = vsel %vm2634, %v2629, %v2631
        %v2636 = vsel %vm2634, %v2631, %v2633
        %v2639 = vsel %vm504, %v2635, 0.0
        %v2640 = vsel %vm505, %v2636, 0.0
        %s2641 = scalar_lea.vmem %s2, 256
        %v2642 = vld [vmem:[%s2641] sm:$0xff]
        %v2644 = vsel %vm248, %v2642, 0
        %v2647 = vsel %vm252, %v2639, 0
        %v2650 = vsel %vm252, %v2640, 0
        %2652 = vmatpush.msra.mxu0 0.0
        %2653 = vmatpush.msra.mxu0 0.0
        %2654 = vmatpush.msra.mxu0 0.0
        %2655 = vmatpush.msra.mxu0 0.0
        %2656 = vmatpush.msra.mxu0 0.0
        %2657 = vmatpush.msra.mxu0 0.0
        %2658 = vmatpush.msra.mxu0 0.0
        %2659 = vmatpush.msra.mxu0 0.0
        %2660 = vmatpush.msra.mxu0 0.0
        %2661 = vmatpush.msra.mxu0 0.0
        %2662 = vmatpush.msra.mxu0 0.0
        %2663 = vmatpush.msra.mxu0 0.0
        %2664 = vmatpush.msra.mxu0 0.0
        %2665 = vmatpush.msra.mxu0 0.0
        %2666 = vmatpush.msra.mxu0 0.0
        %2667 = vmatpush.msra.mxu0 %v2647
        %2668 = vmatmul.f32.gmra.mxu0 %v2644
        %v2669 = vpop.f32.mrf.mxu0
        %v2670 = vadd.f32 0.0, %v2669
        %2671 = vdwg.mxu0
        %2672 = vmatpush.msra.mxu0 0.0
        %2673 = vmatpush.msra.mxu0 0.0
        %2674 = vmatpush.msra.mxu0 0.0
        %2675 = vmatpush.msra.mxu0 0.0
        %2676 = vmatpush.msra.mxu0 0.0
        %2677 = vmatpush.msra.mxu0 0.0
        %2678 = vmatpush.msra.mxu0 0.0
        %2679 = vmatpush.msra.mxu0 0.0
        %2680 = vmatpush.msra.mxu0 0.0
        %2681 = vmatpush.msra.mxu0 0.0
        %2682 = vmatpush.msra.mxu0 0.0
        %2683 = vmatpush.msra.mxu0 0.0
        %2684 = vmatpush.msra.mxu0 0.0
        %2685 = vmatpush.msra.mxu0 0.0
        %2686 = vmatpush.msra.mxu0 0.0
        %2687 = vmatpush.msra.mxu0 %v2650
        %2688 = vmatmul.f32.gmra.mxu0 %v2644
        %v2689 = vpop.f32.mrf.mxu0
        %v2690 = vadd.f32 0.0, %v2689
        %2691 = vdwg.mxu0
        %v2692 = vadd.f32 %v2616, %v2670
        %v2693 = vadd.f32 %v2617, %v2690
        %v2694 = vld [vmem:[%s195] sm:$0xff]
        %v2695 = vld [vmem:[%s195 + $0x8] sm:$0xf]
        %2698 = vst [vmem:[#allocation1] ss:$2 sm:$0xff] %v2694
        %s2699 = scalar_lea.vmem [#allocation1], 16
        %2700 = vst [vmem:[%s2699] ss:$2 sm:$0xff] %v2695
        %v2701 = vld.sshfl [vmem:[#allocation1] sm:$0xff pattern:$0x75316420]
        %v2702 = vld.sshfl [vmem:[#allocation1 + $0x8] sm:$0xff pattern:$0x75316420]
        %v2703 = vld.sshfl [vmem:[#allocation1 + $0x10] sm:$0xff pattern:$0x75316420]
        %2704 = vrot.lane.b32.xlu0 %v2701, 59
        %v2705 = vpop.permute.xlu0 %2704
        %2706 = vrot.lane.b32.xlu0 %v2702, 59
        %v2707 = vpop.permute.xlu0 %2706
        %2708 = vrot.lane.b32.xlu0 %v2703, 59
        %v2709 = vpop.permute.xlu0 %2708
        %vm2710 = vcmask 482304
        %v2711 = vsel %vm2710, %v2705, %v2707
        %v2712 = vsel %vm2710, %v2707, %v2709
        %v2715 = vsel %vm585, %v2711, 0.0
        %v2716 = vsel %vm586, %v2712, 0.0
        %s2717 = scalar_lea.vmem %s2, 264
        %v2718 = vld [vmem:[%s2717] sm:$0xff]
        %v2720 = vsel %vm248, %v2718, 0
        %v2723 = vsel %vm252, %v2715, 0
        %v2726 = vsel %vm252, %v2716, 0
        %2728 = vmatpush.msra.mxu0 0.0
        %2729 = vmatpush.msra.mxu0 0.0
        %2730 = vmatpush.msra.mxu0 0.0
        %2731 = vmatpush.msra.mxu0 0.0
        %2732 = vmatpush.msra.mxu0 0.0
        %2733 = vmatpush.msra.mxu0 0.0
        %2734 = vmatpush.msra.mxu0 0.0
        %2735 = vmatpush.msra.mxu0 0.0
        %2736 = vmatpush.msra.mxu0 0.0
        %2737 = vmatpush.msra.mxu0 0.0
        %2738 = vmatpush.msra.mxu0 0.0
        %2739 = vmatpush.msra.mxu0 0.0
        %2740 = vmatpush.msra.mxu0 0.0
        %2741 = vmatpush.msra.mxu0 0.0
        %2742 = vmatpush.msra.mxu0 0.0
        %2743 = vmatpush.msra.mxu0 %v2723
        %2744 = vmatmul.f32.gmra.mxu0 %v2720
        %v2745 = vpop.f32.mrf.mxu0
        %v2746 = vadd.f32 0.0, %v2745
        %2747 = vdwg.mxu0
        %2748 = vmatpush.msra.mxu0 0.0
        %2749 = vmatpush.msra.mxu0 0.0
        %2750 = vmatpush.msra.mxu0 0.0
        %2751 = vmatpush.msra.mxu0 0.0
        %2752 = vmatpush.msra.mxu0 0.0
        %2753 = vmatpush.msra.mxu0 0.0
        %2754 = vmatpush.msra.mxu0 0.0
        %2755 = vmatpush.msra.mxu0 0.0
        %2756 = vmatpush.msra.mxu0 0.0
        %2757 = vmatpush.msra.mxu0 0.0
        %2758 = vmatpush.msra.mxu0 0.0
        %2759 = vmatpush.msra.mxu0 0.0
        %2760 = vmatpush.msra.mxu0 0.0
        %2761 = vmatpush.msra.mxu0 0.0
        %2762 = vmatpush.msra.mxu0 0.0
        %2763 = vmatpush.msra.mxu0 %v2726
        %2764 = vmatmul.f32.gmra.mxu0 %v2720
        %v2765 = vpop.f32.mrf.mxu0
        %v2766 = vadd.f32 0.0, %v2765
        %2767 = vdwg.mxu0
        %v2768 = vadd.f32 %v2692, %v2746
        %v2769 = vadd.f32 %v2693, %v2766
        %v2770 = vld [vmem:[%s195] sm:$0xff]
        %v2771 = vld [vmem:[%s195 + $0x8] sm:$0xf]
        %2774 = vst [vmem:[#allocation1] ss:$2 sm:$0xff] %v2770
        %s2775 = scalar_lea.vmem [#allocation1], 16
        %2776 = vst [vmem:[%s2775] ss:$2 sm:$0xff] %v2771
        %v2777 = vld.sshfl [vmem:[#allocation1] sm:$0xff pattern:$0x75316420]
        %v2778 = vld.sshfl [vmem:[#allocation1 + $0x8] sm:$0xff pattern:$0x75316420]
        %v2779 = vld.sshfl [vmem:[#allocation1 + $0x10] sm:$0xff pattern:$0x75316420]
        %2780 = vrot.lane.b32.xlu0 %v2777, 58
        %v2781 = vpop.permute.xlu0 %2780
        %2782 = vrot.lane.b32.xlu0 %v2778, 58
        %v2783 = vpop.permute.xlu0 %2782
        %2784 = vrot.lane.b32.xlu0 %v2779, 58
        %v2785 = vpop.permute.xlu0 %2784
        %vm2786 = vcmask 474112
        %v2787 = vsel %vm2786, %v2781, %v2783
        %v2788 = vsel %vm2786, %v2783, %v2785
        %v2791 = vsel %vm666, %v2787, 0.0
        %v2792 = vsel %vm667, %v2788, 0.0
        %s2793 = scalar_lea.vmem %s2, 272
        %v2794 = vld [vmem:[%s2793] sm:$0xff]
        %v2796 = vsel %vm248, %v2794, 0
        %v2799 = vsel %vm252, %v2791, 0
        %v2802 = vsel %vm252, %v2792, 0
        %2804 = vmatpush.msra.mxu0 0.0
        %2805 = vmatpush.msra.mxu0 0.0
        %2806 = vmatpush.msra.mxu0 0.0
        %2807 = vmatpush.msra.mxu0 0.0
        %2808 = vmatpush.msra.mxu0 0.0
        %2809 = vmatpush.msra.mxu0 0.0
        %2810 = vmatpush.msra.mxu0 0.0
        %2811 = vmatpush.msra.mxu0 0.0
        %2812 = vmatpush.msra.mxu0 0.0
        %2813 = vmatpush.msra.mxu0 0.0
        %2814 = vmatpush.msra.mxu0 0.0
        %2815 = vmatpush.msra.mxu0 0.0
        %2816 = vmatpush.msra.mxu0 0.0
        %2817 = vmatpush.msra.mxu0 0.0
        %2818 = vmatpush.msra.mxu0 0.0
        %2819 = vmatpush.msra.mxu0 %v2799
        %2820 = vmatmul.f32.gmra.mxu0 %v2796
        %v2821 = vpop.f32.mrf.mxu0
        %v2822 = vadd.f32 0.0, %v2821
        %2823 = vdwg.mxu0
        %2824 = vmatpush.msra.mxu0 0.0
        %2825 = vmatpush.msra.mxu0 0.0
        %2826 = vmatpush.msra.mxu0 0.0
        %2827 = vmatpush.msra.mxu0 0.0
        %2828 = vmatpush.msra.mxu0 0.0
        %2829 = vmatpush.msra.mxu0 0.0
        %2830 = vmatpush.msra.mxu0 0.0
        %2831 = vmatpush.msra.mxu0 0.0
        %2832 = vmatpush.msra.mxu0 0.0
        %2833 = vmatpush.msra.mxu0 0.0
        %2834 = vmatpush.msra.mxu0 0.0
        %2835 = vmatpush.msra.mxu0 0.0
        %2836 = vmatpush.msra.mxu0 0.0
        %2837 = vmatpush.msra.mxu0 0.0
        %2838 = vmatpush.msra.mxu0 0.0
        %2839 = vmatpush.msra.mxu0 %v2802
        %2840 = vmatmul.f32.gmra.mxu0 %v2796
        %v2841 = vpop.f32.mrf.mxu0
        %v2842 = vadd.f32 0.0, %v2841
        %2843 = vdwg.mxu0
        %v2844 = vadd.f32 %v2768, %v2822
        %v2845 = vadd.f32 %v2769, %v2842
        %v2846 = vld [vmem:[%s195] sm:$0xff]
        %v2847 = vld [vmem:[%s195 + $0x8] sm:$0xf]
        %2850 = vst [vmem:[#allocation1] ss:$2 sm:$0xff] %v2846
        %s2851 = scalar_lea.vmem [#allocation1], 16
        %2852 = vst [vmem:[%s2851] ss:$2 sm:$0xff] %v2847
        %v2853 = vld.sshfl [vmem:[#allocation1] sm:$0xff pattern:$0x75316420]
        %v2854 = vld.sshfl [vmem:[#allocation1 + $0x8] sm:$0xff pattern:$0x75316420]
        %v2855 = vld.sshfl [vmem:[#allocation1 + $0x10] sm:$0xff pattern:$0x75316420]
        %2856 = vrot.lane.b32.xlu0 %v2853, 48
        %v2857 = vpop.permute.xlu0 %2856
        %2858 = vrot.lane.b32.xlu0 %v2854, 48
        %v2859 = vpop.permute.xlu0 %2858
        %2860 = vrot.lane.b32.xlu0 %v2855, 48
        %v2861 = vpop.permute.xlu0 %2860
        %vm2862 = vcmask 392192
        %v2863 = vsel %vm2862, %v2857, %v2859
        %v2864 = vsel %vm2862, %v2859, %v2861
        %v2867 = vsel %vm207, %v2863, 0.0
        %v2868 = vsel %vm208, %v2864, 0.0
        %s2869 = scalar_lea.vmem %s2, 280
        %v2870 = vld [vmem:[%s2869] sm:$0xff]
        %v2872 = vsel %vm248, %v2870, 0
        %v2875 = vsel %vm252, %v2867, 0
        %v2878 = vsel %vm252, %v2868, 0
        %2880 = vmatpush.msra.mxu0 0.0
        %2881 = vmatpush.msra.mxu0 0.0
        %2882 = vmatpush.msra.mxu0 0.0
        %2883 = vmatpush.msra.mxu0 0.0
        %2884 = vmatpush.msra.mxu0 0.0
        %2885 = vmatpush.msra.mxu0 0.0
        %2886 = vmatpush.msra.mxu0 0.0
        %2887 = vmatpush.msra.mxu0 0.0
        %2888 = vmatpush.msra.mxu0 0.0
        %2889 = vmatpush.msra.mxu0 0.0
        %2890 = vmatpush.msra.mxu0 0.0
        %2891 = vmatpush.msra.mxu0 0.0
        %2892 = vmatpush.msra.mxu0 0.0
        %2893 = vmatpush.msra.mxu0 0.0
        %2894 = vmatpush.msra.mxu0 0.0
        %2895 = vmatpush.msra.mxu0 %v2875
        %2896 = vmatmul.f32.gmra.mxu0 %v2872
        %v2897 = vpop.f32.mrf.mxu0
        %v2898 = vadd.f32 0.0, %v2897
        %2899 = vdwg.mxu0
        %2900 = vmatpush.msra.mxu0 0.0
        %2901 = vmatpush.msra.mxu0 0.0
        %2902 = vmatpush.msra.mxu0 0.0
        %2903 = vmatpush.msra.mxu0 0.0
        %2904 = vmatpush.msra.mxu0 0.0
        %2905 = vmatpush.msra.mxu0 0.0
        %2906 = vmatpush.msra.mxu0 0.0
        %2907 = vmatpush.msra.mxu0 0.0
        %2908 = vmatpush.msra.mxu0 0.0
        %2909 = vmatpush.msra.mxu0 0.0
        %2910 = vmatpush.msra.mxu0 0.0
        %2911 = vmatpush.msra.mxu0 0.0
        %2912 = vmatpush.msra.mxu0 0.0
        %2913 = vmatpush.msra.mxu0 0.0
        %2914 = vmatpush.msra.mxu0 0.0
        %2915 = vmatpush.msra.mxu0 %v2878
        %2916 = vmatmul.f32.gmra.mxu0 %v2872
        %v2917 = vpop.f32.mrf.mxu0
        %v2918 = vadd.f32 0.0, %v2917
        %2919 = vdwg.mxu0
        %v2920 = vadd.f32 %v2844, %v2898
        %v2921 = vadd.f32 %v2845, %v2918
        %v2922 = vld [vmem:[%s195] sm:$0xff]
        %v2923 = vld [vmem:[%s195 + $0x8] sm:$0xf]
        %2926 = vst [vmem:[#allocation1] ss:$2 sm:$0xff] %v2922
        %s2927 = scalar_lea.vmem [#allocation1], 16
        %2928 = vst [vmem:[%s2927] ss:$2 sm:$0xff] %v2923
        %v2929 = vld.sshfl [vmem:[#allocation1] sm:$0xff pattern:$0x75316420]
        %v2930 = vld.sshfl [vmem:[#allocation1 + $0x8] sm:$0xff pattern:$0x75316420]
        %v2931 = vld.sshfl [vmem:[#allocation1 + $0x10] sm:$0xff pattern:$0x75316420]
        %2932 = vrot.lane.b32.xlu0 %v2929, 47
        %v2933 = vpop.permute.xlu0 %2932
        %2934 = vrot.lane.b32.xlu0 %v2930, 47
        %v2935 = vpop.permute.xlu0 %2934
        %2936 = vrot.lane.b32.xlu0 %v2931, 47
        %v2937 = vpop.permute.xlu0 %2936
        %vm2938 = vcmask 384000
        %v2939 = vsel %vm2938, %v2933, %v2935
        %v2940 = vsel %vm2938, %v2935, %v2937
        %v2943 = vsel %vm223, %v2939, 0.0
        %v2944 = vsel %vm224, %v2940, 0.0
        %s2945 = scalar_lea.vmem %s2, 288
        %v2946 = vld [vmem:[%s2945] sm:$0xff]
        %v2948 = vsel %vm248, %v2946, 0
        %v2951 = vsel %vm252, %v2943, 0
        %v2954 = vsel %vm252, %v2944, 0
        %2956 = vmatpush.msra.mxu0 0.0
        %2957 = vmatpush.msra.mxu0 0.0
        %2958 = vmatpush.msra.mxu0 0.0
        %2959 = vmatpush.msra.mxu0 0.0
        %2960 = vmatpush.msra.mxu0 0.0
        %2961 = vmatpush.msra.mxu0 0.0
        %2962 = vmatpush.msra.mxu0 0.0
        %2963 = vmatpush.msra.mxu0 0.0
        %2964 = vmatpush.msra.mxu0 0.0
        %2965 = vmatpush.msra.mxu0 0.0
        %2966 = vmatpush.msra.mxu0 0.0
        %2967 = vmatpush.msra.mxu0 0.0
        %2968 = vmatpush.msra.mxu0 0.0
        %2969 = vmatpush.msra.mxu0 0.0
        %2970 = vmatpush.msra.mxu0 0.0
        %2971 = vmatpush.msra.mxu0 %v2951
        %2972 = vmatmul.f32.gmra.mxu0 %v2948
        %v2973 = vpop.f32.mrf.mxu0
        %v2974 = vadd.f32 0.0, %v2973
        %2975 = vdwg.mxu0
        %2976 = vmatpush.msra.mxu0 0.0
        %2977 = vmatpush.msra.mxu0 0.0
        %2978 = vmatpush.msra.mxu0 0.0
        %2979 = vmatpush.msra.mxu0 0.0
        %2980 = vmatpush.msra.mxu0 0.0
        %2981 = vmatpush.msra.mxu0 0.0
        %2982 = vmatpush.msra.mxu0 0.0
        %2983 = vmatpush.msra.mxu0 0.0
        %2984 = vmatpush.msra.mxu0 0.0
        %2985 = vmatpush.msra.mxu0 0.0
        %2986 = vmatpush.msra.mxu0 0.0
        %2987 = vmatpush.msra.mxu0 0.0
        %2988 = vmatpush.msra.mxu0 0.0
        %2989 = vmatpush.msra.mxu0 0.0
        %2990 = vmatpush.msra.mxu0 0.0
        %2991 = vmatpush.msra.mxu0 %v2954
        %2992 = vmatmul.f32.gmra.mxu0 %v2948
        %v2993 = vpop.f32.mrf.mxu0
        %v2994 = vadd.f32 0.0, %v2993
        %2995 = vdwg.mxu0
        %v2996 = vadd.f32 %v2920, %v2974
        %v2997 = vadd.f32 %v2921, %v2994
        %v2998 = vld [vmem:[%s195] sm:$0xff]
        %v2999 = vld [vmem:[%s195 + $0x8] sm:$0xf]
        %3002 = vst [vmem:[#allocation1] ss:$2 sm:$0xff] %v2998
        %s3003 = scalar_lea.vmem [#allocation1], 16
        %3004 = vst [vmem:[%s3003] ss:$2 sm:$0xff] %v2999
        %v3005 = vld.sshfl [vmem:[#allocation1] sm:$0xff pattern:$0x75316420]
        %v3006 = vld.sshfl [vmem:[#allocation1 + $0x8] sm:$0xff pattern:$0x75316420]
        %v3007 = vld.sshfl [vmem:[#allocation1 + $0x10] sm:$0xff pattern:$0x75316420]
        %3008 = vrot.lane.b32.xlu0 %v3005, 46
        %v3009 = vpop.permute.xlu0 %3008
        %3010 = vrot.lane.b32.xlu0 %v3006, 46
        %v3011 = vpop.permute.xlu0 %3010
        %3012 = vrot.lane.b32.xlu0 %v3007, 46
        %v3013 = vpop.permute.xlu0 %3012
        %vm3014 = vcmask 375808
        %v3015 = vsel %vm3014, %v3009, %v3011
        %v3016 = vsel %vm3014, %v3011, %v3013
        %v3019 = vsel %vm353, %v3015, 0.0
        %v3020 = vsel %vm354, %v3016, 0.0
        %s3021 = scalar_lea.vmem %s2, 296
        %v3022 = vld [vmem:[%s3021] sm:$0xff]
        %v3024 = vsel %vm248, %v3022, 0
        %v3027 = vsel %vm252, %v3019, 0
        %v3030 = vsel %vm252, %v3020, 0
        %3032 = vmatpush.msra.mxu0 0.0
        %3033 = vmatpush.msra.mxu0 0.0
        %3034 = vmatpush.msra.mxu0 0.0
        %3035 = vmatpush.msra.mxu0 0.0
        %3036 = vmatpush.msra.mxu0 0.0
        %3037 = vmatpush.msra.mxu0 0.0
        %3038 = vmatpush.msra.mxu0 0.0
        %3039 = vmatpush.msra.mxu0 0.0
        %3040 = vmatpush.msra.mxu0 0.0
        %3041 = vmatpush.msra.mxu0 0.0
        %3042 = vmatpush.msra.mxu0 0.0
        %3043 = vmatpush.msra.mxu0 0.0
        %3044 = vmatpush.msra.mxu0 0.0
        %3045 = vmatpush.msra.mxu0 0.0
        %3046 = vmatpush.msra.mxu0 0.0
        %3047 = vmatpush.msra.mxu0 %v3027
        %3048 = vmatmul.f32.gmra.mxu0 %v3024
        %v3049 = vpop.f32.mrf.mxu0
        %v3050 = vadd.f32 0.0, %v3049
        %3051 = vdwg.mxu0
        %3052 = vmatpush.msra.mxu0 0.0
        %3053 = vmatpush.msra.mxu0 0.0
        %3054 = vmatpush.msra.mxu0 0.0
        %3055 = vmatpush.msra.mxu0 0.0
        %3056 = vmatpush.msra.mxu0 0.0
        %3057 = vmatpush.msra.mxu0 0.0
        %3058 = vmatpush.msra.mxu0 0.0
        %3059 = vmatpush.msra.mxu0 0.0
        %3060 = vmatpush.msra.mxu0 0.0
        %3061 = vmatpush.msra.mxu0 0.0
        %3062 = vmatpush.msra.mxu0 0.0
        %3063 = vmatpush.msra.mxu0 0.0
        %3064 = vmatpush.msra.mxu0 0.0
        %3065 = vmatpush.msra.mxu0 0.0
        %3066 = vmatpush.msra.mxu0 0.0
        %3067 = vmatpush.msra.mxu0 %v3030
        %3068 = vmatmul.f32.gmra.mxu0 %v3024
        %v3069 = vpop.f32.mrf.mxu0
        %v3070 = vadd.f32 0.0, %v3069
        %3071 = vdwg.mxu0
        %v3072 = vadd.f32 %v2996, %v3050
        %v3073 = vadd.f32 %v2997, %v3070
        %v3074 = vld [vmem:[%s195] sm:$0xff]
        %v3075 = vld [vmem:[%s195 + $0x8] sm:$0xf]
        %s3076 = scalar_lea.vmem %s2, 304
        %v3077 = vld [vmem:[%s3076] sm:$0xff]
        %3080 = vst [vmem:[#allocation1] ss:$2 sm:$0xff] %v3074
        %s3081 = scalar_lea.vmem [#allocation1], 16
        %3082 = vst [vmem:[%s3081] ss:$2 sm:$0xff] %v3075
        %v3083 = vld.sshfl [vmem:[#allocation1] sm:$0xff pattern:$0x75316420]
        %v3084 = vld.sshfl [vmem:[#allocation1 + $0x8] sm:$0xff pattern:$0x75316420]
        %v3085 = vld.sshfl [vmem:[#allocation1 + $0x10] sm:$0xff pattern:$0x75316420]
        %3086 = vrot.lane.b32.xlu0 %v3083, 45
        %v3087 = vpop.permute.xlu0 %3086
        %3088 = vrot.lane.b32.xlu0 %v3084, 45
        %v3089 = vpop.permute.xlu0 %3088
        %3090 = vrot.lane.b32.xlu0 %v3085, 45
        %v3091 = vpop.permute.xlu0 %3090
        %vm3092 = vcmask 367616
        %v3093 = vsel %vm3092, %v3087, %v3089
        %v3094 = vsel %vm3092, %v3089, %v3091
        %v3096 = vsel %vm248, %v3077, 0
        %v3098 = vsel %vm252, %v3093, 0
        %v3100 = vsel %vm252, %v3094, 0
        %3102 = vmatpush.msra.mxu0 0.0
        %3103 = vmatpush.msra.mxu0 0.0
        %3104 = vmatpush.msra.mxu0 0.0
        %3105 = vmatpush.msra.mxu0 0.0
        %3106 = vmatpush.msra.mxu0 0.0
        %3107 = vmatpush.msra.mxu0 0.0
        %3108 = vmatpush.msra.mxu0 0.0
        %3109 = vmatpush.msra.mxu0 0.0
        %3110 = vmatpush.msra.mxu0 0.0
        %3111 = vmatpush.msra.mxu0 0.0
        %3112 = vmatpush.msra.mxu0 0.0
        %3113 = vmatpush.msra.mxu0 0.0
        %3114 = vmatpush.msra.mxu0 0.0
        %3115 = vmatpush.msra.mxu0 0.0
        %3116 = vmatpush.msra.mxu0 0.0
        %3117 = vmatpush.msra.mxu0 %v3098
        %3118 = vmatmul.f32.gmra.mxu0 %v3096
        %v3119 = vpop.f32.mrf.mxu0
        %v3120 = vadd.f32 0.0, %v3119
        %3121 = vdwg.mxu0
        %3122 = vmatpush.msra.mxu0 0.0
        %3123 = vmatpush.msra.mxu0 0.0
        %3124 = vmatpush.msra.mxu0 0.0
        %3125 = vmatpush.msra.mxu0 0.0
        %3126 = vmatpush.msra.mxu0 0.0
        %3127 = vmatpush.msra.mxu0 0.0
        %3128 = vmatpush.msra.mxu0 0.0
        %3129 = vmatpush.msra.mxu0 0.0
        %3130 = vmatpush.msra.mxu0 0.0
        %3131 = vmatpush.msra.mxu0 0.0
        %3132 = vmatpush.msra.mxu0 0.0
        %3133 = vmatpush.msra.mxu0 0.0
        %3134 = vmatpush.msra.mxu0 0.0
        %3135 = vmatpush.msra.mxu0 0.0
        %3136 = vmatpush.msra.mxu0 0.0
        %3137 = vmatpush.msra.mxu0 %v3100
        %3138 = vmatmul.f32.gmra.mxu0 %v3096
        %v3139 = vpop.f32.mrf.mxu0
        %v3140 = vadd.f32 0.0, %v3139
        %3141 = vdwg.mxu0
        %v3142 = vadd.f32 %v3072, %v3120
        %v3143 = vadd.f32 %v3073, %v3140
        %v3144 = vld [vmem:[%s195] sm:$0xff]
        %v3145 = vld [vmem:[%s195 + $0x8] sm:$0xf]
        %3148 = vst [vmem:[#allocation1] ss:$2 sm:$0xff] %v3144
        %s3149 = scalar_lea.vmem [#allocation1], 16
        %3150 = vst [vmem:[%s3149] ss:$2 sm:$0xff] %v3145
        %v3151 = vld.sshfl [vmem:[#allocation1] sm:$0xff pattern:$0x75316420]
        %v3152 = vld.sshfl [vmem:[#allocation1 + $0x8] sm:$0xff pattern:$0x75316420]
        %v3153 = vld.sshfl [vmem:[#allocation1 + $0x10] sm:$0xff pattern:$0x75316420]
        %3154 = vrot.lane.b32.xlu0 %v3151, 44
        %v3155 = vpop.permute.xlu0 %3154
        %3156 = vrot.lane.b32.xlu0 %v3152, 44
        %v3157 = vpop.permute.xlu0 %3156
        %3158 = vrot.lane.b32.xlu0 %v3153, 44
        %v3159 = vpop.permute.xlu0 %3158
        %vm3160 = vcmask 359424
        %v3161 = vsel %vm3160, %v3155, %v3157
        %v3162 = vsel %vm3160, %v3157, %v3159
        %v3165 = vsel %vm504, %v3161, 0.0
        %v3166 = vsel %vm505, %v3162, 0.0
        %s3167 = scalar_lea.vmem %s2, 312
        %v3168 = vld [vmem:[%s3167] sm:$0xff]
        %v3170 = vsel %vm248, %v3168, 0
        %v3173 = vsel %vm252, %v3165, 0
        %v3176 = vsel %vm252, %v3166, 0
        %3178 = vmatpush.msra.mxu0 0.0
        %3179 = vmatpush.msra.mxu0 0.0
        %3180 = vmatpush.msra.mxu0 0.0
        %3181 = vmatpush.msra.mxu0 0.0
        %3182 = vmatpush.msra.mxu0 0.0
        %3183 = vmatpush.msra.mxu0 0.0
        %3184 = vmatpush.msra.mxu0 0.0
        %3185 = vmatpush.msra.mxu0 0.0
        %3186 = vmatpush.msra.mxu0 0.0
        %3187 = vmatpush.msra.mxu0 0.0
        %3188 = vmatpush.msra.mxu0 0.0
        %3189 = vmatpush.msra.mxu0 0.0
        %3190 = vmatpush.msra.mxu0 0.0
        %3191 = vmatpush.msra.mxu0 0.0
        %3192 = vmatpush.msra.mxu0 0.0
        %3193 = vmatpush.msra.mxu0 %v3173
        %3194 = vmatmul.f32.gmra.mxu0 %v3170
        %v3195 = vpop.f32.mrf.mxu0
        %v3196 = vadd.f32 0.0, %v3195
        %3197 = vdwg.mxu0
        %3198 = vmatpush.msra.mxu0 0.0
        %3199 = vmatpush.msra.mxu0 0.0
        %3200 = vmatpush.msra.mxu0 0.0
        %3201 = vmatpush.msra.mxu0 0.0
        %3202 = vmatpush.msra.mxu0 0.0
        %3203 = vmatpush.msra.mxu0 0.0
        %3204 = vmatpush.msra.mxu0 0.0
        %3205 = vmatpush.msra.mxu0 0.0
        %3206 = vmatpush.msra.mxu0 0.0
        %3207 = vmatpush.msra.mxu0 0.0
        %3208 = vmatpush.msra.mxu0 0.0
        %3209 = vmatpush.msra.mxu0 0.0
        %3210 = vmatpush.msra.mxu0 0.0
        %3211 = vmatpush.msra.mxu0 0.0
        %3212 = vmatpush.msra.mxu0 0.0
        %3213 = vmatpush.msra.mxu0 %v3176
        %3214 = vmatmul.f32.gmra.mxu0 %v3170
        %v3215 = vpop.f32.mrf.mxu0
        %v3216 = vadd.f32 0.0, %v3215
        %3217 = vdwg.mxu0
        %v3218 = vadd.f32 %v3142, %v3196
        %v3219 = vadd.f32 %v3143, %v3216
        %v3220 = vld [vmem:[%s195] sm:$0xff]
        %v3221 = vld [vmem:[%s195 + $0x8] sm:$0xf]
        %3224 = vst [vmem:[#allocation1] ss:$2 sm:$0xff] %v3220
        %s3225 = scalar_lea.vmem [#allocation1], 16
        %3226 = vst [vmem:[%s3225] ss:$2 sm:$0xff] %v3221
        %v3227 = vld.sshfl [vmem:[#allocation1] sm:$0xff pattern:$0x75316420]
        %v3228 = vld.sshfl [vmem:[#allocation1 + $0x8] sm:$0xff pattern:$0x75316420]
        %v3229 = vld.sshfl [vmem:[#allocation1 + $0x10] sm:$0xff pattern:$0x75316420]
        %3230 = vrot.lane.b32.xlu0 %v3227, 43
        %v3231 = vpop.permute.xlu0 %3230
        %3232 = vrot.lane.b32.xlu0 %v3228, 43
        %v3233 = vpop.permute.xlu0 %3232
        %3234 = vrot.lane.b32.xlu0 %v3229, 43
        %v3235 = vpop.permute.xlu0 %3234
        %vm3236 = vcmask 351232
        %v3237 = vsel %vm3236, %v3231, %v3233
        %v3238 = vsel %vm3236, %v3233, %v3235
        %v3241 = vsel %vm585, %v3237, 0.0
        %v3242 = vsel %vm586, %v3238, 0.0
        %s3243 = scalar_lea.vmem %s2, 320
        %v3244 = vld [vmem:[%s3243] sm:$0xff]
        %v3246 = vsel %vm248, %v3244, 0
        %v3249 = vsel %vm252, %v3241, 0
        %v3252 = vsel %vm252, %v3242, 0
        %3254 = vmatpush.msra.mxu0 0.0
        %3255 = vmatpush.msra.mxu0 0.0
        %3256 = vmatpush.msra.mxu0 0.0
        %3257 = vmatpush.msra.mxu0 0.0
        %3258 = vmatpush.msra.mxu0 0.0
        %3259 = vmatpush.msra.mxu0 0.0
        %3260 = vmatpush.msra.mxu0 0.0
        %3261 = vmatpush.msra.mxu0 0.0
        %3262 = vmatpush.msra.mxu0 0.0
        %3263 = vmatpush.msra.mxu0 0.0
        %3264 = vmatpush.msra.mxu0 0.0
        %3265 = vmatpush.msra.mxu0 0.0
        %3266 = vmatpush.msra.mxu0 0.0
        %3267 = vmatpush.msra.mxu0 0.0
        %3268 = vmatpush.msra.mxu0 0.0
        %3269 = vmatpush.msra.mxu0 %v3249
        %3270 = vmatmul.f32.gmra.mxu0 %v3246
        %v3271 = vpop.f32.mrf.mxu0
        %v3272 = vadd.f32 0.0, %v3271
        %3273 = vdwg.mxu0
        %3274 = vmatpush.msra.mxu0 0.0
        %3275 = vmatpush.msra.mxu0 0.0
        %3276 = vmatpush.msra.mxu0 0.0
        %3277 = vmatpush.msra.mxu0 0.0
        %3278 = vmatpush.msra.mxu0 0.0
        %3279 = vmatpush.msra.mxu0 0.0
        %3280 = vmatpush.msra.mxu0 0.0
        %3281 = vmatpush.msra.mxu0 0.0
        %3282 = vmatpush.msra.mxu0 0.0
        %3283 = vmatpush.msra.mxu0 0.0
        %3284 = vmatpush.msra.mxu0 0.0
        %3285 = vmatpush.msra.mxu0 0.0
        %3286 = vmatpush.msra.mxu0 0.0
        %3287 = vmatpush.msra.mxu0 0.0
        %3288 = vmatpush.msra.mxu0 0.0
        %3289 = vmatpush.msra.mxu0 %v3252
        %3290 = vmatmul.f32.gmra.mxu0 %v3246
        %v3291 = vpop.f32.mrf.mxu0
        %v3292 = vadd.f32 0.0, %v3291
        %3293 = vdwg.mxu0
        %v3294 = vadd.f32 %v3218, %v3272
        %v3295 = vadd.f32 %v3219, %v3292
        %v3296 = vld [vmem:[%s195] sm:$0xff]
        %v3297 = vld [vmem:[%s195 + $0x8] sm:$0xf]
        %3300 = vst [vmem:[#allocation1] ss:$2 sm:$0xff] %v3296
        %s3301 = scalar_lea.vmem [#allocation1], 16
        %3302 = vst [vmem:[%s3301] ss:$2 sm:$0xff] %v3297
        %v3303 = vld.sshfl [vmem:[#allocation1] sm:$0xff pattern:$0x75316420]
        %v3304 = vld.sshfl [vmem:[#allocation1 + $0x8] sm:$0xff pattern:$0x75316420]
        %v3305 = vld.sshfl [vmem:[#allocation1 + $0x10] sm:$0xff pattern:$0x75316420]
        %3306 = vrot.lane.b32.xlu0 %v3303, 42
        %v3307 = vpop.permute.xlu0 %3306
        %3308 = vrot.lane.b32.xlu0 %v3304, 42
        %v3309 = vpop.permute.xlu0 %3308
        %3310 = vrot.lane.b32.xlu0 %v3305, 42
        %v3311 = vpop.permute.xlu0 %3310
        %vm3312 = vcmask 343040
        %v3313 = vsel %vm3312, %v3307, %v3309
        %v3314 = vsel %vm3312, %v3309, %v3311
        %v3317 = vsel %vm666, %v3313, 0.0
        %v3318 = vsel %vm667, %v3314, 0.0
        %s3319 = scalar_lea.vmem %s2, 328
        %v3320 = vld [vmem:[%s3319] sm:$0xff]
        %v3322 = vsel %vm248, %v3320, 0
        %v3325 = vsel %vm252, %v3317, 0
        %v3328 = vsel %vm252, %v3318, 0
        %3330 = vmatpush.msra.mxu0 0.0
        %3331 = vmatpush.msra.mxu0 0.0
        %3332 = vmatpush.msra.mxu0 0.0
        %3333 = vmatpush.msra.mxu0 0.0
        %3334 = vmatpush.msra.mxu0 0.0
        %3335 = vmatpush.msra.mxu0 0.0
        %3336 = vmatpush.msra.mxu0 0.0
        %3337 = vmatpush.msra.mxu0 0.0
        %3338 = vmatpush.msra.mxu0 0.0
        %3339 = vmatpush.msra.mxu0 0.0
        %3340 = vmatpush.msra.mxu0 0.0
        %3341 = vmatpush.msra.mxu0 0.0
        %3342 = vmatpush.msra.mxu0 0.0
        %3343 = vmatpush.msra.mxu0 0.0
        %3344 = vmatpush.msra.mxu0 0.0
        %3345 = vmatpush.msra.mxu0 %v3325
        %3346 = vmatmul.f32.gmra.mxu0 %v3322
        %v3347 = vpop.f32.mrf.mxu0
        %v3348 = vadd.f32 0.0, %v3347
        %3349 = vdwg.mxu0
        %3350 = vmatpush.msra.mxu0 0.0
        %3351 = vmatpush.msra.mxu0 0.0
        %3352 = vmatpush.msra.mxu0 0.0
        %3353 = vmatpush.msra.mxu0 0.0
        %3354 = vmatpush.msra.mxu0 0.0
        %3355 = vmatpush.msra.mxu0 0.0
        %3356 = vmatpush.msra.mxu0 0.0
        %3357 = vmatpush.msra.mxu0 0.0
        %3358 = vmatpush.msra.mxu0 0.0
        %3359 = vmatpush.msra.mxu0 0.0
        %3360 = vmatpush.msra.mxu0 0.0
        %3361 = vmatpush.msra.mxu0 0.0
        %3362 = vmatpush.msra.mxu0 0.0
        %3363 = vmatpush.msra.mxu0 0.0
        %3364 = vmatpush.msra.mxu0 0.0
        %3365 = vmatpush.msra.mxu0 %v3328
        %3366 = vmatmul.f32.gmra.mxu0 %v3322
        %v3367 = vpop.f32.mrf.mxu0
        %v3368 = vadd.f32 0.0, %v3367
        %3369 = vdwg.mxu0
        %v3370 = vadd.f32 %v3294, %v3348
        %v3371 = vadd.f32 %v3295, %v3368
        %v3372 = vld [vmem:[%s195] sm:$0xff]
        %v3373 = vld [vmem:[%s195 + $0x8] sm:$0xf]
        %3376 = vst [vmem:[#allocation1] ss:$2 sm:$0xff] %v3372
        %s3377 = scalar_lea.vmem [#allocation1], 16
        %3378 = vst [vmem:[%s3377] ss:$2 sm:$0xff] %v3373
        %v3379 = vld.sshfl [vmem:[#allocation1] sm:$0xff pattern:$0x75316420]
        %v3380 = vld.sshfl [vmem:[#allocation1 + $0x8] sm:$0xff pattern:$0x75316420]
        %v3381 = vld.sshfl [vmem:[#allocation1 + $0x10] sm:$0xff pattern:$0x75316420]
        %3382 = vrot.lane.b32.xlu0 %v3379, 32
        %v3383 = vpop.permute.xlu0 %3382
        %3384 = vrot.lane.b32.xlu0 %v3380, 32
        %v3385 = vpop.permute.xlu0 %3384
        %3386 = vrot.lane.b32.xlu0 %v3381, 32
        %v3387 = vpop.permute.xlu0 %3386
        %vm3388 = vcmask 261120
        %v3389 = vsel %vm3388, %v3383, %v3385
        %v3390 = vsel %vm3388, %v3385, %v3387
        %v3393 = vsel %vm207, %v3389, 0.0
        %v3394 = vsel %vm208, %v3390, 0.0
        %s3395 = scalar_lea.vmem %s2, 336
        %v3396 = vld [vmem:[%s3395] sm:$0xff]
        %v3398 = vsel %vm248, %v3396, 0
        %v3401 = vsel %vm252, %v3393, 0
        %v3404 = vsel %vm252, %v3394, 0
        %3406 = vmatpush.msra.mxu0 0.0
        %3407 = vmatpush.msra.mxu0 0.0
        %3408 = vmatpush.msra.mxu0 0.0
        %3409 = vmatpush.msra.mxu0 0.0
        %3410 = vmatpush.msra.mxu0 0.0
        %3411 = vmatpush.msra.mxu0 0.0
        %3412 = vmatpush.msra.mxu0 0.0
        %3413 = vmatpush.msra.mxu0 0.0
        %3414 = vmatpush.msra.mxu0 0.0
        %3415 = vmatpush.msra.mxu0 0.0
        %3416 = vmatpush.msra.mxu0 0.0
        %3417 = vmatpush.msra.mxu0 0.0
        %3418 = vmatpush.msra.mxu0 0.0
        %3419 = vmatpush.msra.mxu0 0.0
        %3420 = vmatpush.msra.mxu0 0.0
        %3421 = vmatpush.msra.mxu0 %v3401
        %3422 = vmatmul.f32.gmra.mxu0 %v3398
        %v3423 = vpop.f32.mrf.mxu0
        %v3424 = vadd.f32 0.0, %v3423
        %3425 = vdwg.mxu0
        %3426 = vmatpush.msra.mxu0 0.0
        %3427 = vmatpush.msra.mxu0 0.0
        %3428 = vmatpush.msra.mxu0 0.0
        %3429 = vmatpush.msra.mxu0 0.0
        %3430 = vmatpush.msra.mxu0 0.0
        %3431 = vmatpush.msra.mxu0 0.0
        %3432 = vmatpush.msra.mxu0 0.0
        %3433 = vmatpush.msra.mxu0 0.0
        %3434 = vmatpush.msra.mxu0 0.0
        %3435 = vmatpush.msra.mxu0 0.0
        %3436 = vmatpush.msra.mxu0 0.0
        %3437 = vmatpush.msra.mxu0 0.0
        %3438 = vmatpush.msra.mxu0 0.0
        %3439 = vmatpush.msra.mxu0 0.0
        %3440 = vmatpush.msra.mxu0 0.0
        %3441 = vmatpush.msra.mxu0 %v3404
        %3442 = vmatmul.f32.gmra.mxu0 %v3398
        %v3443 = vpop.f32.mrf.mxu0
        %v3444 = vadd.f32 0.0, %v3443
        %3445 = vdwg.mxu0
        %v3446 = vadd.f32 %v3370, %v3424
        %v3447 = vadd.f32 %v3371, %v3444
        %v3448 = vld [vmem:[%s195] sm:$0xff]
        %v3449 = vld [vmem:[%s195 + $0x8] sm:$0xf]
        %3452 = vst [vmem:[#allocation1] ss:$2 sm:$0xff] %v3448
        %s3453 = scalar_lea.vmem [#allocation1], 16
        %3454 = vst [vmem:[%s3453] ss:$2 sm:$0xff] %v3449
        %v3455 = vld.sshfl [vmem:[#allocation1] sm:$0xff pattern:$0x75316420]
        %v3456 = vld.sshfl [vmem:[#allocation1 + $0x8] sm:$0xff pattern:$0x75316420]
        %v3457 = vld.sshfl [vmem:[#allocation1 + $0x10] sm:$0xff pattern:$0x75316420]
        %3458 = vrot.lane.b32.xlu0 %v3455, 31
        %v3459 = vpop.permute.xlu0 %3458
        %3460 = vrot.lane.b32.xlu0 %v3456, 31
        %v3461 = vpop.permute.xlu0 %3460
        %3462 = vrot.lane.b32.xlu0 %v3457, 31
        %v3463 = vpop.permute.xlu0 %3462
        %vm3464 = vcmask 252928
        %v3465 = vsel %vm3464, %v3459, %v3461
        %v3466 = vsel %vm3464, %v3461, %v3463
        %v3469 = vsel %vm223, %v3465, 0.0
        %v3470 = vsel %vm224, %v3466, 0.0
        %s3471 = scalar_lea.vmem %s2, 344
        %v3472 = vld [vmem:[%s3471] sm:$0xff]
        %v3474 = vsel %vm248, %v3472, 0
        %v3477 = vsel %vm252, %v3469, 0
        %v3480 = vsel %vm252, %v3470, 0
        %3482 = vmatpush.msra.mxu0 0.0
        %3483 = vmatpush.msra.mxu0 0.0
        %3484 = vmatpush.msra.mxu0 0.0
        %3485 = vmatpush.msra.mxu0 0.0
        %3486 = vmatpush.msra.mxu0 0.0
        %3487 = vmatpush.msra.mxu0 0.0
        %3488 = vmatpush.msra.mxu0 0.0
        %3489 = vmatpush.msra.mxu0 0.0
        %3490 = vmatpush.msra.mxu0 0.0
        %3491 = vmatpush.msra.mxu0 0.0
        %3492 = vmatpush.msra.mxu0 0.0
        %3493 = vmatpush.msra.mxu0 0.0
        %3494 = vmatpush.msra.mxu0 0.0
        %3495 = vmatpush.msra.mxu0 0.0
        %3496 = vmatpush.msra.mxu0 0.0
        %3497 = vmatpush.msra.mxu0 %v3477
        %3498 = vmatmul.f32.gmra.mxu0 %v3474
        %v3499 = vpop.f32.mrf.mxu0
        %v3500 = vadd.f32 0.0, %v3499
        %3501 = vdwg.mxu0
        %3502 = vmatpush.msra.mxu0 0.0
        %3503 = vmatpush.msra.mxu0 0.0
        %3504 = vmatpush.msra.mxu0 0.0
        %3505 = vmatpush.msra.mxu0 0.0
        %3506 = vmatpush.msra.mxu0 0.0
        %3507 = vmatpush.msra.mxu0 0.0
        %3508 = vmatpush.msra.mxu0 0.0
        %3509 = vmatpush.msra.mxu0 0.0
        %3510 = vmatpush.msra.mxu0 0.0
        %3511 = vmatpush.msra.mxu0 0.0
        %3512 = vmatpush.msra.mxu0 0.0
        %3513 = vmatpush.msra.mxu0 0.0
        %3514 = vmatpush.msra.mxu0 0.0
        %3515 = vmatpush.msra.mxu0 0.0
        %3516 = vmatpush.msra.mxu0 0.0
        %3517 = vmatpush.msra.mxu0 %v3480
        %3518 = vmatmul.f32.gmra.mxu0 %v3474
        %v3519 = vpop.f32.mrf.mxu0
        %v3520 = vadd.f32 0.0, %v3519
        %3521 = vdwg.mxu0
        %v3522 = vadd.f32 %v3446, %v3500
        %v3523 = vadd.f32 %v3447, %v3520
        %v3524 = vld [vmem:[%s195] sm:$0xff]
        %v3525 = vld [vmem:[%s195 + $0x8] sm:$0xf]
        %3528 = vst [vmem:[#allocation1] ss:$2 sm:$0xff] %v3524
        %s3529 = scalar_lea.vmem [#allocation1], 16
        %3530 = vst [vmem:[%s3529] ss:$2 sm:$0xff] %v3525
        %v3531 = vld.sshfl [vmem:[#allocation1] sm:$0xff pattern:$0x75316420]
        %v3532 = vld.sshfl [vmem:[#allocation1 + $0x8] sm:$0xff pattern:$0x75316420]
        %v3533 = vld.sshfl [vmem:[#allocation1 + $0x10] sm:$0xff pattern:$0x75316420]
        %3534 = vrot.lane.b32.xlu0 %v3531, 30
        %v3535 = vpop.permute.xlu0 %3534
        %3536 = vrot.lane.b32.xlu0 %v3532, 30
        %v3537 = vpop.permute.xlu0 %3536
        %3538 = vrot.lane.b32.xlu0 %v3533, 30
        %v3539 = vpop.permute.xlu0 %3538
        %vm3540 = vcmask 244736
        %v3541 = vsel %vm3540, %v3535, %v3537
        %v3542 = vsel %vm3540, %v3537, %v3539
        %v3545 = vsel %vm353, %v3541, 0.0
        %v3546 = vsel %vm354, %v3542, 0.0
        %s3547 = scalar_lea.vmem %s2, 352
        %v3548 = vld [vmem:[%s3547] sm:$0xff]
        %v3550 = vsel %vm248, %v3548, 0
        %v3553 = vsel %vm252, %v3545, 0
        %v3556 = vsel %vm252, %v3546, 0
        %3558 = vmatpush.msra.mxu0 0.0
        %3559 = vmatpush.msra.mxu0 0.0
        %3560 = vmatpush.msra.mxu0 0.0
        %3561 = vmatpush.msra.mxu0 0.0
        %3562 = vmatpush.msra.mxu0 0.0
        %3563 = vmatpush.msra.mxu0 0.0
        %3564 = vmatpush.msra.mxu0 0.0
        %3565 = vmatpush.msra.mxu0 0.0
        %3566 = vmatpush.msra.mxu0 0.0
        %3567 = vmatpush.msra.mxu0 0.0
        %3568 = vmatpush.msra.mxu0 0.0
        %3569 = vmatpush.msra.mxu0 0.0
        %3570 = vmatpush.msra.mxu0 0.0
        %3571 = vmatpush.msra.mxu0 0.0
        %3572 = vmatpush.msra.mxu0 0.0
        %3573 = vmatpush.msra.mxu0 %v3553
        %3574 = vmatmul.f32.gmra.mxu0 %v3550
        %v3575 = vpop.f32.mrf.mxu0
        %v3576 = vadd.f32 0.0, %v3575
        %3577 = vdwg.mxu0
        %3578 = vmatpush.msra.mxu0 0.0
        %3579 = vmatpush.msra.mxu0 0.0
        %3580 = vmatpush.msra.mxu0 0.0
        %3581 = vmatpush.msra.mxu0 0.0
        %3582 = vmatpush.msra.mxu0 0.0
        %3583 = vmatpush.msra.mxu0 0.0
        %3584 = vmatpush.msra.mxu0 0.0
        %3585 = vmatpush.msra.mxu0 0.0
        %3586 = vmatpush.msra.mxu0 0.0
        %3587 = vmatpush.msra.mxu0 0.0
        %3588 = vmatpush.msra.mxu0 0.0
        %3589 = vmatpush.msra.mxu0 0.0
        %3590 = vmatpush.msra.mxu0 0.0
        %3591 = vmatpush.msra.mxu0 0.0
        %3592 = vmatpush.msra.mxu0 0.0
        %3593 = vmatpush.msra.mxu0 %v3556
        %3594 = vmatmul.f32.gmra.mxu0 %v3550
        %v3595 = vpop.f32.mrf.mxu0
        %v3596 = vadd.f32 0.0, %v3595
        %3597 = vdwg.mxu0
        %v3598 = vadd.f32 %v3522, %v3576
        %v3599 = vadd.f32 %v3523, %v3596
        %v3600 = vld [vmem:[%s195] sm:$0xff]
        %v3601 = vld [vmem:[%s195 + $0x8] sm:$0xf]
        %s3602 = scalar_lea.vmem %s2, 360
        %v3603 = vld [vmem:[%s3602] sm:$0xff]
        %3606 = vst [vmem:[#allocation1] ss:$2 sm:$0xff] %v3600
        %s3607 = scalar_lea.vmem [#allocation1], 16
        %3608 = vst [vmem:[%s3607] ss:$2 sm:$0xff] %v3601
        %v3609 = vld.sshfl [vmem:[#allocation1] sm:$0xff pattern:$0x75316420]
        %v3610 = vld.sshfl [vmem:[#allocation1 + $0x8] sm:$0xff pattern:$0x75316420]
        %v3611 = vld.sshfl [vmem:[#allocation1 + $0x10] sm:$0xff pattern:$0x75316420]
        %3612 = vrot.lane.b32.xlu0 %v3609, 29
        %v3613 = vpop.permute.xlu0 %3612
        %3614 = vrot.lane.b32.xlu0 %v3610, 29
        %v3615 = vpop.permute.xlu0 %3614
        %3616 = vrot.lane.b32.xlu0 %v3611, 29
        %v3617 = vpop.permute.xlu0 %3616
        %vm3618 = vcmask 236544
        %v3619 = vsel %vm3618, %v3613, %v3615
        %v3620 = vsel %vm3618, %v3615, %v3617
        %v3622 = vsel %vm248, %v3603, 0
        %v3624 = vsel %vm252, %v3619, 0
        %v3626 = vsel %vm252, %v3620, 0
        %3628 = vmatpush.msra.mxu0 0.0
        %3629 = vmatpush.msra.mxu0 0.0
        %3630 = vmatpush.msra.mxu0 0.0
        %3631 = vmatpush.msra.mxu0 0.0
        %3632 = vmatpush.msra.mxu0 0.0
        %3633 = vmatpush.msra.mxu0 0.0
        %3634 = vmatpush.msra.mxu0 0.0
        %3635 = vmatpush.msra.mxu0 0.0
        %3636 = vmatpush.msra.mxu0 0.0
        %3637 = vmatpush.msra.mxu0 0.0
        %3638 = vmatpush.msra.mxu0 0.0
        %3639 = vmatpush.msra.mxu0 0.0
        %3640 = vmatpush.msra.mxu0 0.0
        %3641 = vmatpush.msra.mxu0 0.0
        %3642 = vmatpush.msra.mxu0 0.0
        %3643 = vmatpush.msra.mxu0 %v3624
        %3644 = vmatmul.f32.gmra.mxu0 %v3622
        %v3645 = vpop.f32.mrf.mxu0
        %v3646 = vadd.f32 0.0, %v3645
        %3647 = vdwg.mxu0
        %3648 = vmatpush.msra.mxu0 0.0
        %3649 = vmatpush.msra.mxu0 0.0
        %3650 = vmatpush.msra.mxu0 0.0
        %3651 = vmatpush.msra.mxu0 0.0
        %3652 = vmatpush.msra.mxu0 0.0
        %3653 = vmatpush.msra.mxu0 0.0
        %3654 = vmatpush.msra.mxu0 0.0
        %3655 = vmatpush.msra.mxu0 0.0
        %3656 = vmatpush.msra.mxu0 0.0
        %3657 = vmatpush.msra.mxu0 0.0
        %3658 = vmatpush.msra.mxu0 0.0
        %3659 = vmatpush.msra.mxu0 0.0
        %3660 = vmatpush.msra.mxu0 0.0
        %3661 = vmatpush.msra.mxu0 0.0
        %3662 = vmatpush.msra.mxu0 0.0
        %3663 = vmatpush.msra.mxu0 %v3626
        %3664 = vmatmul.f32.gmra.mxu0 %v3622
        %v3665 = vpop.f32.mrf.mxu0
        %v3666 = vadd.f32 0.0, %v3665
        %3667 = vdwg.mxu0
        %v3668 = vadd.f32 %v3598, %v3646
        %v3669 = vadd.f32 %v3599, %v3666
        %v3670 = vld [vmem:[%s195] sm:$0xff]
        %v3671 = vld [vmem:[%s195 + $0x8] sm:$0xf]
        %3674 = vst [vmem:[#allocation1] ss:$2 sm:$0xff] %v3670
        %s3675 = scalar_lea.vmem [#allocation1], 16
        %3676 = vst [vmem:[%s3675] ss:$2 sm:$0xff] %v3671
        %v3677 = vld.sshfl [vmem:[#allocation1] sm:$0xff pattern:$0x75316420]
        %v3678 = vld.sshfl [vmem:[#allocation1 + $0x8] sm:$0xff pattern:$0x75316420]
        %v3679 = vld.sshfl [vmem:[#allocation1 + $0x10] sm:$0xff pattern:$0x75316420]
        %3680 = vrot.lane.b32.xlu0 %v3677, 28
        %v3681 = vpop.permute.xlu0 %3680
        %3682 = vrot.lane.b32.xlu0 %v3678, 28
        %v3683 = vpop.permute.xlu0 %3682
        %3684 = vrot.lane.b32.xlu0 %v3679, 28
        %v3685 = vpop.permute.xlu0 %3684
        %vm3686 = vcmask 228352
        %v3687 = vsel %vm3686, %v3681, %v3683
        %v3688 = vsel %vm3686, %v3683, %v3685
        %v3691 = vsel %vm504, %v3687, 0.0
        %v3692 = vsel %vm505, %v3688, 0.0
        %s3693 = scalar_lea.vmem %s2, 368
        %v3694 = vld [vmem:[%s3693] sm:$0xff]
        %v3696 = vsel %vm248, %v3694, 0
        %v3699 = vsel %vm252, %v3691, 0
        %v3702 = vsel %vm252, %v3692, 0
        %3704 = vmatpush.msra.mxu0 0.0
        %3705 = vmatpush.msra.mxu0 0.0
        %3706 = vmatpush.msra.mxu0 0.0
        %3707 = vmatpush.msra.mxu0 0.0
        %3708 = vmatpush.msra.mxu0 0.0
        %3709 = vmatpush.msra.mxu0 0.0
        %3710 = vmatpush.msra.mxu0 0.0
        %3711 = vmatpush.msra.mxu0 0.0
        %3712 = vmatpush.msra.mxu0 0.0
        %3713 = vmatpush.msra.mxu0 0.0
        %3714 = vmatpush.msra.mxu0 0.0
        %3715 = vmatpush.msra.mxu0 0.0
        %3716 = vmatpush.msra.mxu0 0.0
        %3717 = vmatpush.msra.mxu0 0.0
        %3718 = vmatpush.msra.mxu0 0.0
        %3719 = vmatpush.msra.mxu0 %v3699
        %3720 = vmatmul.f32.gmra.mxu0 %v3696
        %v3721 = vpop.f32.mrf.mxu0
        %v3722 = vadd.f32 0.0, %v3721
        %3723 = vdwg.mxu0
        %3724 = vmatpush.msra.mxu0 0.0
        %3725 = vmatpush.msra.mxu0 0.0
        %3726 = vmatpush.msra.mxu0 0.0
        %3727 = vmatpush.msra.mxu0 0.0
        %3728 = vmatpush.msra.mxu0 0.0
        %3729 = vmatpush.msra.mxu0 0.0
        %3730 = vmatpush.msra.mxu0 0.0
        %3731 = vmatpush.msra.mxu0 0.0
        %3732 = vmatpush.msra.mxu0 0.0
        %3733 = vmatpush.msra.mxu0 0.0
        %3734 = vmatpush.msra.mxu0 0.0
        %3735 = vmatpush.msra.mxu0 0.0
        %3736 = vmatpush.msra.mxu0 0.0
        %3737 = vmatpush.msra.mxu0 0.0
        %3738 = vmatpush.msra.mxu0 0.0
        %3739 = vmatpush.msra.mxu0 %v3702
        %3740 = vmatmul.f32.gmra.mxu0 %v3696
        %v3741 = vpop.f32.mrf.mxu0
        %v3742 = vadd.f32 0.0, %v3741
        %3743 = vdwg.mxu0
        %v3744 = vadd.f32 %v3668, %v3722
        %v3745 = vadd.f32 %v3669, %v3742
        %v3746 = vld [vmem:[%s195] sm:$0xff]
        %v3747 = vld [vmem:[%s195 + $0x8] sm:$0xf]
        %3750 = vst [vmem:[#allocation1] ss:$2 sm:$0xff] %v3746
        %s3751 = scalar_lea.vmem [#allocation1], 16
        %3752 = vst [vmem:[%s3751] ss:$2 sm:$0xff] %v3747
        %v3753 = vld.sshfl [vmem:[#allocation1] sm:$0xff pattern:$0x75316420]
        %v3754 = vld.sshfl [vmem:[#allocation1 + $0x8] sm:$0xff pattern:$0x75316420]
        %v3755 = vld.sshfl [vmem:[#allocation1 + $0x10] sm:$0xff pattern:$0x75316420]
        %3756 = vrot.lane.b32.xlu0 %v3753, 27
        %v3757 = vpop.permute.xlu0 %3756
        %3758 = vrot.lane.b32.xlu0 %v3754, 27
        %v3759 = vpop.permute.xlu0 %3758
        %3760 = vrot.lane.b32.xlu0 %v3755, 27
        %v3761 = vpop.permute.xlu0 %3760
        %vm3762 = vcmask 220160
        %v3763 = vsel %vm3762, %v3757, %v3759
        %v3764 = vsel %vm3762, %v3759, %v3761
        %v3767 = vsel %vm585, %v3763, 0.0
        %v3768 = vsel %vm586, %v3764, 0.0
        %s3769 = scalar_lea.vmem %s2, 376
        %v3770 = vld [vmem:[%s3769] sm:$0xff]
        %v3772 = vsel %vm248, %v3770, 0
        %v3775 = vsel %vm252, %v3767, 0
        %v3778 = vsel %vm252, %v3768, 0
        %3780 = vmatpush.msra.mxu0 0.0
        %3781 = vmatpush.msra.mxu0 0.0
        %3782 = vmatpush.msra.mxu0 0.0
        %3783 = vmatpush.msra.mxu0 0.0
        %3784 = vmatpush.msra.mxu0 0.0
        %3785 = vmatpush.msra.mxu0 0.0
        %3786 = vmatpush.msra.mxu0 0.0
        %3787 = vmatpush.msra.mxu0 0.0
        %3788 = vmatpush.msra.mxu0 0.0
        %3789 = vmatpush.msra.mxu0 0.0
        %3790 = vmatpush.msra.mxu0 0.0
        %3791 = vmatpush.msra.mxu0 0.0
        %3792 = vmatpush.msra.mxu0 0.0
        %3793 = vmatpush.msra.mxu0 0.0
        %3794 = vmatpush.msra.mxu0 0.0
        %3795 = vmatpush.msra.mxu0 %v3775
        %3796 = vmatmul.f32.gmra.mxu0 %v3772
        %v3797 = vpop.f32.mrf.mxu0
        %v3798 = vadd.f32 0.0, %v3797
        %3799 = vdwg.mxu0
        %3800 = vmatpush.msra.mxu0 0.0
        %3801 = vmatpush.msra.mxu0 0.0
        %3802 = vmatpush.msra.mxu0 0.0
        %3803 = vmatpush.msra.mxu0 0.0
        %3804 = vmatpush.msra.mxu0 0.0
        %3805 = vmatpush.msra.mxu0 0.0
        %3806 = vmatpush.msra.mxu0 0.0
        %3807 = vmatpush.msra.mxu0 0.0
        %3808 = vmatpush.msra.mxu0 0.0
        %3809 = vmatpush.msra.mxu0 0.0
        %3810 = vmatpush.msra.mxu0 0.0
        %3811 = vmatpush.msra.mxu0 0.0
        %3812 = vmatpush.msra.mxu0 0.0
        %3813 = vmatpush.msra.mxu0 0.0
        %3814 = vmatpush.msra.mxu0 0.0
        %3815 = vmatpush.msra.mxu0 %v3778
        %3816 = vmatmul.f32.gmra.mxu0 %v3772
        %v3817 = vpop.f32.mrf.mxu0
        %v3818 = vadd.f32 0.0, %v3817
        %3819 = vdwg.mxu0
        %v3820 = vadd.f32 %v3744, %v3798
        %v3821 = vadd.f32 %v3745, %v3818
        %v3822 = vld [vmem:[%s195] sm:$0xff]
        %v3823 = vld [vmem:[%s195 + $0x8] sm:$0xf]
        %3826 = vst [vmem:[#allocation1] ss:$2 sm:$0xff] %v3822
        %s3827 = scalar_lea.vmem [#allocation1], 16
        %3828 = vst [vmem:[%s3827] ss:$2 sm:$0xff] %v3823
        %v3829 = vld.sshfl [vmem:[#allocation1] sm:$0xff pattern:$0x75316420]
        %v3830 = vld.sshfl [vmem:[#allocation1 + $0x8] sm:$0xff pattern:$0x75316420]
        %v3831 = vld.sshfl [vmem:[#allocation1 + $0x10] sm:$0xff pattern:$0x75316420]
        %3832 = vrot.lane.b32.xlu0 %v3829, 26
        %v3833 = vpop.permute.xlu0 %3832
        %3834 = vrot.lane.b32.xlu0 %v3830, 26
        %v3835 = vpop.permute.xlu0 %3834
        %3836 = vrot.lane.b32.xlu0 %v3831, 26
        %v3837 = vpop.permute.xlu0 %3836
        %vm3838 = vcmask 211968
        %v3839 = vsel %vm3838, %v3833, %v3835
        %v3840 = vsel %vm3838, %v3835, %v3837
        %v3843 = vsel %vm666, %v3839, 0.0
        %v3844 = vsel %vm667, %v3840, 0.0
        %s3845 = scalar_lea.vmem %s2, 384
        %v3846 = vld [vmem:[%s3845] sm:$0xff]
        %v3848 = vsel %vm248, %v3846, 0
        %v3851 = vsel %vm252, %v3843, 0
        %v3854 = vsel %vm252, %v3844, 0
        %3856 = vmatpush.msra.mxu0 0.0
        %3857 = vmatpush.msra.mxu0 0.0
        %3858 = vmatpush.msra.mxu0 0.0
        %3859 = vmatpush.msra.mxu0 0.0
        %3860 = vmatpush.msra.mxu0 0.0
        %3861 = vmatpush.msra.mxu0 0.0
        %3862 = vmatpush.msra.mxu0 0.0
        %3863 = vmatpush.msra.mxu0 0.0
        %3864 = vmatpush.msra.mxu0 0.0
        %3865 = vmatpush.msra.mxu0 0.0
        %3866 = vmatpush.msra.mxu0 0.0
        %3867 = vmatpush.msra.mxu0 0.0
        %3868 = vmatpush.msra.mxu0 0.0
        %3869 = vmatpush.msra.mxu0 0.0
        %3870 = vmatpush.msra.mxu0 0.0
        %3871 = vmatpush.msra.mxu0 %v3851
        %3872 = vmatmul.f32.gmra.mxu0 %v3848
        %v3873 = vpop.f32.mrf.mxu0
        %v3874 = vadd.f32 0.0, %v3873
        %3875 = vdwg.mxu0
        %3876 = vmatpush.msra.mxu0 0.0
        %3877 = vmatpush.msra.mxu0 0.0
        %3878 = vmatpush.msra.mxu0 0.0
        %3879 = vmatpush.msra.mxu0 0.0
        %3880 = vmatpush.msra.mxu0 0.0
        %3881 = vmatpush.msra.mxu0 0.0
        %3882 = vmatpush.msra.mxu0 0.0
        %3883 = vmatpush.msra.mxu0 0.0
        %3884 = vmatpush.msra.mxu0 0.0
        %3885 = vmatpush.msra.mxu0 0.0
        %3886 = vmatpush.msra.mxu0 0.0
        %3887 = vmatpush.msra.mxu0 0.0
        %3888 = vmatpush.msra.mxu0 0.0
        %3889 = vmatpush.msra.mxu0 0.0
        %3890 = vmatpush.msra.mxu0 0.0
        %3891 = vmatpush.msra.mxu0 %v3854
        %3892 = vmatmul.f32.gmra.mxu0 %v3848
        %v3893 = vpop.f32.mrf.mxu0
        %v3894 = vadd.f32 0.0, %v3893
        %3895 = vdwg.mxu0
        %v3896 = vadd.f32 %v3820, %v3874
        %v3897 = vadd.f32 %v3821, %v3894
        %v3898 = vld [vmem:[%s3] sm:$0xff]
        %3900 = vset.pattern.permute.xlu0 0
        %3901 = vperm.xlu0 %3900, %v3898
        %v3902 = vpop.permute.xlu0 %3901
        %v3904 = vadd.f32 %v3896, %v3902
        %v3905 = vadd.f32 %v3897, %v3902
        %3906 = vst [vmem:[%s190] sm:$0xff] %v3904
        %3907 = vst [vmem:[%s190 + $0x8] sm:$0xff] %v3905
        %s3908 = sand.u32 %s115, 1
        %s3909 = scalar_lea.sflag [#allocation3], %s3908
        %s3910 = sand.u32 %s115, 1
        %s3911 = smul.addr %s3910, 16
        %s3912 = scalar_lea.vmem [#allocation2], %s3911
        // Predicated region
        $region37: #{tpu_custom_call.1} parent=35 // pred_check
          %p3913 = pneg %p125
        $region38: #{tpu_custom_call.1} parent=35 // pred_check_branch
          %3915 = sbr.rel (%p3913) target = $region40
        $region39: #{tpu_custom_call.1} parent=35 // pred_region
          %3917 = vsyncadd %s3909, 0
          %s3918 = smul.addr %s18, 2
          %s3919 = smul.addr %s3918, 8
          %s3920 = scalar_lea.hbm %s4, %s3919
          %s3922 = sshll.u32 %s3912, 4
          %s3923 = int_to_ptr.vmem [resolvable:$true] %s3922
          %s3924 = sshll.u32 %s3920, 4
          %s3925 = int_to_ptr.hbm [resolvable:$true] %s3924
          %3927 = dma.vmem_to_hbm [thread:$0]  %s3923, 256, %s3925, %s3909
        $region40: #{tpu_custom_call.1} parent=35 // pred_fallthru
          _
      $region36: #{tpu_custom_call.1} parent=5 // pred_fallthru
        _
      %p3928 = scmp.le.s32.totalorder 2, %s13
      // Predicated region
      $region41: #{tpu_custom_call.1} parent=5 // pred_check
        %p3929 = pneg %p3928
      $region42: #{tpu_custom_call.1} parent=5 // pred_check_branch
        %3931 = sbr.rel (%p3929) target = $region44
      $region43: #{tpu_custom_call.1} parent=5 // pred_region
        %s3932 = ssub.s32 %s13, 2
        // Predicated region
        $region45: #{tpu_custom_call.1} parent=43 // pred_check
          %p3933 = pneg %p131
        $region46: #{tpu_custom_call.1} parent=43 // pred_check_branch
          %3935 = sbr.rel (%p3933) target = $region48
        $region47: #{tpu_custom_call.1} parent=43 // pred_region
          %s3936 = sand.u32 %s116, 1
          %s3937 = scalar_lea.sflag [#allocation3], %s3936
          %s3938 = sand.u32 %s116, 1
          %s3939 = smul.addr %s3938, 16
          %s3940 = scalar_lea.vmem [#allocation2], %s3939
          %3942 = dma.done %s3937, 256
        $region48: #{tpu_custom_call.1} parent=43 // pred_fallthru
          _
      $region44: #{tpu_custom_call.1} parent=5 // pred_fallthru
        _
    $region6: #{tpu_custom_call.1} parent=1 // loop_footer
      %s17 = sadd.s32 1, %s13
    $region7: #{tpu_custom_call.1} parent=1 // loop_footer_branch
      %12 = sbr.rel target = $region3
    $region8: #{tpu_custom_call.1} parent=1 // loop_exit
      _
    %3943 = vsyncpa [#allocation3], 1
    %s3944 = scalar_lea.sflag [#allocation3], 1
    %3945 = vsyncpa %s3944, 1

</llo_original>
